<compile_context>
chip_gen: v7x
topology: tpu7x:2x2x1
jax: 0.10.0
libtpu: 0.0.40
codegen_flags: <defaults>
</compile_context>

<pallas_src>
import functools

import jax
import jax.numpy as jnp
from jax.experimental import pallas as pl
from jax.experimental.pallas import tpu as pltpu

EPS = 1e-5
C_IN = 2048     # conv2 input channels (fixed by the module)
C_MID = 64      # channels kept by the layer1..layer4 bridge (conv3 input)
C_PAD = 128     # 64 channels padded to a full 128-lane vreg


def _pick_tile(total, candidates):
    for c in candidates:
        if c <= total and total % c == 0:
            return c
    return total


# ----------------------------------------------------------------------------
# Kernel A: 1x1 conv read straight from NCHW + per-tile centered BN stats
# ----------------------------------------------------------------------------
def _conv1x1_stats_kernel(x_ref, w_ref, y_ref, stats_ref):
    # x_ref: (C_IN, ts) f32 (native NCHW block), w_ref: (C_IN, 128) bf16.
    x_bf = x_ref[...].astype(jnp.bfloat16)
    # Contract the LHS leading dim (x^T @ w) -> (ts, 128), f32 accumulation.
    acc = jax.lax.dot_general(
        x_bf, w_ref[...],
        dimension_numbers=(((0,), (0,)), ((), ())),
        preferred_element_type=jnp.float32)

    # bf16 writeback (halves HBM traffic for y and Kernel B's read).
    y_ref[...] = acc.astype(y_ref.dtype)

    # Per-tile centered statistics (mean, M2) from the f32 accumulator;
    # merged Welford-style in the wrapper (avoids E[x^2]-E[x]^2 cancellation).
    ts = acc.shape[0]
    mean_t = jnp.sum(acc, axis=0, keepdims=True) * (1.0 / ts)   # (1, 128)
    d = acc - mean_t
    m2_t = jnp.sum(d * d, axis=0, keepdims=True)                # (1, 128)
    stats_ref[0:1, :] = mean_t
    stats_ref[1:2, :] = m2_t


def conv1x1_with_stats(x3d, w_bf16):
    """x3d: (N, C_IN, HW) f32, w_bf16: (C_IN, 128) bf16 -> (y, stats, ts)."""
    N, K, HW = x3d.shape
    c_out = w_bf16.shape[1]
    ts = _pick_tile(HW, (512, 256, 128))
    s_tiles = HW // ts

    y, stats = pl.pallas_call(
        _conv1x1_stats_kernel,
        grid=(N, s_tiles),
        in_specs=[
            # Native NCHW block: full channel dim, spatial tile on lanes.
            pl.BlockSpec((None, K, ts), lambda n, s: (n, 0, s)),
            # Whole weight, constant index_map -> VMEM-resident.
            pl.BlockSpec((K, c_out), lambda n, s: (0, 0)),
        ],
        out_specs=[
            pl.BlockSpec((None, ts, c_out), lambda n, s: (n, s, 0)),
            pl.BlockSpec((None, None, 2, c_out), lambda n, s: (n, s, 0, 0)),
        ],
        out_shape=[
            jax.ShapeDtypeStruct((N, HW, c_out), jnp.bfloat16),
            jax.ShapeDtypeStruct((N, s_tiles, 2, c_out), jnp.float32),
        ],
        compiler_params=pltpu.CompilerParams(
            dimension_semantics=("parallel", "parallel")),
    )(x3d, w_bf16)
    return y, stats, ts


# ----------------------------------------------------------------------------
# Kernel B: fused BN-affine apply + 3x3 conv (C -> 1) + bilinear upsample
# ----------------------------------------------------------------------------
def _bn_conv3_bilinear_kernel(y_ref, scale_ref, shift_ref, w3_ref,
                              rh_ref, rwt_ref, o_ref, zpad_ref):
    H, W, C = y_ref.shape

    # BatchNorm affine; upcast bf16 -> f32 first (v5e VPU has no bf16 math).
    scale = scale_ref[0, :]                                   # (C,)
    shift = shift_ref[0, :]
    z = y_ref[...].astype(jnp.float32) * scale + shift        # (H, W, C)

    # Zero only the 1-pixel halo; the interior is fully overwritten below.
    zpad_ref[0:1, :, :] = jnp.zeros((1, W + 2, C), jnp.float32)
    zpad_ref[H + 1:H + 2, :, :] = jnp.zeros((1, W + 2, C), jnp.float32)
    zpad_ref[1:H + 1, 0:1, :] = jnp.zeros((H, 1, C), jnp.float32)
    zpad_ref[1:H + 1, W + 1:W + 2, :] = jnp.zeros((H, 1, C), jnp.float32)
    zpad_ref[1:H + 1, 1:W + 1, :] = z

    # 3x3 conv, C -> 1, no bias: accumulate the 9 taps in channel space and do
    # a single cross-lane reduction at the end (XLU work cut 9x).
    acc_c = zpad_ref[0:H, 0:W, :] * w3_ref[0, 0, :]
    for dy in range(3):
        for dx in range(3):
            if dy == 0 and dx == 0:
                continue
            acc_c = acc_c + zpad_ref[dy:dy + H, dx:dx + W, :] * w3_ref[dy, dx, :]
    c = jnp.sum(acc_c, axis=-1)                               # (H, W)

    # Bilinear upsample, align_corners=True, as two small matmuls.
    tmp = jnp.dot(rh_ref[...], c, preferred_element_type=jnp.float32)   # (OH, W)
    # TODO(synk): for large output_size, emit a lane-dense (multiple-of-128)
    # output slab instead of an (OH, OW) block to avoid masked partial stores,
    # and tile over H with a 1-row halo so the scratch fits v7x's 32 MiB
    # default scoped VMEM.
    o_ref[...] = jnp.dot(tmp, rwt_ref[...], preferred_element_type=jnp.float32)


def _interp_matrix(out_size, in_size):
    """Row-interpolation matrix for bilinear resize with align_corners=True."""
    if in_size == 1:
        return jnp.ones((out_size, 1), jnp.float32)
    if out_size == 1:
        return jnp.zeros((1, in_size), jnp.float32).at[0, 0].set(1.0)
    src = jnp.arange(out_size, dtype=jnp.float32) * (in_size - 1) / (out_size - 1)
    i0 = jnp.clip(jnp.floor(src).astype(jnp.int32), 0, in_size - 2)
    frac = src - i0.astype(jnp.float32)
    lo = jax.nn.one_hot(i0, in_size, dtype=jnp.float32) * (1.0 - frac)[:, None]
    hi = jax.nn.one_hot(i0 + 1, in_size, dtype=jnp.float32) * frac[:, None]
    return lo + hi


def bn_conv3_bilinear(y4d, scale, shift, w3, out_size):
    N, H, W, C = y4d.shape
    OH, OW = out_size
    rh = _interp_matrix(OH, H)            # (OH, H)
    rwt = _interp_matrix(OW, W).T         # (W, OW)
    return pl.pallas_call(
        _bn_conv3_bilinear_kernel,
        grid=(N,),
        in_specs=[
            pl.BlockSpec((None, H, W, C), lambda n: (n, 0, 0, 0)),
            pl.BlockSpec((1, C), lambda n: (0, 0)),
            pl.BlockSpec((1, C), lambda n: (0, 0)),
            pl.BlockSpec((3, 3, C), lambda n: (0, 0, 0)),
            pl.BlockSpec((OH, H), lambda n: (0, 0)),
            pl.BlockSpec((W, OW), lambda n: (0, 0)),
        ],
        out_specs=pl.BlockSpec((None, OH, OW), lambda n: (n, 0, 0)),
        out_shape=jax.ShapeDtypeStruct((N, OH, OW), jnp.float32),
        scratch_shapes=[pltpu.VMEM((H + 2, W + 2, C), jnp.float32)],
        compiler_params=pltpu.CompilerParams(
            dimension_semantics=("parallel",)),
    )(y4d, scale.reshape(1, C), shift.reshape(1, C), w3, rh, rwt)


# ----------------------------------------------------------------------------
# Decoder forward (wrapper / glue)
# ----------------------------------------------------------------------------
def init_decoder_params(key):
    k1, k2, k3, k4 = jax.random.split(key, 4)
    return {
        # conv2: Conv2d(2048, 1024, kernel_size=1, bias=False) as (Cin, Cout)
        "w_conv2": 0.02 * jax.random.normal(k1, (C_IN, 1024), jnp.float32),
        "bn2_gamma": 1.0 + 0.1 * jax.random.normal(k2, (1024,), jnp.float32),
        "bn2_beta": 0.1 * jax.random.normal(k3, (1024,), jnp.float32),
        # conv3: Conv2d(64, 1, kernel_size=3, padding=1, bias=False) as (3,3,Cin)
        "w_conv3": 0.05 * jax.random.normal(k4, (3, 3, C_MID), jnp.float32),
    }


def decoder_forward(x_nchw, params, output_size):
    N, C, H, W = x_nchw.shape
    assert C == C_IN
    HW = H * W
    M = N * HW

    # Metadata-only view: (N, C_IN, H, W) -> (N, C_IN, H*W).  No transpose, no
    # separate cast pass; Kernel A reads the f32 NCHW data directly.
    x3d = x_nchw.reshape(N, C_IN, HW)

    # layer1..layer4 bridge: slice weight / BN params to the first 64 output
    # channels BEFORE the conv (per-channel BN => identical kept channels,
    # 16x less MXU work / weight DMA), pad 64 -> 128 lanes.
    w2 = params["w_conv2"][:, :C_MID]
    w2 = jnp.pad(w2, ((0, 0), (0, C_PAD - C_MID))).astype(jnp.bfloat16)
    gamma = jnp.pad(params["bn2_gamma"][:C_MID], (0, C_PAD - C_MID))
    beta = jnp.pad(params["bn2_beta"][:C_MID], (0, C_PAD - C_MID))

    # Kernel A: 1x1 conv + per-tile centered BN stats.
    y3d, stats, ts = conv1x1_with_stats(x3d, w2)      # y3d: (N, HW, 128) bf16

    # Finalize BatchNorm (training-mode batch stats, biased var, eps=1e-5)
    # by merging equal-count per-tile (mean, M2) — tiny f32 wrapper glue.
    means = stats[:, :, 0, :].reshape(-1, C_PAD)      # (num_tiles, 128)
    m2s = stats[:, :, 1, :].reshape(-1, C_PAD)
    gmean = jnp.mean(means, axis=0)
    gm2 = jnp.sum(m2s, axis=0) + ts * jnp.sum((means - gmean) ** 2, axis=0)
    var = jnp.maximum(gm2 / M, 0.0)
    scale = gamma * jax.lax.rsqrt(var + EPS)
    shift = beta - gmean * scale

    # conv3 weights padded to 128 channels (zero channels contribute nothing).
    w3 = jnp.pad(params["w_conv3"], ((0, 0), (0, 0), (0, C_PAD - C_MID)))

    # Kernel B: fused BN-apply + 3x3 conv (64 -> 1) + bilinear upsample.
    y4d = y3d.reshape(N, H, W, C_PAD)                 # metadata-only view
    out = bn_conv3_bilinear(y4d, scale, shift, w3, output_size)   # (N, OH, OW)

    # Back to NCHW with the single output channel.
    return out[:, None, :, :]                         # (N, 1, OH, OW)


if __name__ == "__main__":
    key = jax.random.PRNGKey(0)
    k_x, k_p = jax.random.split(key)

    # Small shapes consistent with the module (2048 input channels are fixed
    # by conv2); spatial 16x16, upsampled to 32x32.
    N, H, W = 2, 16, 16
    OUTPUT_SIZE = (32, 32)

    x = jax.random.normal(k_x, (N, C_IN, H, W), jnp.float32)
    params = init_decoder_params(k_p)

    out = decoder_forward(x, params, OUTPUT_SIZE)
    out = jax.block_until_ready(out)

    assert out.shape == (N, 1, OUTPUT_SIZE[0], OUTPUT_SIZE[1]), out.shape
    assert bool(jnp.all(jnp.isfinite(out)))
    print("KERNEL_OK")
</pallas_src>

<mosaic_0001>
module attributes {stable_mosaic.version = 11 : i64} {
  func.func @_conv1x1_stats_kernel(%arg0: i32, %arg1: i32, %arg2: memref<1x2048x256xf32, #tpu.memory_space<vmem>>, %arg3: memref<2048x128xbf16, #tpu.memory_space<vmem>>, %arg4: memref<1x256x128xbf16, #tpu.memory_space<vmem>>, %arg5: memref<1x1x2x128xf32, #tpu.memory_space<vmem>>) attributes {dimension_semantics = [#tpu.dimension_semantics<parallel>, #tpu.dimension_semantics<parallel>], iteration_bounds = array<i64: 2, 1>, scalar_prefetch = 0 : i64, scratch_operands = 0 : i64, tpu.core_type = #tpu.core_type<tc>, window_params = [{transform_indices = @transform_0, window_bounds = array<i64: 1, 2048, 256>}, {pipeline_mode = #tpu.pipeline_mode<synchronous>, transform_indices = @transform_1, window_bounds = array<i64: 2048, 128>}, {transform_indices = @transform_2, window_bounds = array<i64: 1, 256, 128>}, {transform_indices = @transform_3, window_bounds = array<i64: 1, 1, 2, 128>}]} {
    %c0 = arith.constant 0 : index
    %c0_0 = arith.constant 0 : index
    %c0_1 = arith.constant 0 : index
    %0 = vector.load %arg2[%c0, %c0_0, %c0_1] : memref<1x2048x256xf32, #tpu.memory_space<vmem>>, vector<1x2048x256xf32>
    %1 = vector.shape_cast %0 : vector<1x2048x256xf32> to vector<2048x256xf32>
    %2 = arith.truncf %1 : vector<2048x256xf32> to vector<2048x256xbf16>
    %c0_2 = arith.constant 0 : index
    %c0_3 = arith.constant 0 : index
    %3 = vector.load %arg3[%c0_2, %c0_3] : memref<2048x128xbf16, #tpu.memory_space<vmem>>, vector<2048x128xbf16>
    %cst = arith.constant dense<0.000000e+00> : vector<256x128xf32>
    %4 = tpu.matmul %2, %3, %cst {dimension_numbers = #tpu.dot_dimension_numbers<[0], [0], [1], [1], [0, 1, 1, 1], [], []>} : vector<2048x256xbf16>, vector<2048x128xbf16>, vector<256x128xf32> -> vector<256x128xf32>
    %5 = arith.truncf %4 : vector<256x128xf32> to vector<256x128xbf16>
    %c0_4 = arith.constant 0 : index
    %c0_5 = arith.constant 0 : index
    %c0_6 = arith.constant 0 : index
    %6 = vector.load %arg4[%c0_4, %c0_5, %c0_6] : memref<1x256x128xbf16, #tpu.memory_space<vmem>>, vector<1x256x128xbf16>
    %7 = vector.shape_cast %6 : vector<1x256x128xbf16> to vector<256x128xbf16>
    %8 = vector.shape_cast %5 : vector<256x128xbf16> to vector<1x256x128xbf16>
    tpu.vector_store %arg4[%c0_4, %c0_5, %c0_6], %8 {strides = array<i32>} : memref<1x256x128xbf16, #tpu.memory_space<vmem>>, vector<1x256x128xbf16>,
    %cst_7 = arith.constant dense<0.000000e+00> : vector<128xf32>
    %9 = vector.multi_reduction <add>, %4, %cst_7 [0] : vector<256x128xf32> to vector<128xf32>
    %10 = vector.shape_cast %9 : vector<128xf32> to vector<1x128xf32>
    %cst_8 = arith.constant 3.906250e-03 : f32
    %11 = vector.broadcast %cst_8 : f32 to vector<1x128xf32>
    %12 = arith.mulf %10, %11 : vector<1x128xf32>
    %13 = vector.broadcast %12 : vector<1x128xf32> to vector<256x128xf32>
    %14 = arith.subf %4, %13 : vector<256x128xf32>
    %15 = arith.mulf %14, %14 : vector<256x128xf32>
    %cst_9 = arith.constant dense<0.000000e+00> : vector<128xf32>
    %16 = vector.multi_reduction <add>, %15, %cst_9 [0] : vector<256x128xf32> to vector<128xf32>
    %17 = vector.shape_cast %16 : vector<128xf32> to vector<1x128xf32>
    %c0_10 = arith.constant 0 : index
    %c0_11 = arith.constant 0 : index
    %c0_12 = arith.constant 0 : index
    %c0_13 = arith.constant 0 : index
    %18 = vector.load %arg5[%c0_10, %c0_11, %c0_12, %c0_13] : memref<1x1x2x128xf32, #tpu.memory_space<vmem>>, vector<1x1x1x128xf32>
    %19 = vector.shape_cast %18 : vector<1x1x1x128xf32> to vector<1x128xf32>
    %20 = vector.shape_cast %12 : vector<1x128xf32> to vector<1x1x1x128xf32>
    tpu.vector_store %arg5[%c0_10, %c0_11, %c0_12, %c0_13], %20 {strides = array<i32>} : memref<1x1x2x128xf32, #tpu.memory_space<vmem>>, vector<1x1x1x128xf32>,
    %c0_14 = arith.constant 0 : index
    %c0_15 = arith.constant 0 : index
    %c1 = arith.constant 1 : index
    %c0_16 = arith.constant 0 : index
    %21 = vector.load %arg5[%c0_14, %c0_15, %c1, %c0_16] : memref<1x1x2x128xf32, #tpu.memory_space<vmem>>, vector<1x1x1x128xf32>
    %22 = vector.shape_cast %21 : vector<1x1x1x128xf32> to vector<1x128xf32>
    %23 = vector.shape_cast %17 : vector<1x128xf32> to vector<1x1x1x128xf32>
    tpu.vector_store %arg5[%c0_14, %c0_15, %c1, %c0_16], %23 {strides = array<i32>} : memref<1x1x2x128xf32, #tpu.memory_space<vmem>>, vector<1x1x1x128xf32>,
    return
  }
  func.func @transform_0(%arg0: i32, %arg1: i32) -> (i32, i32, i32) {
    %c0_i32 = arith.constant 0 : i32
    %c0_i32_0 = arith.constant 0 : i32
    return %arg0, %c0_i32, %arg1 : i32, i32, i32
  }
  func.func @transform_1(%arg0: i32, %arg1: i32) -> (i32, i32) {
    %c0_i32 = arith.constant 0 : i32
    %c0_i32_0 = arith.constant 0 : i32
    %c0_i32_1 = arith.constant 0 : i32
    return %c0_i32, %c0_i32_0 : i32, i32
  }
  func.func @transform_2(%arg0: i32, %arg1: i32) -> (i32, i32, i32) {
    %c0_i32 = arith.constant 0 : i32
    %c0_i32_0 = arith.constant 0 : i32
    return %arg0, %arg1, %c0_i32 : i32, i32, i32
  }
  func.func @transform_3(%arg0: i32, %arg1: i32) -> (i32, i32, i32, i32) {
    %c0_i32 = arith.constant 0 : i32
    %c0_i32_0 = arith.constant 0 : i32
    %c0_i32_1 = arith.constant 0 : i32
    return %arg0, %arg1, %c0_i32, %c0_i32_0 : i32, i32, i32, i32
  }
}

</mosaic_0001>

<llo_original>
// kernel: tpu_custom_call.1
$region0: #{tpu_custom_call.1}
  #allocation0 [shape = 'u32[]', space=smem, size = 0x4, offset = 0x4, fixed_abs, tag = 'smem constant byte address 0x4 - core index']
  #allocation1 [shape = 'u32[144,128]{1,0:T(1,128)}', space=vmem, size = 0x12000, scoped, tag = 'internal scratch']
  %s0 = inlined_call_operand.hbm [shape: f32[2,2048,256], index: 0, kind: input, shape index: {}]
  %s1 = inlined_call_operand.hbm [shape: bf16[2048,128], index: 1, kind: input, shape index: {}]
  %s2 = inlined_call_operand.hbm [shape: bf16[2,256,128], index: 2, kind: output, shape index: {0}]
  %s3 = inlined_call_operand.hbm [shape: f32[2,1,2,128], index: 3, kind: output, shape index: {1}]
  %4 = xla_tuple %s2, %s3
  %s5 = sld [smem:[#allocation0]]
  $region57: #{tpu_custom_call.1} parent=0
    _
  %s7 = ssub.s32 1, %s5
  %s8 = scalar_select 0, %s7, %s5
  $region1: #{tpu_custom_call.1} parent=0
    #allocation2 [shape = 'u8[4194304]{0}', space=vmem, size = 0x400000, scoped, tag = 'input window, operand 0']
    #allocation3 [shape = 's32[2]{0}', space=sflag, size = 0x8, scoped, tag = 'scoped memory for tpu_custom_call.1']
    #allocation4 [shape = 's32[2]{0}', space=sflag, size = 0x8, scoped, tag = 'scoped memory for tpu_custom_call.1']
    #allocation5 [shape = 'u8[524288]{0}', space=vmem, size = 0x80000, scoped, tag = 'input window, operand 1, single buffered']
    #allocation6 [shape = 's32[1]{0}', space=sflag, size = 0x4, scoped, tag = 'scoped memory for tpu_custom_call.1']
    #allocation7 [shape = 'u8[131072]{0}', space=vmem, size = 0x20000, scoped, tag = 'output window, operand 0']
    #allocation8 [shape = 'u8[2048]{0}', space=vmem, size = 0x800, scoped, tag = 'output window, operand 1']
    #allocation9 [shape = 's32[2]{0}', space=sflag, size = 0x8, scoped, tag = 'scoped memory for tpu_custom_call.1']
    %9 = vsyncpa [#allocation3], 0
    %s10 = scalar_lea.sflag [#allocation3], 1
    %11 = vsyncpa %s10, 0
    %12 = vsyncpa [#allocation6], 0
    %13 = vsyncpa [#allocation4], 0
    %s14 = scalar_lea.sflag [#allocation4], 1
    %15 = vsyncpa %s14, 0
    %16 = vsyncpa [#allocation9], 0
    %s17 = scalar_lea.sflag [#allocation9], 1
    %18 = vsyncpa %s17, 0
    loop: start=0, step=1, limit=4
    $region2: #{tpu_custom_call.1} parent=1 // loop_pre_header
      _
    $region3: #{tpu_custom_call.1} parent=1 // loop_header
      %s20 = sphi 0, %s24
      %p21 = scmp.ge.s32.totalorder %s20, 4
      %s27 = sphi 0, %s39
      %s28 = sphi 0, %s35
      %s29 = sphi 0, %s27
      %s30 = sphi 0, %s28
      %s31 = sphi 0, %s29
      %s32 = sphi 0, %s30
      %s44 = sphi 0, %s46
      %s47 = sphi 0, %s44
      %s48 = sphi 0, %s47
      %s64 = sphi 0, %s48
      %s68 = sphi 0, %s68
      %s70 = sphi 0, %s68
      %s71 = sphi 0, %s70
      %s85 = sphi 0, %s71
      %s93 = sphi 0, %s95
      %s96 = sphi 0, %s93
      %s97 = sphi 0, %s96
      %s113 = sphi 0, %s97
      %s121 = sphi 0, %s123
      %s124 = sphi 0, %s121
      %s125 = sphi 0, %s124
      %s141 = sphi 0, %s125
    $region4: #{tpu_custom_call.1} parent=1 // loop_header_branch
      %23 = sbr.rel (%p21) target = $region8
    $region5: #{tpu_custom_call.1} parent=1 // loop_body
      %s25 = ssub.s32 %s20, 1
      %s26 = ssub.s32 %s20, 2
      %s33 = sadd.s32 1, %s28
      %p34 = scmp.ge.s32.totalorder %s33, 1
      %s35 = scalar_select %p34, 0, %s33
      %s36 = sadd.s32 1, %s27
      %s37 = scalar_select %p34, %s36, %s27
      %p38 = scmp.ge.s32.totalorder %s37, 2
      %s39 = scalar_select %p38, 0, %s37
      %s40 = ssub.s32 %s27, %s39
      %s41 = ssub.s32 %s28, %s35
      %s42 = sor.u32 %s40, %s41
      %p43 = scmp.eq.s32.totalorder %s42, 0
      %s45 = sadd.s32 %s44, 1
      %s46 = scalar_select %p43, %s44, %s45
      %p49 = pneg %p43
      %p50 = scmp.eq.s32.totalorder %s20, 1
      %p51 = por %p49, %p50
      %p52 = scmp.ne.s32.totalorder %s44, %s47
      %p53 = scmp.eq.s32.totalorder %s20, 0
      %p54 = por %p52, %p53
      %p55 = scmp.ne.s32.totalorder %s44, %s47
      %p56 = scmp.eq.s32.totalorder %s25, 1
      %p57 = por %p55, %p56
      %p58 = scmp.ne.s32.totalorder %s47, %s48
      %p59 = scmp.eq.s32.totalorder %s25, 0
      %p60 = por %p58, %p59
      %p61 = scmp.ne.s32.totalorder %s47, %s48
      %p62 = scmp.eq.s32.totalorder %s26, 1
      %p63 = por %p61, %p62
      %p65 = scmp.ne.s32.totalorder %s48, %s64
      %p66 = scmp.eq.s32.totalorder %s26, 0
      %p67 = por %p65, %p66
      %s69 = sadd.s32 %s68, 1
      %p72 = scmp.eq.s32.totalorder %s20, 1
      %p73 = scmp.ne.s32.totalorder %s68, %s70
      %p74 = scmp.eq.s32.totalorder %s20, 0
      %p75 = por %p73, %p74
      %p76 = scmp.ne.s32.totalorder %s68, %s70
      %p77 = scmp.eq.s32.totalorder %s25, 1
      %p78 = por %p76, %p77
      %p79 = scmp.ne.s32.totalorder %s70, %s71
      %p80 = scmp.eq.s32.totalorder %s25, 0
      %p81 = por %p79, %p80
      %p82 = scmp.ne.s32.totalorder %s70, %s71
      %p83 = scmp.eq.s32.totalorder %s26, 1
      %p84 = por %p82, %p83
      %p86 = scmp.ne.s32.totalorder %s71, %s85
      %p87 = scmp.eq.s32.totalorder %s26, 0
      %p88 = por %p86, %p87
      %s89 = ssub.s32 %s27, %s39
      %s90 = ssub.s32 %s28, %s35
      %s91 = sor.u32 %s89, %s90
      %p92 = scmp.eq.s32.totalorder %s91, 0
      %s94 = sadd.s32 %s93, 1
      %s95 = scalar_select %p92, %s93, %s94
      %p98 = pneg %p92
      %p99 = scmp.eq.s32.totalorder %s20, 1
      %p100 = por %p98, %p99
      %p101 = scmp.ne.s32.totalorder %s93, %s96
      %p102 = scmp.eq.s32.totalorder %s20, 0
      %p103 = por %p101, %p102
      %p104 = scmp.ne.s32.totalorder %s93, %s96
      %p105 = scmp.eq.s32.totalorder %s25, 1
      %p106 = por %p104, %p105
      %p107 = scmp.ne.s32.totalorder %s96, %s97
      %p108 = scmp.eq.s32.totalorder %s25, 0
      %p109 = por %p107, %p108
      %p110 = scmp.ne.s32.totalorder %s96, %s97
      %p111 = scmp.eq.s32.totalorder %s26, 1
      %p112 = por %p110, %p111
      %p114 = scmp.ne.s32.totalorder %s97, %s113
      %p115 = scmp.eq.s32.totalorder %s26, 0
      %p116 = por %p114, %p115
      %s117 = ssub.s32 %s27, %s39
      %s118 = ssub.s32 %s28, %s35
      %s119 = sor.u32 %s117, %s118
      %p120 = scmp.eq.s32.totalorder %s119, 0
      %s122 = sadd.s32 %s121, 1
      %s123 = scalar_select %p120, %s121, %s122
      %p126 = pneg %p120
      %p127 = scmp.eq.s32.totalorder %s20, 1
      %p128 = por %p126, %p127
      %p129 = scmp.ne.s32.totalorder %s121, %s124
      %p130 = scmp.eq.s32.totalorder %s20, 0
      %p131 = por %p129, %p130
      %p132 = scmp.ne.s32.totalorder %s121, %s124
      %p133 = scmp.eq.s32.totalorder %s25, 1
      %p134 = por %p132, %p133
      %p135 = scmp.ne.s32.totalorder %s124, %s125
      %p136 = scmp.eq.s32.totalorder %s25, 0
      %p137 = por %p135, %p136
      %p138 = scmp.ne.s32.totalorder %s124, %s125
      %p139 = scmp.eq.s32.totalorder %s26, 1
      %p140 = por %p138, %p139
      %p142 = scmp.ne.s32.totalorder %s125, %s141
      %p143 = scmp.eq.s32.totalorder %s26, 0
      %p144 = por %p142, %p143
      %p145 = scmp.le.s32.totalorder 1, %s20
      %p146 = scmp.lt.s32.totalorder %s20, 3
      %p147 = pnand %p145, %p146
      %p148 = pneg %p147
      // Predicated region
      $region9: #{tpu_custom_call.1} parent=5 // pred_check
        _
      $region10: #{tpu_custom_call.1} parent=5 // pred_check_branch
        %150 = sbr.rel (%p147) target = $region12
      $region11: #{tpu_custom_call.1} parent=5 // pred_region
        %s151 = ssub.s32 %s20, 1
        // Predicated region
        $region13: #{tpu_custom_call.1} parent=11 // pred_check
          %p152 = pneg %p81
        $region14: #{tpu_custom_call.1} parent=11 // pred_check_branch
          %154 = sbr.rel (%p152) target = $region16
        $region15: #{tpu_custom_call.1} parent=11 // pred_region
          %s156 = ssub.s32 16384, 16384
          %157 = vsyncadd [#allocation6], %s156
          %s158 = sshll.u32 [#allocation5], 4
          %s159 = int_to_ptr.vmem [resolvable:$true] %s158
          %164 = dma.hbm_to_vmem [thread:$0]  %s1, 16384, %s159, [#allocation6], 64, 64, 4
        $region16: #{tpu_custom_call.1} parent=11 // pred_fallthru
          _
      $region12: #{tpu_custom_call.1} parent=5 // pred_fallthru
        _
      %p165 = scmp.lt.s32.totalorder %s20, 2
      // Predicated region
      $region17: #{tpu_custom_call.1} parent=5 // pred_check
        %p166 = pneg %p165
      $region18: #{tpu_custom_call.1} parent=5 // pred_check_branch
        %168 = sbr.rel (%p166) target = $region20
      $region19: #{tpu_custom_call.1} parent=5 // pred_region
        // Predicated region
        $region21: #{tpu_custom_call.1} parent=19 // pred_check
          %p169 = pneg %p54
        $region22: #{tpu_custom_call.1} parent=19 // pred_check_branch
          %171 = sbr.rel (%p169) target = $region24
        $region23: #{tpu_custom_call.1} parent=19 // pred_region
          %s172 = sand.u32 %s44, 1
          %s173 = scalar_lea.sflag [#allocation3], %s172
          %s174 = sand.u32 %s44, 1
          %s175 = smul.addr %s174, 4096
          %s176 = scalar_lea.vmem [#allocation2], %s175
          %s177 = smul.u32 2, %s28
          %s179 = ssub.s32 65536, 65536
          %180 = vsyncadd %s173, %s179
          %s181 = smul.addr %s27, 512
          %s182 = sadd.s32 %s177, %s181
          %s183 = smul.addr %s182, 128
          %s184 = scalar_lea.hbm %s0, %s183
          %s185 = sshll.u32 %s176, 4
          %s186 = int_to_ptr.vmem [resolvable:$true] %s185
          %191 = dma.hbm_to_vmem [thread:$0]  %s184, 65536, %s186, %s173, 256, 256, 16
        $region24: #{tpu_custom_call.1} parent=19 // pred_fallthru
          _
      $region20: #{tpu_custom_call.1} parent=5 // pred_fallthru
        _
      %p192 = scmp.le.s32.totalorder 1, %s20
      %p193 = scmp.lt.s32.totalorder %s20, 3
      %p194 = pnand %p192, %p193
      %p195 = pneg %p194
      // Predicated region
      $region25: #{tpu_custom_call.1} parent=5 // pred_check
        _
      $region26: #{tpu_custom_call.1} parent=5 // pred_check_branch
        %197 = sbr.rel (%p194) target = $region28
      $region27: #{tpu_custom_call.1} parent=5 // pred_region
        %s198 = ssub.s32 %s20, 1
        %s199 = sand.u32 %s47, 1
        %s200 = scalar_lea.sflag [#allocation3], %s199
        %s201 = sand.u32 %s47, 1
        %s202 = smul.addr %s201, 4096
        %s203 = scalar_lea.vmem [#allocation2], %s202
        // Predicated region
        $region29: #{tpu_custom_call.1} parent=27 // pred_check
          %p204 = pneg %p60
        $region30: #{tpu_custom_call.1} parent=27 // pred_check_branch
          %206 = sbr.rel (%p204) target = $region32
        $region31: #{tpu_custom_call.1} parent=27 // pred_region
          %207 = dma.done %s200, 65536
        $region32: #{tpu_custom_call.1} parent=27 // pred_fallthru
          _
        // Predicated region
        $region33: #{tpu_custom_call.1} parent=27 // pred_check
          %p208 = pneg %p81
        $region34: #{tpu_custom_call.1} parent=27 // pred_check_branch
          %210 = sbr.rel (%p208) target = $region36
        $region35: #{tpu_custom_call.1} parent=27 // pred_region
          %211 = dma.done [#allocation6], 16384
        $region36: #{tpu_custom_call.1} parent=27 // pred_fallthru
          _
        %s212 = sand.u32 %s47, 1
        %s213 = scalar_lea.sflag [#allocation3], %s212
        %s214 = sand.u32 %s47, 1
        %s215 = smul.addr %s214, 4096
        %s216 = scalar_lea.vmem [#allocation2], %s215
        %p217 = pneg %p60
        %p218 = pneg %p57
        %p219 = pneg %p81
        %p220 = pneg %p78
        %p221 = pneg %p109
        %p222 = pneg %p106
        %s223 = sand.u32 %s96, 1
        %s224 = scalar_lea.sflag [#allocation4], %s223
        %s225 = sand.u32 %s96, 1
        %s226 = smul.addr %s225, 128
        %s227 = scalar_lea.vmem [#allocation7], %s226
        %p228 = pneg %p137
        %p229 = pneg %p134
        %s230 = sand.u32 %s124, 1
        %s231 = scalar_lea.sflag [#allocation9], %s230
        %s232 = sand.u32 %s124, 1
        %s233 = smul.addr %s232, 2
        %s234 = scalar_lea.vmem [#allocation8], %s233
        %s235 = smul.u32 2, %s30
        %s236 = smul.u32 32, %s30
        %v238 = vld [vmem:[%s203] sm:$0xff]
        %v239 = vld [vmem:[%s203 + $0x8] sm:$0xff]
        %v240 = vld [vmem:[%s203 + $0x10] sm:$0xff]
        %v241 = vld [vmem:[%s203 + $0x18] sm:$0xff]
        %v242 = vld [vmem:[%s203 + $0x20] sm:$0xff]
        %v243 = vld [vmem:[%s203 + $0x28] sm:$0xff]
        %v244 = vld [vmem:[%s203 + $0x30] sm:$0xff]
        %v245 = vld [vmem:[%s203 + $0x38] sm:$0xff]
        %v246 = vld [vmem:[%s203 + $0x40] sm:$0xff]
        %v247 = vld [vmem:[%s203 + $0x48] sm:$0xff]
        %v248 = vld [vmem:[%s203 + $0x50] sm:$0xff]
        %v249 = vld [vmem:[%s203 + $0x58] sm:$0xff]
        %v250 = vld [vmem:[%s203 + $0x60] sm:$0xff]
        %v251 = vld [vmem:[%s203 + $0x68] sm:$0xff]
        %v252 = vld [vmem:[%s203 + $0x70] sm:$0xff]
        %v253 = vld [vmem:[%s203 + $0x78] sm:$0xff]
        %v254 = vld [vmem:[%s203 + $0x80] sm:$0xff]
        %v255 = vld [vmem:[%s203 + $0x88] sm:$0xff]
        %v256 = vld [vmem:[%s203 + $0x90] sm:$0xff]
        %v257 = vld [vmem:[%s203 + $0x98] sm:$0xff]
        %v258 = vld [vmem:[%s203 + $0xa0] sm:$0xff]
        %v259 = vld [vmem:[%s203 + $0xa8] sm:$0xff]
        %v260 = vld [vmem:[%s203 + $0xb0] sm:$0xff]
        %v261 = vld [vmem:[%s203 + $0xb8] sm:$0xff]
        %v262 = vld [vmem:[%s203 + $0xc0] sm:$0xff]
        %v263 = vld [vmem:[%s203 + $0xc8] sm:$0xff]
        %v264 = vld [vmem:[%s203 + $0xd0] sm:$0xff]
        %v265 = vld [vmem:[%s203 + $0xd8] sm:$0xff]
        %v266 = vld [vmem:[%s203 + $0xe0] sm:$0xff]
        %v267 = vld [vmem:[%s203 + $0xe8] sm:$0xff]
        %v268 = vld [vmem:[%s203 + $0xf0] sm:$0xff]
        %v269 = vld [vmem:[%s203 + $0xf8] sm:$0xff]
        %v270 = vld [vmem:[%s203 + $0x100] sm:$0xff]
        %v271 = vld [vmem:[%s203 + $0x108] sm:$0xff]
        %v272 = vld [vmem:[%s203 + $0x110] sm:$0xff]
        %v273 = vld [vmem:[%s203 + $0x118] sm:$0xff]
        %v274 = vld [vmem:[%s203 + $0x120] sm:$0xff]
        %v275 = vld [vmem:[%s203 + $0x128] sm:$0xff]
        %v276 = vld [vmem:[%s203 + $0x130] sm:$0xff]
        %v277 = vld [vmem:[%s203 + $0x138] sm:$0xff]
        %v278 = vld [vmem:[%s203 + $0x140] sm:$0xff]
        %v279 = vld [vmem:[%s203 + $0x148] sm:$0xff]
        %v280 = vld [vmem:[%s203 + $0x150] sm:$0xff]
        %v281 = vld [vmem:[%s203 + $0x158] sm:$0xff]
        %v282 = vld [vmem:[%s203 + $0x160] sm:$0xff]
        %v283 = vld [vmem:[%s203 + $0x168] sm:$0xff]
        %v284 = vld [vmem:[%s203 + $0x170] sm:$0xff]
        %v285 = vld [vmem:[%s203 + $0x178] sm:$0xff]
        %v286 = vld [vmem:[%s203 + $0x180] sm:$0xff]
        %v287 = vld [vmem:[%s203 + $0x188] sm:$0xff]
        %v288 = vld [vmem:[%s203 + $0x190] sm:$0xff]
        %v289 = vld [vmem:[%s203 + $0x198] sm:$0xff]
        %v290 = vld [vmem:[%s203 + $0x1a0] sm:$0xff]
        %v291 = vld [vmem:[%s203 + $0x1a8] sm:$0xff]
        %v292 = vld [vmem:[%s203 + $0x1b0] sm:$0xff]
        %v293 = vld [vmem:[%s203 + $0x1b8] sm:$0xff]
        %v294 = vld [vmem:[%s203 + $0x1c0] sm:$0xff]
        %v295 = vld [vmem:[%s203 + $0x1c8] sm:$0xff]
        %v296 = vld [vmem:[%s203 + $0x1d0] sm:$0xff]
        %v297 = vld [vmem:[%s203 + $0x1d8] sm:$0xff]
        %v298 = vld [vmem:[%s203 + $0x1e0] sm:$0xff]
        %v299 = vld [vmem:[%s203 + $0x1e8] sm:$0xff]
        %v300 = vld [vmem:[%s203 + $0x1f0] sm:$0xff]
        %v301 = vld [vmem:[%s203 + $0x1f8] sm:$0xff]
        %v302 = vld [vmem:[%s203 + $0x200] sm:$0xff]
        %v303 = vld [vmem:[%s203 + $0x208] sm:$0xff]
        %v304 = vld [vmem:[%s203 + $0x210] sm:$0xff]
        %v305 = vld [vmem:[%s203 + $0x218] sm:$0xff]
        %v306 = vld [vmem:[%s203 + $0x220] sm:$0xff]
        %v307 = vld [vmem:[%s203 + $0x228] sm:$0xff]
        %v308 = vld [vmem:[%s203 + $0x230] sm:$0xff]
        %v309 = vld [vmem:[%s203 + $0x238] sm:$0xff]
        %v310 = vld [vmem:[%s203 + $0x240] sm:$0xff]
        %v311 = vld [vmem:[%s203 + $0x248] sm:$0xff]
        %v312 = vld [vmem:[%s203 + $0x250] sm:$0xff]
        %v313 = vld [vmem:[%s203 + $0x258] sm:$0xff]
        %v314 = vld [vmem:[%s203 + $0x260] sm:$0xff]
        %v315 = vld [vmem:[%s203 + $0x268] sm:$0xff]
        %v316 = vld [vmem:[%s203 + $0x270] sm:$0xff]
        %v317 = vld [vmem:[%s203 + $0x278] sm:$0xff]
        %v318 = vld [vmem:[%s203 + $0x280] sm:$0xff]
        %v319 = vld [vmem:[%s203 + $0x288] sm:$0xff]
        %v320 = vld [vmem:[%s203 + $0x290] sm:$0xff]
        %v321 = vld [vmem:[%s203 + $0x298] sm:$0xff]
        %v322 = vld [vmem:[%s203 + $0x2a0] sm:$0xff]
        %v323 = vld [vmem:[%s203 + $0x2a8] sm:$0xff]
        %v324 = vld [vmem:[%s203 + $0x2b0] sm:$0xff]
        %v325 = vld [vmem:[%s203 + $0x2b8] sm:$0xff]
        %v326 = vld [vmem:[%s203 + $0x2c0] sm:$0xff]
        %v327 = vld [vmem:[%s203 + $0x2c8] sm:$0xff]
        %v328 = vld [vmem:[%s203 + $0x2d0] sm:$0xff]
        %v329 = vld [vmem:[%s203 + $0x2d8] sm:$0xff]
        %v330 = vld [vmem:[%s203 + $0x2e0] sm:$0xff]
        %v331 = vld [vmem:[%s203 + $0x2e8] sm:$0xff]
        %v332 = vld [vmem:[%s203 + $0x2f0] sm:$0xff]
        %v333 = vld [vmem:[%s203 + $0x2f8] sm:$0xff]
        %v334 = vld [vmem:[%s203 + $0x300] sm:$0xff]
        %v335 = vld [vmem:[%s203 + $0x308] sm:$0xff]
        %v336 = vld [vmem:[%s203 + $0x310] sm:$0xff]
        %v337 = vld [vmem:[%s203 + $0x318] sm:$0xff]
        %v338 = vld [vmem:[%s203 + $0x320] sm:$0xff]
        %v339 = vld [vmem:[%s203 + $0x328] sm:$0xff]
        %v340 = vld [vmem:[%s203 + $0x330] sm:$0xff]
        %v341 = vld [vmem:[%s203 + $0x338] sm:$0xff]
        %v342 = vld [vmem:[%s203 + $0x340] sm:$0xff]
        %v343 = vld [vmem:[%s203 + $0x348] sm:$0xff]
        %v344 = vld [vmem:[%s203 + $0x350] sm:$0xff]
        %v345 = vld [vmem:[%s203 + $0x358] sm:$0xff]
        %v346 = vld [vmem:[%s203 + $0x360] sm:$0xff]
        %v347 = vld [vmem:[%s203 + $0x368] sm:$0xff]
        %v348 = vld [vmem:[%s203 + $0x370] sm:$0xff]
        %v349 = vld [vmem:[%s203 + $0x378] sm:$0xff]
        %v350 = vld [vmem:[%s203 + $0x380] sm:$0xff]
        %v351 = vld [vmem:[%s203 + $0x388] sm:$0xff]
        %v352 = vld [vmem:[%s203 + $0x390] sm:$0xff]
        %v353 = vld [vmem:[%s203 + $0x398] sm:$0xff]
        %v354 = vld [vmem:[%s203 + $0x3a0] sm:$0xff]
        %v355 = vld [vmem:[%s203 + $0x3a8] sm:$0xff]
        %v356 = vld [vmem:[%s203 + $0x3b0] sm:$0xff]
        %v357 = vld [vmem:[%s203 + $0x3b8] sm:$0xff]
        %v358 = vld [vmem:[%s203 + $0x3c0] sm:$0xff]
        %v359 = vld [vmem:[%s203 + $0x3c8] sm:$0xff]
        %v360 = vld [vmem:[%s203 + $0x3d0] sm:$0xff]
        %v361 = vld [vmem:[%s203 + $0x3d8] sm:$0xff]
        %v362 = vld [vmem:[%s203 + $0x3e0] sm:$0xff]
        %v363 = vld [vmem:[%s203 + $0x3e8] sm:$0xff]
        %v364 = vld [vmem:[%s203 + $0x3f0] sm:$0xff]
        %v365 = vld [vmem:[%s203 + $0x3f8] sm:$0xff]
        %v366 = vld [vmem:[%s203 + $0x400] sm:$0xff]
        %v367 = vld [vmem:[%s203 + $0x408] sm:$0xff]
        %v368 = vld [vmem:[%s203 + $0x410] sm:$0xff]
        %v369 = vld [vmem:[%s203 + $0x418] sm:$0xff]
        %v370 = vld [vmem:[%s203 + $0x420] sm:$0xff]
        %v371 = vld [vmem:[%s203 + $0x428] sm:$0xff]
        %v372 = vld [vmem:[%s203 + $0x430] sm:$0xff]
        %v373 = vld [vmem:[%s203 + $0x438] sm:$0xff]
        %v374 = vld [vmem:[%s203 + $0x440] sm:$0xff]
        %v375 = vld [vmem:[%s203 + $0x448] sm:$0xff]
        %v376 = vld [vmem:[%s203 + $0x450] sm:$0xff]
        %v377 = vld [vmem:[%s203 + $0x458] sm:$0xff]
        %v378 = vld [vmem:[%s203 + $0x460] sm:$0xff]
        %v379 = vld [vmem:[%s203 + $0x468] sm:$0xff]
        %v380 = vld [vmem:[%s203 + $0x470] sm:$0xff]
        %v381 = vld [vmem:[%s203 + $0x478] sm:$0xff]
        %v382 = vld [vmem:[%s203 + $0x480] sm:$0xff]
        %v383 = vld [vmem:[%s203 + $0x488] sm:$0xff]
        %v384 = vld [vmem:[%s203 + $0x490] sm:$0xff]
        %v385 = vld [vmem:[%s203 + $0x498] sm:$0xff]
        %v386 = vld [vmem:[%s203 + $0x4a0] sm:$0xff]
        %v387 = vld [vmem:[%s203 + $0x4a8] sm:$0xff]
        %v388 = vld [vmem:[%s203 + $0x4b0] sm:$0xff]
        %v389 = vld [vmem:[%s203 + $0x4b8] sm:$0xff]
        %v390 = vld [vmem:[%s203 + $0x4c0] sm:$0xff]
        %v391 = vld [vmem:[%s203 + $0x4c8] sm:$0xff]
        %v392 = vld [vmem:[%s203 + $0x4d0] sm:$0xff]
        %v393 = vld [vmem:[%s203 + $0x4d8] sm:$0xff]
        %v394 = vld [vmem:[%s203 + $0x4e0] sm:$0xff]
        %v395 = vld [vmem:[%s203 + $0x4e8] sm:$0xff]
        %v396 = vld [vmem:[%s203 + $0x4f0] sm:$0xff]
        %v397 = vld [vmem:[%s203 + $0x4f8] sm:$0xff]
        %v398 = vld [vmem:[%s203 + $0x500] sm:$0xff]
        %v399 = vld [vmem:[%s203 + $0x508] sm:$0xff]
        %v400 = vld [vmem:[%s203 + $0x510] sm:$0xff]
        %v401 = vld [vmem:[%s203 + $0x518] sm:$0xff]
        %v402 = vld [vmem:[%s203 + $0x520] sm:$0xff]
        %v403 = vld [vmem:[%s203 + $0x528] sm:$0xff]
        %v404 = vld [vmem:[%s203 + $0x530] sm:$0xff]
        %v405 = vld [vmem:[%s203 + $0x538] sm:$0xff]
        %v406 = vld [vmem:[%s203 + $0x540] sm:$0xff]
        %v407 = vld [vmem:[%s203 + $0x548] sm:$0xff]
        %v408 = vld [vmem:[%s203 + $0x550] sm:$0xff]
        %v409 = vld [vmem:[%s203 + $0x558] sm:$0xff]
        %v410 = vld [vmem:[%s203 + $0x560] sm:$0xff]
        %v411 = vld [vmem:[%s203 + $0x568] sm:$0xff]
        %v412 = vld [vmem:[%s203 + $0x570] sm:$0xff]
        %v413 = vld [vmem:[%s203 + $0x578] sm:$0xff]
        %v414 = vld [vmem:[%s203 + $0x580] sm:$0xff]
        %v415 = vld [vmem:[%s203 + $0x588] sm:$0xff]
        %v416 = vld [vmem:[%s203 + $0x590] sm:$0xff]
        %v417 = vld [vmem:[%s203 + $0x598] sm:$0xff]
        %v418 = vld [vmem:[%s203 + $0x5a0] sm:$0xff]
        %v419 = vld [vmem:[%s203 + $0x5a8] sm:$0xff]
        %v420 = vld [vmem:[%s203 + $0x5b0] sm:$0xff]
        %v421 = vld [vmem:[%s203 + $0x5b8] sm:$0xff]
        %v422 = vld [vmem:[%s203 + $0x5c0] sm:$0xff]
        %v423 = vld [vmem:[%s203 + $0x5c8] sm:$0xff]
        %v424 = vld [vmem:[%s203 + $0x5d0] sm:$0xff]
        %v425 = vld [vmem:[%s203 + $0x5d8] sm:$0xff]
        %v426 = vld [vmem:[%s203 + $0x5e0] sm:$0xff]
        %v427 = vld [vmem:[%s203 + $0x5e8] sm:$0xff]
        %v428 = vld [vmem:[%s203 + $0x5f0] sm:$0xff]
        %v429 = vld [vmem:[%s203 + $0x5f8] sm:$0xff]
        %v430 = vld [vmem:[%s203 + $0x600] sm:$0xff]
        %v431 = vld [vmem:[%s203 + $0x608] sm:$0xff]
        %v432 = vld [vmem:[%s203 + $0x610] sm:$0xff]
        %v433 = vld [vmem:[%s203 + $0x618] sm:$0xff]
        %v434 = vld [vmem:[%s203 + $0x620] sm:$0xff]
        %v435 = vld [vmem:[%s203 + $0x628] sm:$0xff]
        %v436 = vld [vmem:[%s203 + $0x630] sm:$0xff]
        %v437 = vld [vmem:[%s203 + $0x638] sm:$0xff]
        %v438 = vld [vmem:[%s203 + $0x640] sm:$0xff]
        %v439 = vld [vmem:[%s203 + $0x648] sm:$0xff]
        %v440 = vld [vmem:[%s203 + $0x650] sm:$0xff]
        %v441 = vld [vmem:[%s203 + $0x658] sm:$0xff]
        %v442 = vld [vmem:[%s203 + $0x660] sm:$0xff]
        %v443 = vld [vmem:[%s203 + $0x668] sm:$0xff]
        %v444 = vld [vmem:[%s203 + $0x670] sm:$0xff]
        %v445 = vld [vmem:[%s203 + $0x678] sm:$0xff]
        %v446 = vld [vmem:[%s203 + $0x680] sm:$0xff]
        %v447 = vld [vmem:[%s203 + $0x688] sm:$0xff]
        %v448 = vld [vmem:[%s203 + $0x690] sm:$0xff]
        %v449 = vld [vmem:[%s203 + $0x698] sm:$0xff]
        %v450 = vld [vmem:[%s203 + $0x6a0] sm:$0xff]
        %v451 = vld [vmem:[%s203 + $0x6a8] sm:$0xff]
        %v452 = vld [vmem:[%s203 + $0x6b0] sm:$0xff]
        %v453 = vld [vmem:[%s203 + $0x6b8] sm:$0xff]
        %v454 = vld [vmem:[%s203 + $0x6c0] sm:$0xff]
        %v455 = vld [vmem:[%s203 + $0x6c8] sm:$0xff]
        %v456 = vld [vmem:[%s203 + $0x6d0] sm:$0xff]
        %v457 = vld [vmem:[%s203 + $0x6d8] sm:$0xff]
        %v458 = vld [vmem:[%s203 + $0x6e0] sm:$0xff]
        %v459 = vld [vmem:[%s203 + $0x6e8] sm:$0xff]
        %v460 = vld [vmem:[%s203 + $0x6f0] sm:$0xff]
        %v461 = vld [vmem:[%s203 + $0x6f8] sm:$0xff]
        %v462 = vld [vmem:[%s203 + $0x700] sm:$0xff]
        %v463 = vld [vmem:[%s203 + $0x708] sm:$0xff]
        %v464 = vld [vmem:[%s203 + $0x710] sm:$0xff]
        %v465 = vld [vmem:[%s203 + $0x718] sm:$0xff]
        %v466 = vld [vmem:[%s203 + $0x720] sm:$0xff]
        %v467 = vld [vmem:[%s203 + $0x728] sm:$0xff]
        %v468 = vld [vmem:[%s203 + $0x730] sm:$0xff]
        %v469 = vld [vmem:[%s203 + $0x738] sm:$0xff]
        %v470 = vld [vmem:[%s203 + $0x740] sm:$0xff]
        %v471 = vld [vmem:[%s203 + $0x748] sm:$0xff]
        %v472 = vld [vmem:[%s203 + $0x750] sm:$0xff]
        %v473 = vld [vmem:[%s203 + $0x758] sm:$0xff]
        %v474 = vld [vmem:[%s203 + $0x760] sm:$0xff]
        %v475 = vld [vmem:[%s203 + $0x768] sm:$0xff]
        %v476 = vld [vmem:[%s203 + $0x770] sm:$0xff]
        %v477 = vld [vmem:[%s203 + $0x778] sm:$0xff]
        %v478 = vld [vmem:[%s203 + $0x780] sm:$0xff]
        %v479 = vld [vmem:[%s203 + $0x788] sm:$0xff]
        %v480 = vld [vmem:[%s203 + $0x790] sm:$0xff]
        %v481 = vld [vmem:[%s203 + $0x798] sm:$0xff]
        %v482 = vld [vmem:[%s203 + $0x7a0] sm:$0xff]
        %v483 = vld [vmem:[%s203 + $0x7a8] sm:$0xff]
        %v484 = vld [vmem:[%s203 + $0x7b0] sm:$0xff]
        %v485 = vld [vmem:[%s203 + $0x7b8] sm:$0xff]
        %v486 = vld [vmem:[%s203 + $0x7c0] sm:$0xff]
        %v487 = vld [vmem:[%s203 + $0x7c8] sm:$0xff]
        %v488 = vld [vmem:[%s203 + $0x7d0] sm:$0xff]
        %v489 = vld [vmem:[%s203 + $0x7d8] sm:$0xff]
        %v490 = vld [vmem:[%s203 + $0x7e0] sm:$0xff]
        %v491 = vld [vmem:[%s203 + $0x7e8] sm:$0xff]
        %v492 = vld [vmem:[%s203 + $0x7f0] sm:$0xff]
        %v493 = vld [vmem:[%s203 + $0x7f8] sm:$0xff]
        %v494 = vld [vmem:[%s203 + $0x800] sm:$0xff]
        %v495 = vld [vmem:[%s203 + $0x808] sm:$0xff]
        %v496 = vld [vmem:[%s203 + $0x810] sm:$0xff]
        %v497 = vld [vmem:[%s203 + $0x818] sm:$0xff]
        %v498 = vld [vmem:[%s203 + $0x820] sm:$0xff]
        %v499 = vld [vmem:[%s203 + $0x828] sm:$0xff]
        %v500 = vld [vmem:[%s203 + $0x830] sm:$0xff]
        %v501 = vld [vmem:[%s203 + $0x838] sm:$0xff]
        %v502 = vld [vmem:[%s203 + $0x840] sm:$0xff]
        %v503 = vld [vmem:[%s203 + $0x848] sm:$0xff]
        %v504 = vld [vmem:[%s203 + $0x850] sm:$0xff]
        %v505 = vld [vmem:[%s203 + $0x858] sm:$0xff]
        %v506 = vld [vmem:[%s203 + $0x860] sm:$0xff]
        %v507 = vld [vmem:[%s203 + $0x868] sm:$0xff]
        %v508 = vld [vmem:[%s203 + $0x870] sm:$0xff]
        %v509 = vld [vmem:[%s203 + $0x878] sm:$0xff]
        %v510 = vld [vmem:[%s203 + $0x880] sm:$0xff]
        %v511 = vld [vmem:[%s203 + $0x888] sm:$0xff]
        %v512 = vld [vmem:[%s203 + $0x890] sm:$0xff]
        %v513 = vld [vmem:[%s203 + $0x898] sm:$0xff]
        %v514 = vld [vmem:[%s203 + $0x8a0] sm:$0xff]
        %v515 = vld [vmem:[%s203 + $0x8a8] sm:$0xff]
        %v516 = vld [vmem:[%s203 + $0x8b0] sm:$0xff]
        %v517 = vld [vmem:[%s203 + $0x8b8] sm:$0xff]
        %v518 = vld [vmem:[%s203 + $0x8c0] sm:$0xff]
        %v519 = vld [vmem:[%s203 + $0x8c8] sm:$0xff]
        %v520 = vld [vmem:[%s203 + $0x8d0] sm:$0xff]
        %v521 = vld [vmem:[%s203 + $0x8d8] sm:$0xff]
        %v522 = vld [vmem:[%s203 + $0x8e0] sm:$0xff]
        %v523 = vld [vmem:[%s203 + $0x8e8] sm:$0xff]
        %v524 = vld [vmem:[%s203 + $0x8f0] sm:$0xff]
        %v525 = vld [vmem:[%s203 + $0x8f8] sm:$0xff]
        %v526 = vld [vmem:[%s203 + $0x900] sm:$0xff]
        %v527 = vld [vmem:[%s203 + $0x908] sm:$0xff]
        %v528 = vld [vmem:[%s203 + $0x910] sm:$0xff]
        %v529 = vld [vmem:[%s203 + $0x918] sm:$0xff]
        %v530 = vld [vmem:[%s203 + $0x920] sm:$0xff]
        %v531 = vld [vmem:[%s203 + $0x928] sm:$0xff]
        %v532 = vld [vmem:[%s203 + $0x930] sm:$0xff]
        %v533 = vld [vmem:[%s203 + $0x938] sm:$0xff]
        %v534 = vld [vmem:[%s203 + $0x940] sm:$0xff]
        %v535 = vld [vmem:[%s203 + $0x948] sm:$0xff]
        %v536 = vld [vmem:[%s203 + $0x950] sm:$0xff]
        %v537 = vld [vmem:[%s203 + $0x958] sm:$0xff]
        %v538 = vld [vmem:[%s203 + $0x960] sm:$0xff]
        %v539 = vld [vmem:[%s203 + $0x968] sm:$0xff]
        %v540 = vld [vmem:[%s203 + $0x970] sm:$0xff]
        %v541 = vld [vmem:[%s203 + $0x978] sm:$0xff]
        %v542 = vld [vmem:[%s203 + $0x980] sm:$0xff]
        %v543 = vld [vmem:[%s203 + $0x988] sm:$0xff]
        %v544 = vld [vmem:[%s203 + $0x990] sm:$0xff]
        %v545 = vld [vmem:[%s203 + $0x998] sm:$0xff]
        %v546 = vld [vmem:[%s203 + $0x9a0] sm:$0xff]
        %v547 = vld [vmem:[%s203 + $0x9a8] sm:$0xff]
        %v548 = vld [vmem:[%s203 + $0x9b0] sm:$0xff]
        %v549 = vld [vmem:[%s203 + $0x9b8] sm:$0xff]
        %v550 = vld [vmem:[%s203 + $0x9c0] sm:$0xff]
        %v551 = vld [vmem:[%s203 + $0x9c8] sm:$0xff]
        %v552 = vld [vmem:[%s203 + $0x9d0] sm:$0xff]
        %v553 = vld [vmem:[%s203 + $0x9d8] sm:$0xff]
        %v554 = vld [vmem:[%s203 + $0x9e0] sm:$0xff]
        %v555 = vld [vmem:[%s203 + $0x9e8] sm:$0xff]
        %v556 = vld [vmem:[%s203 + $0x9f0] sm:$0xff]
        %v557 = vld [vmem:[%s203 + $0x9f8] sm:$0xff]
        %v558 = vld [vmem:[%s203 + $0xa00] sm:$0xff]
        %v559 = vld [vmem:[%s203 + $0xa08] sm:$0xff]
        %v560 = vld [vmem:[%s203 + $0xa10] sm:$0xff]
        %v561 = vld [vmem:[%s203 + $0xa18] sm:$0xff]
        %v562 = vld [vmem:[%s203 + $0xa20] sm:$0xff]
        %v563 = vld [vmem:[%s203 + $0xa28] sm:$0xff]
        %v564 = vld [vmem:[%s203 + $0xa30] sm:$0xff]
        %v565 = vld [vmem:[%s203 + $0xa38] sm:$0xff]
        %v566 = vld [vmem:[%s203 + $0xa40] sm:$0xff]
        %v567 = vld [vmem:[%s203 + $0xa48] sm:$0xff]
        %v568 = vld [vmem:[%s203 + $0xa50] sm:$0xff]
        %v569 = vld [vmem:[%s203 + $0xa58] sm:$0xff]
        %v570 = vld [vmem:[%s203 + $0xa60] sm:$0xff]
        %v571 = vld [vmem:[%s203 + $0xa68] sm:$0xff]
        %v572 = vld [vmem:[%s203 + $0xa70] sm:$0xff]
        %v573 = vld [vmem:[%s203 + $0xa78] sm:$0xff]
        %v574 = vld [vmem:[%s203 + $0xa80] sm:$0xff]
        %v575 = vld [vmem:[%s203 + $0xa88] sm:$0xff]
        %v576 = vld [vmem:[%s203 + $0xa90] sm:$0xff]
        %v577 = vld [vmem:[%s203 + $0xa98] sm:$0xff]
        %v578 = vld [vmem:[%s203 + $0xaa0] sm:$0xff]
        %v579 = vld [vmem:[%s203 + $0xaa8] sm:$0xff]
        %v580 = vld [vmem:[%s203 + $0xab0] sm:$0xff]
        %v581 = vld [vmem:[%s203 + $0xab8] sm:$0xff]
        %v582 = vld [vmem:[%s203 + $0xac0] sm:$0xff]
        %v583 = vld [vmem:[%s203 + $0xac8] sm:$0xff]
        %v584 = vld [vmem:[%s203 + $0xad0] sm:$0xff]
        %v585 = vld [vmem:[%s203 + $0xad8] sm:$0xff]
        %v586 = vld [vmem:[%s203 + $0xae0] sm:$0xff]
        %v587 = vld [vmem:[%s203 + $0xae8] sm:$0xff]
        %v588 = vld [vmem:[%s203 + $0xaf0] sm:$0xff]
        %v589 = vld [vmem:[%s203 + $0xaf8] sm:$0xff]
        %v590 = vld [vmem:[%s203 + $0xb00] sm:$0xff]
        %v591 = vld [vmem:[%s203 + $0xb08] sm:$0xff]
        %v592 = vld [vmem:[%s203 + $0xb10] sm:$0xff]
        %v593 = vld [vmem:[%s203 + $0xb18] sm:$0xff]
        %v594 = vld [vmem:[%s203 + $0xb20] sm:$0xff]
        %v595 = vld [vmem:[%s203 + $0xb28] sm:$0xff]
        %v596 = vld [vmem:[%s203 + $0xb30] sm:$0xff]
        %v597 = vld [vmem:[%s203 + $0xb38] sm:$0xff]
        %v598 = vld [vmem:[%s203 + $0xb40] sm:$0xff]
        %v599 = vld [vmem:[%s203 + $0xb48] sm:$0xff]
        %v600 = vld [vmem:[%s203 + $0xb50] sm:$0xff]
        %v601 = vld [vmem:[%s203 + $0xb58] sm:$0xff]
        %v602 = vld [vmem:[%s203 + $0xb60] sm:$0xff]
        %v603 = vld [vmem:[%s203 + $0xb68] sm:$0xff]
        %v604 = vld [vmem:[%s203 + $0xb70] sm:$0xff]
        %v605 = vld [vmem:[%s203 + $0xb78] sm:$0xff]
        %v606 = vld [vmem:[%s203 + $0xb80] sm:$0xff]
        %v607 = vld [vmem:[%s203 + $0xb88] sm:$0xff]
        %v608 = vld [vmem:[%s203 + $0xb90] sm:$0xff]
        %v609 = vld [vmem:[%s203 + $0xb98] sm:$0xff]
        %v610 = vld [vmem:[%s203 + $0xba0] sm:$0xff]
        %v611 = vld [vmem:[%s203 + $0xba8] sm:$0xff]
        %v612 = vld [vmem:[%s203 + $0xbb0] sm:$0xff]
        %v613 = vld [vmem:[%s203 + $0xbb8] sm:$0xff]
        %v614 = vld [vmem:[%s203 + $0xbc0] sm:$0xff]
        %v615 = vld [vmem:[%s203 + $0xbc8] sm:$0xff]
        %v616 = vld [vmem:[%s203 + $0xbd0] sm:$0xff]
        %v617 = vld [vmem:[%s203 + $0xbd8] sm:$0xff]
        %v618 = vld [vmem:[%s203 + $0xbe0] sm:$0xff]
        %v619 = vld [vmem:[%s203 + $0xbe8] sm:$0xff]
        %v620 = vld [vmem:[%s203 + $0xbf0] sm:$0xff]
        %v621 = vld [vmem:[%s203 + $0xbf8] sm:$0xff]
        %v622 = vld [vmem:[%s203 + $0xc00] sm:$0xff]
        %v623 = vld [vmem:[%s203 + $0xc08] sm:$0xff]
        %v624 = vld [vmem:[%s203 + $0xc10] sm:$0xff]
        %v625 = vld [vmem:[%s203 + $0xc18] sm:$0xff]
        %v626 = vld [vmem:[%s203 + $0xc20] sm:$0xff]
        %v627 = vld [vmem:[%s203 + $0xc28] sm:$0xff]
        %v628 = vld [vmem:[%s203 + $0xc30] sm:$0xff]
        %v629 = vld [vmem:[%s203 + $0xc38] sm:$0xff]
        %v630 = vld [vmem:[%s203 + $0xc40] sm:$0xff]
        %v631 = vld [vmem:[%s203 + $0xc48] sm:$0xff]
        %v632 = vld [vmem:[%s203 + $0xc50] sm:$0xff]
        %v633 = vld [vmem:[%s203 + $0xc58] sm:$0xff]
        %v634 = vld [vmem:[%s203 + $0xc60] sm:$0xff]
        %v635 = vld [vmem:[%s203 + $0xc68] sm:$0xff]
        %v636 = vld [vmem:[%s203 + $0xc70] sm:$0xff]
        %v637 = vld [vmem:[%s203 + $0xc78] sm:$0xff]
        %v638 = vld [vmem:[%s203 + $0xc80] sm:$0xff]
        %v639 = vld [vmem:[%s203 + $0xc88] sm:$0xff]
        %v640 = vld [vmem:[%s203 + $0xc90] sm:$0xff]
        %v641 = vld [vmem:[%s203 + $0xc98] sm:$0xff]
        %v642 = vld [vmem:[%s203 + $0xca0] sm:$0xff]
        %v643 = vld [vmem:[%s203 + $0xca8] sm:$0xff]
        %v644 = vld [vmem:[%s203 + $0xcb0] sm:$0xff]
        %v645 = vld [vmem:[%s203 + $0xcb8] sm:$0xff]
        %v646 = vld [vmem:[%s203 + $0xcc0] sm:$0xff]
        %v647 = vld [vmem:[%s203 + $0xcc8] sm:$0xff]
        %v648 = vld [vmem:[%s203 + $0xcd0] sm:$0xff]
        %v649 = vld [vmem:[%s203 + $0xcd8] sm:$0xff]
        %v650 = vld [vmem:[%s203 + $0xce0] sm:$0xff]
        %v651 = vld [vmem:[%s203 + $0xce8] sm:$0xff]
        %v652 = vld [vmem:[%s203 + $0xcf0] sm:$0xff]
        %v653 = vld [vmem:[%s203 + $0xcf8] sm:$0xff]
        %v654 = vld [vmem:[%s203 + $0xd00] sm:$0xff]
        %v655 = vld [vmem:[%s203 + $0xd08] sm:$0xff]
        %v656 = vld [vmem:[%s203 + $0xd10] sm:$0xff]
        %v657 = vld [vmem:[%s203 + $0xd18] sm:$0xff]
        %v658 = vld [vmem:[%s203 + $0xd20] sm:$0xff]
        %v659 = vld [vmem:[%s203 + $0xd28] sm:$0xff]
        %v660 = vld [vmem:[%s203 + $0xd30] sm:$0xff]
        %v661 = vld [vmem:[%s203 + $0xd38] sm:$0xff]
        %v662 = vld [vmem:[%s203 + $0xd40] sm:$0xff]
        %v663 = vld [vmem:[%s203 + $0xd48] sm:$0xff]
        %v664 = vld [vmem:[%s203 + $0xd50] sm:$0xff]
        %v665 = vld [vmem:[%s203 + $0xd58] sm:$0xff]
        %v666 = vld [vmem:[%s203 + $0xd60] sm:$0xff]
        %v667 = vld [vmem:[%s203 + $0xd68] sm:$0xff]
        %v668 = vld [vmem:[%s203 + $0xd70] sm:$0xff]
        %v669 = vld [vmem:[%s203 + $0xd78] sm:$0xff]
        %v670 = vld [vmem:[%s203 + $0xd80] sm:$0xff]
        %v671 = vld [vmem:[%s203 + $0xd88] sm:$0xff]
        %v672 = vld [vmem:[%s203 + $0xd90] sm:$0xff]
        %v673 = vld [vmem:[%s203 + $0xd98] sm:$0xff]
        %v674 = vld [vmem:[%s203 + $0xda0] sm:$0xff]
        %v675 = vld [vmem:[%s203 + $0xda8] sm:$0xff]
        %v676 = vld [vmem:[%s203 + $0xdb0] sm:$0xff]
        %v677 = vld [vmem:[%s203 + $0xdb8] sm:$0xff]
        %v678 = vld [vmem:[%s203 + $0xdc0] sm:$0xff]
        %v679 = vld [vmem:[%s203 + $0xdc8] sm:$0xff]
        %v680 = vld [vmem:[%s203 + $0xdd0] sm:$0xff]
        %v681 = vld [vmem:[%s203 + $0xdd8] sm:$0xff]
        %v682 = vld [vmem:[%s203 + $0xde0] sm:$0xff]
        %v683 = vld [vmem:[%s203 + $0xde8] sm:$0xff]
        %v684 = vld [vmem:[%s203 + $0xdf0] sm:$0xff]
        %v685 = vld [vmem:[%s203 + $0xdf8] sm:$0xff]
        %v686 = vld [vmem:[%s203 + $0xe00] sm:$0xff]
        %v687 = vld [vmem:[%s203 + $0xe08] sm:$0xff]
        %v688 = vld [vmem:[%s203 + $0xe10] sm:$0xff]
        %v689 = vld [vmem:[%s203 + $0xe18] sm:$0xff]
        %v690 = vld [vmem:[%s203 + $0xe20] sm:$0xff]
        %v691 = vld [vmem:[%s203 + $0xe28] sm:$0xff]
        %v692 = vld [vmem:[%s203 + $0xe30] sm:$0xff]
        %v693 = vld [vmem:[%s203 + $0xe38] sm:$0xff]
        %v694 = vld [vmem:[%s203 + $0xe40] sm:$0xff]
        %v695 = vld [vmem:[%s203 + $0xe48] sm:$0xff]
        %v696 = vld [vmem:[%s203 + $0xe50] sm:$0xff]
        %v697 = vld [vmem:[%s203 + $0xe58] sm:$0xff]
        %v698 = vld [vmem:[%s203 + $0xe60] sm:$0xff]
        %v699 = vld [vmem:[%s203 + $0xe68] sm:$0xff]
        %v700 = vld [vmem:[%s203 + $0xe70] sm:$0xff]
        %v701 = vld [vmem:[%s203 + $0xe78] sm:$0xff]
        %v702 = vld [vmem:[%s203 + $0xe80] sm:$0xff]
        %v703 = vld [vmem:[%s203 + $0xe88] sm:$0xff]
        %v704 = vld [vmem:[%s203 + $0xe90] sm:$0xff]
        %v705 = vld [vmem:[%s203 + $0xe98] sm:$0xff]
        %v706 = vld [vmem:[%s203 + $0xea0] sm:$0xff]
        %v707 = vld [vmem:[%s203 + $0xea8] sm:$0xff]
        %v708 = vld [vmem:[%s203 + $0xeb0] sm:$0xff]
        %v709 = vld [vmem:[%s203 + $0xeb8] sm:$0xff]
        %v710 = vld [vmem:[%s203 + $0xec0] sm:$0xff]
        %v711 = vld [vmem:[%s203 + $0xec8] sm:$0xff]
        %v712 = vld [vmem:[%s203 + $0xed0] sm:$0xff]
        %v713 = vld [vmem:[%s203 + $0xed8] sm:$0xff]
        %v714 = vld [vmem:[%s203 + $0xee0] sm:$0xff]
        %v715 = vld [vmem:[%s203 + $0xee8] sm:$0xff]
        %v716 = vld [vmem:[%s203 + $0xef0] sm:$0xff]
        %v717 = vld [vmem:[%s203 + $0xef8] sm:$0xff]
        %v718 = vld [vmem:[%s203 + $0xf00] sm:$0xff]
        %v719 = vld [vmem:[%s203 + $0xf08] sm:$0xff]
        %v720 = vld [vmem:[%s203 + $0xf10] sm:$0xff]
        %v721 = vld [vmem:[%s203 + $0xf18] sm:$0xff]
        %v722 = vld [vmem:[%s203 + $0xf20] sm:$0xff]
        %v723 = vld [vmem:[%s203 + $0xf28] sm:$0xff]
        %v724 = vld [vmem:[%s203 + $0xf30] sm:$0xff]
        %v725 = vld [vmem:[%s203 + $0xf38] sm:$0xff]
        %v726 = vld [vmem:[%s203 + $0xf40] sm:$0xff]
        %v727 = vld [vmem:[%s203 + $0xf48] sm:$0xff]
        %v728 = vld [vmem:[%s203 + $0xf50] sm:$0xff]
        %v729 = vld [vmem:[%s203 + $0xf58] sm:$0xff]
        %v730 = vld [vmem:[%s203 + $0xf60] sm:$0xff]
        %v731 = vld [vmem:[%s203 + $0xf68] sm:$0xff]
        %v732 = vld [vmem:[%s203 + $0xf70] sm:$0xff]
        %v733 = vld [vmem:[%s203 + $0xf78] sm:$0xff]
        %v734 = vld [vmem:[%s203 + $0xf80] sm:$0xff]
        %v735 = vld [vmem:[%s203 + $0xf88] sm:$0xff]
        %v736 = vld [vmem:[%s203 + $0xf90] sm:$0xff]
        %v737 = vld [vmem:[%s203 + $0xf98] sm:$0xff]
        %v738 = vld [vmem:[%s203 + $0xfa0] sm:$0xff]
        %v739 = vld [vmem:[%s203 + $0xfa8] sm:$0xff]
        %v740 = vld [vmem:[%s203 + $0xfb0] sm:$0xff]
        %v741 = vld [vmem:[%s203 + $0xfb8] sm:$0xff]
        %v742 = vld [vmem:[%s203 + $0xfc0] sm:$0xff]
        %v743 = vld [vmem:[%s203 + $0xfc8] sm:$0xff]
        %v744 = vld [vmem:[%s203 + $0xfd0] sm:$0xff]
        %v745 = vld [vmem:[%s203 + $0xfd8] sm:$0xff]
        %v746 = vld [vmem:[%s203 + $0xfe0] sm:$0xff]
        %v747 = vld [vmem:[%s203 + $0xfe8] sm:$0xff]
        %v748 = vld [vmem:[%s203 + $0xff0] sm:$0xff]
        %v749 = vld [vmem:[%s203 + $0xff8] sm:$0xff]
        %v750 = vpack.c.bf16 %v240, %v238
        %v751 = vpack.c.bf16 %v241, %v239
        %v752 = vpack.c.bf16 %v244, %v242
        %v753 = vpack.c.bf16 %v245, %v243
        %v754 = vpack.c.bf16 %v248, %v246
        %v755 = vpack.c.bf16 %v249, %v247
        %v756 = vpack.c.bf16 %v252, %v250
        %v757 = vpack.c.bf16 %v253, %v251
        %v758 = vpack.c.bf16 %v256, %v254
        %v759 = vpack.c.bf16 %v257, %v255
        %v760 = vpack.c.bf16 %v260, %v258
        %v761 = vpack.c.bf16 %v261, %v259
        %v762 = vpack.c.bf16 %v264, %v262
        %v763 = vpack.c.bf16 %v265, %v263
        %v764 = vpack.c.bf16 %v268, %v266
        %v765 = vpack.c.bf16 %v269, %v267
        %v766 = vpack.c.bf16 %v272, %v270
        %v767 = vpack.c.bf16 %v273, %v271
        %v768 = vpack.c.bf16 %v276, %v274
        %v769 = vpack.c.bf16 %v277, %v275
        %v770 = vpack.c.bf16 %v280, %v278
        %v771 = vpack.c.bf16 %v281, %v279
        %v772 = vpack.c.bf16 %v284, %v282
        %v773 = vpack.c.bf16 %v285, %v283
        %v774 = vpack.c.bf16 %v288, %v286
        %v775 = vpack.c.bf16 %v289, %v287
        %v776 = vpack.c.bf16 %v292, %v290
        %v777 = vpack.c.bf16 %v293, %v291
        %v778 = vpack.c.bf16 %v296, %v294
        %v779 = vpack.c.bf16 %v297, %v295
        %v780 = vpack.c.bf16 %v300, %v298
        %v781 = vpack.c.bf16 %v301, %v299
        %v782 = vpack.c.bf16 %v304, %v302
        %v783 = vpack.c.bf16 %v305, %v303
        %v784 = vpack.c.bf16 %v308, %v306
        %v785 = vpack.c.bf16 %v309, %v307
        %v786 = vpack.c.bf16 %v312, %v310
        %v787 = vpack.c.bf16 %v313, %v311
        %v788 = vpack.c.bf16 %v316, %v314
        %v789 = vpack.c.bf16 %v317, %v315
        %v790 = vpack.c.bf16 %v320, %v318
        %v791 = vpack.c.bf16 %v321, %v319
        %v792 = vpack.c.bf16 %v324, %v322
        %v793 = vpack.c.bf16 %v325, %v323
        %v794 = vpack.c.bf16 %v328, %v326
        %v795 = vpack.c.bf16 %v329, %v327
        %v796 = vpack.c.bf16 %v332, %v330
        %v797 = vpack.c.bf16 %v333, %v331
        %v798 = vpack.c.bf16 %v336, %v334
        %v799 = vpack.c.bf16 %v337, %v335
        %v800 = vpack.c.bf16 %v340, %v338
        %v801 = vpack.c.bf16 %v341, %v339
        %v802 = vpack.c.bf16 %v344, %v342
        %v803 = vpack.c.bf16 %v345, %v343
        %v804 = vpack.c.bf16 %v348, %v346
        %v805 = vpack.c.bf16 %v349, %v347
        %v806 = vpack.c.bf16 %v352, %v350
        %v807 = vpack.c.bf16 %v353, %v351
        %v808 = vpack.c.bf16 %v356, %v354
        %v809 = vpack.c.bf16 %v357, %v355
        %v810 = vpack.c.bf16 %v360, %v358
        %v811 = vpack.c.bf16 %v361, %v359
        %v812 = vpack.c.bf16 %v364, %v362
        %v813 = vpack.c.bf16 %v365, %v363
        %v814 = vpack.c.bf16 %v368, %v366
        %v815 = vpack.c.bf16 %v369, %v367
        %v816 = vpack.c.bf16 %v372, %v370
        %v817 = vpack.c.bf16 %v373, %v371
        %v818 = vpack.c.bf16 %v376, %v374
        %v819 = vpack.c.bf16 %v377, %v375
        %v820 = vpack.c.bf16 %v380, %v378
        %v821 = vpack.c.bf16 %v381, %v379
        %v822 = vpack.c.bf16 %v384, %v382
        %v823 = vpack.c.bf16 %v385, %v383
        %v824 = vpack.c.bf16 %v388, %v386
        %v825 = vpack.c.bf16 %v389, %v387
        %v826 = vpack.c.bf16 %v392, %v390
        %v827 = vpack.c.bf16 %v393, %v391
        %v828 = vpack.c.bf16 %v396, %v394
        %v829 = vpack.c.bf16 %v397, %v395
        %v830 = vpack.c.bf16 %v400, %v398
        %v831 = vpack.c.bf16 %v401, %v399
        %v832 = vpack.c.bf16 %v404, %v402
        %v833 = vpack.c.bf16 %v405, %v403
        %v834 = vpack.c.bf16 %v408, %v406
        %v835 = vpack.c.bf16 %v409, %v407
        %v836 = vpack.c.bf16 %v412, %v410
        %v837 = vpack.c.bf16 %v413, %v411
        %v838 = vpack.c.bf16 %v416, %v414
        %v839 = vpack.c.bf16 %v417, %v415
        %v840 = vpack.c.bf16 %v420, %v418
        %v841 = vpack.c.bf16 %v421, %v419
        %v842 = vpack.c.bf16 %v424, %v422
        %v843 = vpack.c.bf16 %v425, %v423
        %v844 = vpack.c.bf16 %v428, %v426
        %v845 = vpack.c.bf16 %v429, %v427
        %v846 = vpack.c.bf16 %v432, %v430
        %v847 = vpack.c.bf16 %v433, %v431
        %v848 = vpack.c.bf16 %v436, %v434
        %v849 = vpack.c.bf16 %v437, %v435
        %v850 = vpack.c.bf16 %v440, %v438
        %v851 = vpack.c.bf16 %v441, %v439
        %v852 = vpack.c.bf16 %v444, %v442
        %v853 = vpack.c.bf16 %v445, %v443
        %v854 = vpack.c.bf16 %v448, %v446
        %v855 = vpack.c.bf16 %v449, %v447
        %v856 = vpack.c.bf16 %v452, %v450
        %v857 = vpack.c.bf16 %v453, %v451
        %v858 = vpack.c.bf16 %v456, %v454
        %v859 = vpack.c.bf16 %v457, %v455
        %v860 = vpack.c.bf16 %v460, %v458
        %v861 = vpack.c.bf16 %v461, %v459
        %v862 = vpack.c.bf16 %v464, %v462
        %v863 = vpack.c.bf16 %v465, %v463
        %v864 = vpack.c.bf16 %v468, %v466
        %v865 = vpack.c.bf16 %v469, %v467
        %v866 = vpack.c.bf16 %v472, %v470
        %v867 = vpack.c.bf16 %v473, %v471
        %v868 = vpack.c.bf16 %v476, %v474
        %v869 = vpack.c.bf16 %v477, %v475
        %v870 = vpack.c.bf16 %v480, %v478
        %v871 = vpack.c.bf16 %v481, %v479
        %v872 = vpack.c.bf16 %v484, %v482
        %v873 = vpack.c.bf16 %v485, %v483
        %v874 = vpack.c.bf16 %v488, %v486
        %v875 = vpack.c.bf16 %v489, %v487
        %v876 = vpack.c.bf16 %v492, %v490
        %v877 = vpack.c.bf16 %v493, %v491
        %v878 = vpack.c.bf16 %v496, %v494
        %v879 = vpack.c.bf16 %v497, %v495
        %v880 = vpack.c.bf16 %v500, %v498
        %v881 = vpack.c.bf16 %v501, %v499
        %v882 = vpack.c.bf16 %v504, %v502
        %v883 = vpack.c.bf16 %v505, %v503
        %v884 = vpack.c.bf16 %v508, %v506
        %v885 = vpack.c.bf16 %v509, %v507
        %v886 = vpack.c.bf16 %v512, %v510
        %v887 = vpack.c.bf16 %v513, %v511
        %v888 = vpack.c.bf16 %v516, %v514
        %v889 = vpack.c.bf16 %v517, %v515
        %v890 = vpack.c.bf16 %v520, %v518
        %v891 = vpack.c.bf16 %v521, %v519
        %v892 = vpack.c.bf16 %v524, %v522
        %v893 = vpack.c.bf16 %v525, %v523
        %v894 = vpack.c.bf16 %v528, %v526
        %v895 = vpack.c.bf16 %v529, %v527
        %v896 = vpack.c.bf16 %v532, %v530
        %v897 = vpack.c.bf16 %v533, %v531
        %v898 = vpack.c.bf16 %v536, %v534
        %v899 = vpack.c.bf16 %v537, %v535
        %v900 = vpack.c.bf16 %v540, %v538
        %v901 = vpack.c.bf16 %v541, %v539
        %v902 = vpack.c.bf16 %v544, %v542
        %v903 = vpack.c.bf16 %v545, %v543
        %v904 = vpack.c.bf16 %v548, %v546
        %v905 = vpack.c.bf16 %v549, %v547
        %v906 = vpack.c.bf16 %v552, %v550
        %v907 = vpack.c.bf16 %v553, %v551
        %v908 = vpack.c.bf16 %v556, %v554
        %v909 = vpack.c.bf16 %v557, %v555
        %v910 = vpack.c.bf16 %v560, %v558
        %v911 = vpack.c.bf16 %v561, %v559
        %v912 = vpack.c.bf16 %v564, %v562
        %v913 = vpack.c.bf16 %v565, %v563
        %v914 = vpack.c.bf16 %v568, %v566
        %v915 = vpack.c.bf16 %v569, %v567
        %v916 = vpack.c.bf16 %v572, %v570
        %v917 = vpack.c.bf16 %v573, %v571
        %v918 = vpack.c.bf16 %v576, %v574
        %v919 = vpack.c.bf16 %v577, %v575
        %v920 = vpack.c.bf16 %v580, %v578
        %v921 = vpack.c.bf16 %v581, %v579
        %v922 = vpack.c.bf16 %v584, %v582
        %v923 = vpack.c.bf16 %v585, %v583
        %v924 = vpack.c.bf16 %v588, %v586
        %v925 = vpack.c.bf16 %v589, %v587
        %v926 = vpack.c.bf16 %v592, %v590
        %v927 = vpack.c.bf16 %v593, %v591
        %v928 = vpack.c.bf16 %v596, %v594
        %v929 = vpack.c.bf16 %v597, %v595
        %v930 = vpack.c.bf16 %v600, %v598
        %v931 = vpack.c.bf16 %v601, %v599
        %v932 = vpack.c.bf16 %v604, %v602
        %v933 = vpack.c.bf16 %v605, %v603
        %v934 = vpack.c.bf16 %v608, %v606
        %v935 = vpack.c.bf16 %v609, %v607
        %v936 = vpack.c.bf16 %v612, %v610
        %v937 = vpack.c.bf16 %v613, %v611
        %v938 = vpack.c.bf16 %v616, %v614
        %v939 = vpack.c.bf16 %v617, %v615
        %v940 = vpack.c.bf16 %v620, %v618
        %v941 = vpack.c.bf16 %v621, %v619
        %v942 = vpack.c.bf16 %v624, %v622
        %v943 = vpack.c.bf16 %v625, %v623
        %v944 = vpack.c.bf16 %v628, %v626
        %v945 = vpack.c.bf16 %v629, %v627
        %v946 = vpack.c.bf16 %v632, %v630
        %v947 = vpack.c.bf16 %v633, %v631
        %v948 = vpack.c.bf16 %v636, %v634
        %v949 = vpack.c.bf16 %v637, %v635
        %v950 = vpack.c.bf16 %v640, %v638
        %v951 = vpack.c.bf16 %v641, %v639
        %v952 = vpack.c.bf16 %v644, %v642
        %v953 = vpack.c.bf16 %v645, %v643
        %v954 = vpack.c.bf16 %v648, %v646
        %v955 = vpack.c.bf16 %v649, %v647
        %v956 = vpack.c.bf16 %v652, %v650
        %v957 = vpack.c.bf16 %v653, %v651
        %v958 = vpack.c.bf16 %v656, %v654
        %v959 = vpack.c.bf16 %v657, %v655
        %v960 = vpack.c.bf16 %v660, %v658
        %v961 = vpack.c.bf16 %v661, %v659
        %v962 = vpack.c.bf16 %v664, %v662
        %v963 = vpack.c.bf16 %v665, %v663
        %v964 = vpack.c.bf16 %v668, %v666
        %v965 = vpack.c.bf16 %v669, %v667
        %v966 = vpack.c.bf16 %v672, %v670
        %v967 = vpack.c.bf16 %v673, %v671
        %v968 = vpack.c.bf16 %v676, %v674
        %v969 = vpack.c.bf16 %v677, %v675
        %v970 = vpack.c.bf16 %v680, %v678
        %v971 = vpack.c.bf16 %v681, %v679
        %v972 = vpack.c.bf16 %v684, %v682
        %v973 = vpack.c.bf16 %v685, %v683
        %v974 = vpack.c.bf16 %v688, %v686
        %v975 = vpack.c.bf16 %v689, %v687
        %v976 = vpack.c.bf16 %v692, %v690
        %v977 = vpack.c.bf16 %v693, %v691
        %v978 = vpack.c.bf16 %v696, %v694
        %v979 = vpack.c.bf16 %v697, %v695
        %v980 = vpack.c.bf16 %v700, %v698
        %v981 = vpack.c.bf16 %v701, %v699
        %v982 = vpack.c.bf16 %v704, %v702
        %v983 = vpack.c.bf16 %v705, %v703
        %v984 = vpack.c.bf16 %v708, %v706
        %v985 = vpack.c.bf16 %v709, %v707
        %v986 = vpack.c.bf16 %v712, %v710
        %v987 = vpack.c.bf16 %v713, %v711
        %v988 = vpack.c.bf16 %v716, %v714
        %v989 = vpack.c.bf16 %v717, %v715
        %v990 = vpack.c.bf16 %v720, %v718
        %v991 = vpack.c.bf16 %v721, %v719
        %v992 = vpack.c.bf16 %v724, %v722
        %v993 = vpack.c.bf16 %v725, %v723
        %v994 = vpack.c.bf16 %v728, %v726
        %v995 = vpack.c.bf16 %v729, %v727
        %v996 = vpack.c.bf16 %v732, %v730
        %v997 = vpack.c.bf16 %v733, %v731
        %v998 = vpack.c.bf16 %v736, %v734
        %v999 = vpack.c.bf16 %v737, %v735
        %v1000 = vpack.c.bf16 %v740, %v738
        %v1001 = vpack.c.bf16 %v741, %v739
        %v1002 = vpack.c.bf16 %v744, %v742
        %v1003 = vpack.c.bf16 %v745, %v743
        %v1004 = vpack.c.bf16 %v748, %v746
        %v1005 = vpack.c.bf16 %v749, %v747
        %v1006 = vld [vmem:[#allocation5] sm:$0xf]
        %v1007 = vld [vmem:[#allocation5 + $0x4] sm:$0xf]
        %v1008 = vld [vmem:[#allocation5 + $0x8] sm:$0xf]
        %v1009 = vld [vmem:[#allocation5 + $0xc] sm:$0xf]
        %v1010 = vld [vmem:[#allocation5 + $0x10] sm:$0xf]
        %v1011 = vld [vmem:[#allocation5 + $0x14] sm:$0xf]
        %v1012 = vld [vmem:[#allocation5 + $0x18] sm:$0xf]
        %v1013 = vld [vmem:[#allocation5 + $0x1c] sm:$0xf]
        %v1014 = vld [vmem:[#allocation5 + $0x20] sm:$0xf]
        %v1015 = vld [vmem:[#allocation5 + $0x24] sm:$0xf]
        %v1016 = vld [vmem:[#allocation5 + $0x28] sm:$0xf]
        %v1017 = vld [vmem:[#allocation5 + $0x2c] sm:$0xf]
        %v1018 = vld [vmem:[#allocation5 + $0x30] sm:$0xf]
        %v1019 = vld [vmem:[#allocation5 + $0x34] sm:$0xf]
        %v1020 = vld [vmem:[#allocation5 + $0x38] sm:$0xf]
        %v1021 = vld [vmem:[#allocation5 + $0x3c] sm:$0xf]
        %v1022 = vld [vmem:[#allocation5 + $0x40] sm:$0xf]
        %v1023 = vld [vmem:[#allocation5 + $0x44] sm:$0xf]
        %v1024 = vld [vmem:[#allocation5 + $0x48] sm:$0xf]
        %v1025 = vld [vmem:[#allocation5 + $0x4c] sm:$0xf]
        %v1026 = vld [vmem:[#allocation5 + $0x50] sm:$0xf]
        %v1027 = vld [vmem:[#allocation5 + $0x54] sm:$0xf]
        %v1028 = vld [vmem:[#allocation5 + $0x58] sm:$0xf]
        %v1029 = vld [vmem:[#allocation5 + $0x5c] sm:$0xf]
        %v1030 = vld [vmem:[#allocation5 + $0x60] sm:$0xf]
        %v1031 = vld [vmem:[#allocation5 + $0x64] sm:$0xf]
        %v1032 = vld [vmem:[#allocation5 + $0x68] sm:$0xf]
        %v1033 = vld [vmem:[#allocation5 + $0x6c] sm:$0xf]
        %v1034 = vld [vmem:[#allocation5 + $0x70] sm:$0xf]
        %v1035 = vld [vmem:[#allocation5 + $0x74] sm:$0xf]
        %v1036 = vld [vmem:[#allocation5 + $0x78] sm:$0xf]
        %v1037 = vld [vmem:[#allocation5 + $0x7c] sm:$0xf]
        %v1038 = vld [vmem:[#allocation5 + $0x80] sm:$0xf]
        %v1039 = vld [vmem:[#allocation5 + $0x84] sm:$0xf]
        %v1040 = vld [vmem:[#allocation5 + $0x88] sm:$0xf]
        %v1041 = vld [vmem:[#allocation5 + $0x8c] sm:$0xf]
        %v1042 = vld [vmem:[#allocation5 + $0x90] sm:$0xf]
        %v1043 = vld [vmem:[#allocation5 + $0x94] sm:$0xf]
        %v1044 = vld [vmem:[#allocation5 + $0x98] sm:$0xf]
        %v1045 = vld [vmem:[#allocation5 + $0x9c] sm:$0xf]
        %v1046 = vld [vmem:[#allocation5 + $0xa0] sm:$0xf]
        %v1047 = vld [vmem:[#allocation5 + $0xa4] sm:$0xf]
        %v1048 = vld [vmem:[#allocation5 + $0xa8] sm:$0xf]
        %v1049 = vld [vmem:[#allocation5 + $0xac] sm:$0xf]
        %v1050 = vld [vmem:[#allocation5 + $0xb0] sm:$0xf]
        %v1051 = vld [vmem:[#allocation5 + $0xb4] sm:$0xf]
        %v1052 = vld [vmem:[#allocation5 + $0xb8] sm:$0xf]
        %v1053 = vld [vmem:[#allocation5 + $0xbc] sm:$0xf]
        %v1054 = vld [vmem:[#allocation5 + $0xc0] sm:$0xf]
        %v1055 = vld [vmem:[#allocation5 + $0xc4] sm:$0xf]
        %v1056 = vld [vmem:[#allocation5 + $0xc8] sm:$0xf]
        %v1057 = vld [vmem:[#allocation5 + $0xcc] sm:$0xf]
        %v1058 = vld [vmem:[#allocation5 + $0xd0] sm:$0xf]
        %v1059 = vld [vmem:[#allocation5 + $0xd4] sm:$0xf]
        %v1060 = vld [vmem:[#allocation5 + $0xd8] sm:$0xf]
        %v1061 = vld [vmem:[#allocation5 + $0xdc] sm:$0xf]
        %v1062 = vld [vmem:[#allocation5 + $0xe0] sm:$0xf]
        %v1063 = vld [vmem:[#allocation5 + $0xe4] sm:$0xf]
        %v1064 = vld [vmem:[#allocation5 + $0xe8] sm:$0xf]
        %v1065 = vld [vmem:[#allocation5 + $0xec] sm:$0xf]
        %v1066 = vld [vmem:[#allocation5 + $0xf0] sm:$0xf]
        %v1067 = vld [vmem:[#allocation5 + $0xf4] sm:$0xf]
        %v1068 = vld [vmem:[#allocation5 + $0xf8] sm:$0xf]
        %v1069 = vld [vmem:[#allocation5 + $0xfc] sm:$0xf]
        %v1070 = vld [vmem:[#allocation5 + $0x100] sm:$0xf]
        %v1071 = vld [vmem:[#allocation5 + $0x104] sm:$0xf]
        %v1072 = vld [vmem:[#allocation5 + $0x108] sm:$0xf]
        %v1073 = vld [vmem:[#allocation5 + $0x10c] sm:$0xf]
        %v1074 = vld [vmem:[#allocation5 + $0x110] sm:$0xf]
        %v1075 = vld [vmem:[#allocation5 + $0x114] sm:$0xf]
        %v1076 = vld [vmem:[#allocation5 + $0x118] sm:$0xf]
        %v1077 = vld [vmem:[#allocation5 + $0x11c] sm:$0xf]
        %v1078 = vld [vmem:[#allocation5 + $0x120] sm:$0xf]
        %v1079 = vld [vmem:[#allocation5 + $0x124] sm:$0xf]
        %v1080 = vld [vmem:[#allocation5 + $0x128] sm:$0xf]
        %v1081 = vld [vmem:[#allocation5 + $0x12c] sm:$0xf]
        %v1082 = vld [vmem:[#allocation5 + $0x130] sm:$0xf]
        %v1083 = vld [vmem:[#allocation5 + $0x134] sm:$0xf]
        %v1084 = vld [vmem:[#allocation5 + $0x138] sm:$0xf]
        %v1085 = vld [vmem:[#allocation5 + $0x13c] sm:$0xf]
        %v1086 = vld [vmem:[#allocation5 + $0x140] sm:$0xf]
        %v1087 = vld [vmem:[#allocation5 + $0x144] sm:$0xf]
        %v1088 = vld [vmem:[#allocation5 + $0x148] sm:$0xf]
        %v1089 = vld [vmem:[#allocation5 + $0x14c] sm:$0xf]
        %v1090 = vld [vmem:[#allocation5 + $0x150] sm:$0xf]
        %v1091 = vld [vmem:[#allocation5 + $0x154] sm:$0xf]
        %v1092 = vld [vmem:[#allocation5 + $0x158] sm:$0xf]
        %v1093 = vld [vmem:[#allocation5 + $0x15c] sm:$0xf]
        %v1094 = vld [vmem:[#allocation5 + $0x160] sm:$0xf]
        %v1095 = vld [vmem:[#allocation5 + $0x164] sm:$0xf]
        %v1096 = vld [vmem:[#allocation5 + $0x168] sm:$0xf]
        %v1097 = vld [vmem:[#allocation5 + $0x16c] sm:$0xf]
        %v1098 = vld [vmem:[#allocation5 + $0x170] sm:$0xf]
        %v1099 = vld [vmem:[#allocation5 + $0x174] sm:$0xf]
        %v1100 = vld [vmem:[#allocation5 + $0x178] sm:$0xf]
        %v1101 = vld [vmem:[#allocation5 + $0x17c] sm:$0xf]
        %v1102 = vld [vmem:[#allocation5 + $0x180] sm:$0xf]
        %v1103 = vld [vmem:[#allocation5 + $0x184] sm:$0xf]
        %v1104 = vld [vmem:[#allocation5 + $0x188] sm:$0xf]
        %v1105 = vld [vmem:[#allocation5 + $0x18c] sm:$0xf]
        %v1106 = vld [vmem:[#allocation5 + $0x190] sm:$0xf]
        %v1107 = vld [vmem:[#allocation5 + $0x194] sm:$0xf]
        %v1108 = vld [vmem:[#allocation5 + $0x198] sm:$0xf]
        %v1109 = vld [vmem:[#allocation5 + $0x19c] sm:$0xf]
        %v1110 = vld [vmem:[#allocation5 + $0x1a0] sm:$0xf]
        %v1111 = vld [vmem:[#allocation5 + $0x1a4] sm:$0xf]
        %v1112 = vld [vmem:[#allocation5 + $0x1a8] sm:$0xf]
        %v1113 = vld [vmem:[#allocation5 + $0x1ac] sm:$0xf]
        %v1114 = vld [vmem:[#allocation5 + $0x1b0] sm:$0xf]
        %v1115 = vld [vmem:[#allocation5 + $0x1b4] sm:$0xf]
        %v1116 = vld [vmem:[#allocation5 + $0x1b8] sm:$0xf]
        %v1117 = vld [vmem:[#allocation5 + $0x1bc] sm:$0xf]
        %v1118 = vld [vmem:[#allocation5 + $0x1c0] sm:$0xf]
        %v1119 = vld [vmem:[#allocation5 + $0x1c4] sm:$0xf]
        %v1120 = vld [vmem:[#allocation5 + $0x1c8] sm:$0xf]
        %v1121 = vld [vmem:[#allocation5 + $0x1cc] sm:$0xf]
        %v1122 = vld [vmem:[#allocation5 + $0x1d0] sm:$0xf]
        %v1123 = vld [vmem:[#allocation5 + $0x1d4] sm:$0xf]
        %v1124 = vld [vmem:[#allocation5 + $0x1d8] sm:$0xf]
        %v1125 = vld [vmem:[#allocation5 + $0x1dc] sm:$0xf]
        %v1126 = vld [vmem:[#allocation5 + $0x1e0] sm:$0xf]
        %v1127 = vld [vmem:[#allocation5 + $0x1e4] sm:$0xf]
        %v1128 = vld [vmem:[#allocation5 + $0x1e8] sm:$0xf]
        %v1129 = vld [vmem:[#allocation5 + $0x1ec] sm:$0xf]
        %v1130 = vld [vmem:[#allocation5 + $0x1f0] sm:$0xf]
        %v1131 = vld [vmem:[#allocation5 + $0x1f4] sm:$0xf]
        %v1132 = vld [vmem:[#allocation5 + $0x1f8] sm:$0xf]
        %v1133 = vld [vmem:[#allocation5 + $0x1fc] sm:$0xf]
        %v1134 = vld [vmem:[#allocation5 + $0x200] sm:$0xf]
        %v1135 = vld [vmem:[#allocation5 + $0x204] sm:$0xf]
        %v1136 = vld [vmem:[#allocation5 + $0x208] sm:$0xf]
        %v1137 = vld [vmem:[#allocation5 + $0x20c] sm:$0xf]
        %v1138 = vld [vmem:[#allocation5 + $0x210] sm:$0xf]
        %v1139 = vld [vmem:[#allocation5 + $0x214] sm:$0xf]
        %v1140 = vld [vmem:[#allocation5 + $0x218] sm:$0xf]
        %v1141 = vld [vmem:[#allocation5 + $0x21c] sm:$0xf]
        %v1142 = vld [vmem:[#allocation5 + $0x220] sm:$0xf]
        %v1143 = vld [vmem:[#allocation5 + $0x224] sm:$0xf]
        %v1144 = vld [vmem:[#allocation5 + $0x228] sm:$0xf]
        %v1145 = vld [vmem:[#allocation5 + $0x22c] sm:$0xf]
        %v1146 = vld [vmem:[#allocation5 + $0x230] sm:$0xf]
        %v1147 = vld [vmem:[#allocation5 + $0x234] sm:$0xf]
        %v1148 = vld [vmem:[#allocation5 + $0x238] sm:$0xf]
        %v1149 = vld [vmem:[#allocation5 + $0x23c] sm:$0xf]
        %v1150 = vld [vmem:[#allocation5 + $0x240] sm:$0xf]
        %v1151 = vld [vmem:[#allocation5 + $0x244] sm:$0xf]
        %v1152 = vld [vmem:[#allocation5 + $0x248] sm:$0xf]
        %v1153 = vld [vmem:[#allocation5 + $0x24c] sm:$0xf]
        %v1154 = vld [vmem:[#allocation5 + $0x250] sm:$0xf]
        %v1155 = vld [vmem:[#allocation5 + $0x254] sm:$0xf]
        %v1156 = vld [vmem:[#allocation5 + $0x258] sm:$0xf]
        %v1157 = vld [vmem:[#allocation5 + $0x25c] sm:$0xf]
        %v1158 = vld [vmem:[#allocation5 + $0x260] sm:$0xf]
        %v1159 = vld [vmem:[#allocation5 + $0x264] sm:$0xf]
        %v1160 = vld [vmem:[#allocation5 + $0x268] sm:$0xf]
        %v1161 = vld [vmem:[#allocation5 + $0x26c] sm:$0xf]
        %v1162 = vld [vmem:[#allocation5 + $0x270] sm:$0xf]
        %v1163 = vld [vmem:[#allocation5 + $0x274] sm:$0xf]
        %v1164 = vld [vmem:[#allocation5 + $0x278] sm:$0xf]
        %v1165 = vld [vmem:[#allocation5 + $0x27c] sm:$0xf]
        %v1166 = vld [vmem:[#allocation5 + $0x280] sm:$0xf]
        %v1167 = vld [vmem:[#allocation5 + $0x284] sm:$0xf]
        %v1168 = vld [vmem:[#allocation5 + $0x288] sm:$0xf]
        %v1169 = vld [vmem:[#allocation5 + $0x28c] sm:$0xf]
        %v1170 = vld [vmem:[#allocation5 + $0x290] sm:$0xf]
        %v1171 = vld [vmem:[#allocation5 + $0x294] sm:$0xf]
        %v1172 = vld [vmem:[#allocation5 + $0x298] sm:$0xf]
        %v1173 = vld [vmem:[#allocation5 + $0x29c] sm:$0xf]
        %v1174 = vld [vmem:[#allocation5 + $0x2a0] sm:$0xf]
        %v1175 = vld [vmem:[#allocation5 + $0x2a4] sm:$0xf]
        %v1176 = vld [vmem:[#allocation5 + $0x2a8] sm:$0xf]
        %v1177 = vld [vmem:[#allocation5 + $0x2ac] sm:$0xf]
        %v1178 = vld [vmem:[#allocation5 + $0x2b0] sm:$0xf]
        %v1179 = vld [vmem:[#allocation5 + $0x2b4] sm:$0xf]
        %v1180 = vld [vmem:[#allocation5 + $0x2b8] sm:$0xf]
        %v1181 = vld [vmem:[#allocation5 + $0x2bc] sm:$0xf]
        %v1182 = vld [vmem:[#allocation5 + $0x2c0] sm:$0xf]
        %v1183 = vld [vmem:[#allocation5 + $0x2c4] sm:$0xf]
        %v1184 = vld [vmem:[#allocation5 + $0x2c8] sm:$0xf]
        %v1185 = vld [vmem:[#allocation5 + $0x2cc] sm:$0xf]
        %v1186 = vld [vmem:[#allocation5 + $0x2d0] sm:$0xf]
        %v1187 = vld [vmem:[#allocation5 + $0x2d4] sm:$0xf]
        %v1188 = vld [vmem:[#allocation5 + $0x2d8] sm:$0xf]
        %v1189 = vld [vmem:[#allocation5 + $0x2dc] sm:$0xf]
        %v1190 = vld [vmem:[#allocation5 + $0x2e0] sm:$0xf]
        %v1191 = vld [vmem:[#allocation5 + $0x2e4] sm:$0xf]
        %v1192 = vld [vmem:[#allocation5 + $0x2e8] sm:$0xf]
        %v1193 = vld [vmem:[#allocation5 + $0x2ec] sm:$0xf]
        %v1194 = vld [vmem:[#allocation5 + $0x2f0] sm:$0xf]
        %v1195 = vld [vmem:[#allocation5 + $0x2f4] sm:$0xf]
        %v1196 = vld [vmem:[#allocation5 + $0x2f8] sm:$0xf]
        %v1197 = vld [vmem:[#allocation5 + $0x2fc] sm:$0xf]
        %v1198 = vld [vmem:[#allocation5 + $0x300] sm:$0xf]
        %v1199 = vld [vmem:[#allocation5 + $0x304] sm:$0xf]
        %v1200 = vld [vmem:[#allocation5 + $0x308] sm:$0xf]
        %v1201 = vld [vmem:[#allocation5 + $0x30c] sm:$0xf]
        %v1202 = vld [vmem:[#allocation5 + $0x310] sm:$0xf]
        %v1203 = vld [vmem:[#allocation5 + $0x314] sm:$0xf]
        %v1204 = vld [vmem:[#allocation5 + $0x318] sm:$0xf]
        %v1205 = vld [vmem:[#allocation5 + $0x31c] sm:$0xf]
        %v1206 = vld [vmem:[#allocation5 + $0x320] sm:$0xf]
        %v1207 = vld [vmem:[#allocation5 + $0x324] sm:$0xf]
        %v1208 = vld [vmem:[#allocation5 + $0x328] sm:$0xf]
        %v1209 = vld [vmem:[#allocation5 + $0x32c] sm:$0xf]
        %v1210 = vld [vmem:[#allocation5 + $0x330] sm:$0xf]
        %v1211 = vld [vmem:[#allocation5 + $0x334] sm:$0xf]
        %v1212 = vld [vmem:[#allocation5 + $0x338] sm:$0xf]
        %v1213 = vld [vmem:[#allocation5 + $0x33c] sm:$0xf]
        %v1214 = vld [vmem:[#allocation5 + $0x340] sm:$0xf]
        %v1215 = vld [vmem:[#allocation5 + $0x344] sm:$0xf]
        %v1216 = vld [vmem:[#allocation5 + $0x348] sm:$0xf]
        %v1217 = vld [vmem:[#allocation5 + $0x34c] sm:$0xf]
        %v1218 = vld [vmem:[#allocation5 + $0x350] sm:$0xf]
        %v1219 = vld [vmem:[#allocation5 + $0x354] sm:$0xf]
        %v1220 = vld [vmem:[#allocation5 + $0x358] sm:$0xf]
        %v1221 = vld [vmem:[#allocation5 + $0x35c] sm:$0xf]
        %v1222 = vld [vmem:[#allocation5 + $0x360] sm:$0xf]
        %v1223 = vld [vmem:[#allocation5 + $0x364] sm:$0xf]
        %v1224 = vld [vmem:[#allocation5 + $0x368] sm:$0xf]
        %v1225 = vld [vmem:[#allocation5 + $0x36c] sm:$0xf]
        %v1226 = vld [vmem:[#allocation5 + $0x370] sm:$0xf]
        %v1227 = vld [vmem:[#allocation5 + $0x374] sm:$0xf]
        %v1228 = vld [vmem:[#allocation5 + $0x378] sm:$0xf]
        %v1229 = vld [vmem:[#allocation5 + $0x37c] sm:$0xf]
        %v1230 = vld [vmem:[#allocation5 + $0x380] sm:$0xf]
        %v1231 = vld [vmem:[#allocation5 + $0x384] sm:$0xf]
        %v1232 = vld [vmem:[#allocation5 + $0x388] sm:$0xf]
        %v1233 = vld [vmem:[#allocation5 + $0x38c] sm:$0xf]
        %v1234 = vld [vmem:[#allocation5 + $0x390] sm:$0xf]
        %v1235 = vld [vmem:[#allocation5 + $0x394] sm:$0xf]
        %v1236 = vld [vmem:[#allocation5 + $0x398] sm:$0xf]
        %v1237 = vld [vmem:[#allocation5 + $0x39c] sm:$0xf]
        %v1238 = vld [vmem:[#allocation5 + $0x3a0] sm:$0xf]
        %v1239 = vld [vmem:[#allocation5 + $0x3a4] sm:$0xf]
        %v1240 = vld [vmem:[#allocation5 + $0x3a8] sm:$0xf]
        %v1241 = vld [vmem:[#allocation5 + $0x3ac] sm:$0xf]
        %v1242 = vld [vmem:[#allocation5 + $0x3b0] sm:$0xf]
        %v1243 = vld [vmem:[#allocation5 + $0x3b4] sm:$0xf]
        %v1244 = vld [vmem:[#allocation5 + $0x3b8] sm:$0xf]
        %v1245 = vld [vmem:[#allocation5 + $0x3bc] sm:$0xf]
        %v1246 = vld [vmem:[#allocation5 + $0x3c0] sm:$0xf]
        %v1247 = vld [vmem:[#allocation5 + $0x3c4] sm:$0xf]
        %v1248 = vld [vmem:[#allocation5 + $0x3c8] sm:$0xf]
        %v1249 = vld [vmem:[#allocation5 + $0x3cc] sm:$0xf]
        %v1250 = vld [vmem:[#allocation5 + $0x3d0] sm:$0xf]
        %v1251 = vld [vmem:[#allocation5 + $0x3d4] sm:$0xf]
        %v1252 = vld [vmem:[#allocation5 + $0x3d8] sm:$0xf]
        %v1253 = vld [vmem:[#allocation5 + $0x3dc] sm:$0xf]
        %v1254 = vld [vmem:[#allocation5 + $0x3e0] sm:$0xf]
        %v1255 = vld [vmem:[#allocation5 + $0x3e4] sm:$0xf]
        %v1256 = vld [vmem:[#allocation5 + $0x3e8] sm:$0xf]
        %v1257 = vld [vmem:[#allocation5 + $0x3ec] sm:$0xf]
        %v1258 = vld [vmem:[#allocation5 + $0x3f0] sm:$0xf]
        %v1259 = vld [vmem:[#allocation5 + $0x3f4] sm:$0xf]
        %v1260 = vld [vmem:[#allocation5 + $0x3f8] sm:$0xf]
        %v1261 = vld [vmem:[#allocation5 + $0x3fc] sm:$0xf]
        %1262 = vxpose.xlu0.c.b16.start [1/8] %v750, 128
        %1263 = vxpose.xlu0.c.b16.cont [2/8] %v752, 128
        %1264 = vxpose.xlu0.c.b16.cont [3/8] %v754, 128
        %1265 = vxpose.xlu0.c.b16.cont [4/8] %v756, 128
        %1266 = vxpose.xlu0.c.b16.cont [5/8] %v758, 128
        %1267 = vxpose.xlu0.c.b16.cont [6/8] %v760, 128
        %1268 = vxpose.xlu0.c.b16.cont [7/8] %v762, 128
        %1269 = vxpose.xlu0.c.b16.end [8/8] %v764, 128
        %v1270 = vpop.trf.xlu0
        %v1271 = vpop.trf.xlu0
        %v1272 = vpop.trf.xlu0
        %v1273 = vpop.trf.xlu0
        %v1274 = vpop.trf.xlu0
        %v1275 = vpop.trf.xlu0
        %v1276 = vpop.trf.xlu0
        %v1277 = vpop.trf.xlu0
        %1278 = vxpose.xlu0.c.b16.start [1/8] %v751, 128
        %1279 = vxpose.xlu0.c.b16.cont [2/8] %v753, 128
        %1280 = vxpose.xlu0.c.b16.cont [3/8] %v755, 128
        %1281 = vxpose.xlu0.c.b16.cont [4/8] %v757, 128
        %1282 = vxpose.xlu0.c.b16.cont [5/8] %v759, 128
        %1283 = vxpose.xlu0.c.b16.cont [6/8] %v761, 128
        %1284 = vxpose.xlu0.c.b16.cont [7/8] %v763, 128
        %1285 = vxpose.xlu0.c.b16.end [8/8] %v765, 128
        %v1286 = vpop.trf.xlu0
        %v1287 = vpop.trf.xlu0
        %v1288 = vpop.trf.xlu0
        %v1289 = vpop.trf.xlu0
        %v1290 = vpop.trf.xlu0
        %v1291 = vpop.trf.xlu0
        %v1292 = vpop.trf.xlu0
        %v1293 = vpop.trf.xlu0
        %1294 = vxpose.xlu0.c.b16.start [1/8] %v766, 128
        %1295 = vxpose.xlu0.c.b16.cont [2/8] %v768, 128
        %1296 = vxpose.xlu0.c.b16.cont [3/8] %v770, 128
        %1297 = vxpose.xlu0.c.b16.cont [4/8] %v772, 128
        %1298 = vxpose.xlu0.c.b16.cont [5/8] %v774, 128
        %1299 = vxpose.xlu0.c.b16.cont [6/8] %v776, 128
        %1300 = vxpose.xlu0.c.b16.cont [7/8] %v778, 128
        %1301 = vxpose.xlu0.c.b16.end [8/8] %v780, 128
        %v1302 = vpop.trf.xlu0
        %v1303 = vpop.trf.xlu0
        %v1304 = vpop.trf.xlu0
        %v1305 = vpop.trf.xlu0
        %v1306 = vpop.trf.xlu0
        %v1307 = vpop.trf.xlu0
        %v1308 = vpop.trf.xlu0
        %v1309 = vpop.trf.xlu0
        %1310 = vxpose.xlu0.c.b16.start [1/8] %v767, 128
        %1311 = vxpose.xlu0.c.b16.cont [2/8] %v769, 128
        %1312 = vxpose.xlu0.c.b16.cont [3/8] %v771, 128
        %1313 = vxpose.xlu0.c.b16.cont [4/8] %v773, 128
        %1314 = vxpose.xlu0.c.b16.cont [5/8] %v775, 128
        %1315 = vxpose.xlu0.c.b16.cont [6/8] %v777, 128
        %1316 = vxpose.xlu0.c.b16.cont [7/8] %v779, 128
        %1317 = vxpose.xlu0.c.b16.end [8/8] %v781, 128
        %v1318 = vpop.trf.xlu0
        %v1319 = vpop.trf.xlu0
        %v1320 = vpop.trf.xlu0
        %v1321 = vpop.trf.xlu0
        %v1322 = vpop.trf.xlu0
        %v1323 = vpop.trf.xlu0
        %v1324 = vpop.trf.xlu0
        %v1325 = vpop.trf.xlu0
        %1326 = vxpose.xlu0.c.b16.start [1/8] %v782, 128
        %1327 = vxpose.xlu0.c.b16.cont [2/8] %v784, 128
        %1328 = vxpose.xlu0.c.b16.cont [3/8] %v786, 128
        %1329 = vxpose.xlu0.c.b16.cont [4/8] %v788, 128
        %1330 = vxpose.xlu0.c.b16.cont [5/8] %v790, 128
        %1331 = vxpose.xlu0.c.b16.cont [6/8] %v792, 128
        %1332 = vxpose.xlu0.c.b16.cont [7/8] %v794, 128
        %1333 = vxpose.xlu0.c.b16.end [8/8] %v796, 128
        %v1334 = vpop.trf.xlu0
        %v1335 = vpop.trf.xlu0
        %v1336 = vpop.trf.xlu0
        %v1337 = vpop.trf.xlu0
        %v1338 = vpop.trf.xlu0
        %v1339 = vpop.trf.xlu0
        %v1340 = vpop.trf.xlu0
        %v1341 = vpop.trf.xlu0
        %1342 = vxpose.xlu0.c.b16.start [1/8] %v783, 128
        %1343 = vxpose.xlu0.c.b16.cont [2/8] %v785, 128
        %1344 = vxpose.xlu0.c.b16.cont [3/8] %v787, 128
        %1345 = vxpose.xlu0.c.b16.cont [4/8] %v789, 128
        %1346 = vxpose.xlu0.c.b16.cont [5/8] %v791, 128
        %1347 = vxpose.xlu0.c.b16.cont [6/8] %v793, 128
        %1348 = vxpose.xlu0.c.b16.cont [7/8] %v795, 128
        %1349 = vxpose.xlu0.c.b16.end [8/8] %v797, 128
        %v1350 = vpop.trf.xlu0
        %v1351 = vpop.trf.xlu0
        %v1352 = vpop.trf.xlu0
        %v1353 = vpop.trf.xlu0
        %v1354 = vpop.trf.xlu0
        %v1355 = vpop.trf.xlu0
        %v1356 = vpop.trf.xlu0
        %v1357 = vpop.trf.xlu0
        %1358 = vxpose.xlu0.c.b16.start [1/8] %v798, 128
        %1359 = vxpose.xlu0.c.b16.cont [2/8] %v800, 128
        %1360 = vxpose.xlu0.c.b16.cont [3/8] %v802, 128
        %1361 = vxpose.xlu0.c.b16.cont [4/8] %v804, 128
        %1362 = vxpose.xlu0.c.b16.cont [5/8] %v806, 128
        %1363 = vxpose.xlu0.c.b16.cont [6/8] %v808, 128
        %1364 = vxpose.xlu0.c.b16.cont [7/8] %v810, 128
        %1365 = vxpose.xlu0.c.b16.end [8/8] %v812, 128
        %v1366 = vpop.trf.xlu0
        %v1367 = vpop.trf.xlu0
        %v1368 = vpop.trf.xlu0
        %v1369 = vpop.trf.xlu0
        %v1370 = vpop.trf.xlu0
        %v1371 = vpop.trf.xlu0
        %v1372 = vpop.trf.xlu0
        %v1373 = vpop.trf.xlu0
        %1374 = vxpose.xlu0.c.b16.start [1/8] %v799, 128
        %1375 = vxpose.xlu0.c.b16.cont [2/8] %v801, 128
        %1376 = vxpose.xlu0.c.b16.cont [3/8] %v803, 128
        %1377 = vxpose.xlu0.c.b16.cont [4/8] %v805, 128
        %1378 = vxpose.xlu0.c.b16.cont [5/8] %v807, 128
        %1379 = vxpose.xlu0.c.b16.cont [6/8] %v809, 128
        %1380 = vxpose.xlu0.c.b16.cont [7/8] %v811, 128
        %1381 = vxpose.xlu0.c.b16.end [8/8] %v813, 128
        %v1382 = vpop.trf.xlu0
        %v1383 = vpop.trf.xlu0
        %v1384 = vpop.trf.xlu0
        %v1385 = vpop.trf.xlu0
        %v1386 = vpop.trf.xlu0
        %v1387 = vpop.trf.xlu0
        %v1388 = vpop.trf.xlu0
        %v1389 = vpop.trf.xlu0
        %1390 = vxpose.xlu0.c.b16.start [1/8] %v814, 128
        %1391 = vxpose.xlu0.c.b16.cont [2/8] %v816, 128
        %1392 = vxpose.xlu0.c.b16.cont [3/8] %v818, 128
        %1393 = vxpose.xlu0.c.b16.cont [4/8] %v820, 128
        %1394 = vxpose.xlu0.c.b16.cont [5/8] %v822, 128
        %1395 = vxpose.xlu0.c.b16.cont [6/8] %v824, 128
        %1396 = vxpose.xlu0.c.b16.cont [7/8] %v826, 128
        %1397 = vxpose.xlu0.c.b16.end [8/8] %v828, 128
        %v1398 = vpop.trf.xlu0
        %v1399 = vpop.trf.xlu0
        %v1400 = vpop.trf.xlu0
        %v1401 = vpop.trf.xlu0
        %v1402 = vpop.trf.xlu0
        %v1403 = vpop.trf.xlu0
        %v1404 = vpop.trf.xlu0
        %v1405 = vpop.trf.xlu0
        %1406 = vxpose.xlu0.c.b16.start [1/8] %v815, 128
        %1407 = vxpose.xlu0.c.b16.cont [2/8] %v817, 128
        %1408 = vxpose.xlu0.c.b16.cont [3/8] %v819, 128
        %1409 = vxpose.xlu0.c.b16.cont [4/8] %v821, 128
        %1410 = vxpose.xlu0.c.b16.cont [5/8] %v823, 128
        %1411 = vxpose.xlu0.c.b16.cont [6/8] %v825, 128
        %1412 = vxpose.xlu0.c.b16.cont [7/8] %v827, 128
        %1413 = vxpose.xlu0.c.b16.end [8/8] %v829, 128
        %v1414 = vpop.trf.xlu0
        %v1415 = vpop.trf.xlu0
        %v1416 = vpop.trf.xlu0
        %v1417 = vpop.trf.xlu0
        %v1418 = vpop.trf.xlu0
        %v1419 = vpop.trf.xlu0
        %v1420 = vpop.trf.xlu0
        %v1421 = vpop.trf.xlu0
        %1422 = vxpose.xlu0.c.b16.start [1/8] %v830, 128
        %1423 = vxpose.xlu0.c.b16.cont [2/8] %v832, 128
        %1424 = vxpose.xlu0.c.b16.cont [3/8] %v834, 128
        %1425 = vxpose.xlu0.c.b16.cont [4/8] %v836, 128
        %1426 = vxpose.xlu0.c.b16.cont [5/8] %v838, 128
        %1427 = vxpose.xlu0.c.b16.cont [6/8] %v840, 128
        %1428 = vxpose.xlu0.c.b16.cont [7/8] %v842, 128
        %1429 = vxpose.xlu0.c.b16.end [8/8] %v844, 128
        %v1430 = vpop.trf.xlu0
        %v1431 = vpop.trf.xlu0
        %v1432 = vpop.trf.xlu0
        %v1433 = vpop.trf.xlu0
        %v1434 = vpop.trf.xlu0
        %v1435 = vpop.trf.xlu0
        %v1436 = vpop.trf.xlu0
        %v1437 = vpop.trf.xlu0
        %1438 = vxpose.xlu0.c.b16.start [1/8] %v831, 128
        %1439 = vxpose.xlu0.c.b16.cont [2/8] %v833, 128
        %1440 = vxpose.xlu0.c.b16.cont [3/8] %v835, 128
        %1441 = vxpose.xlu0.c.b16.cont [4/8] %v837, 128
        %1442 = vxpose.xlu0.c.b16.cont [5/8] %v839, 128
        %1443 = vxpose.xlu0.c.b16.cont [6/8] %v841, 128
        %1444 = vxpose.xlu0.c.b16.cont [7/8] %v843, 128
        %1445 = vxpose.xlu0.c.b16.end [8/8] %v845, 128
        %v1446 = vpop.trf.xlu0
        %v1447 = vpop.trf.xlu0
        %v1448 = vpop.trf.xlu0
        %v1449 = vpop.trf.xlu0
        %v1450 = vpop.trf.xlu0
        %v1451 = vpop.trf.xlu0
        %v1452 = vpop.trf.xlu0
        %v1453 = vpop.trf.xlu0
        %1454 = vxpose.xlu0.c.b16.start [1/8] %v846, 128
        %1455 = vxpose.xlu0.c.b16.cont [2/8] %v848, 128
        %1456 = vxpose.xlu0.c.b16.cont [3/8] %v850, 128
        %1457 = vxpose.xlu0.c.b16.cont [4/8] %v852, 128
        %1458 = vxpose.xlu0.c.b16.cont [5/8] %v854, 128
        %1459 = vxpose.xlu0.c.b16.cont [6/8] %v856, 128
        %1460 = vxpose.xlu0.c.b16.cont [7/8] %v858, 128
        %1461 = vxpose.xlu0.c.b16.end [8/8] %v860, 128
        %v1462 = vpop.trf.xlu0
        %v1463 = vpop.trf.xlu0
        %v1464 = vpop.trf.xlu0
        %v1465 = vpop.trf.xlu0
        %v1466 = vpop.trf.xlu0
        %v1467 = vpop.trf.xlu0
        %v1468 = vpop.trf.xlu0
        %v1469 = vpop.trf.xlu0
        %1470 = vxpose.xlu0.c.b16.start [1/8] %v847, 128
        %1471 = vxpose.xlu0.c.b16.cont [2/8] %v849, 128
        %1472 = vxpose.xlu0.c.b16.cont [3/8] %v851, 128
        %1473 = vxpose.xlu0.c.b16.cont [4/8] %v853, 128
        %1474 = vxpose.xlu0.c.b16.cont [5/8] %v855, 128
        %1475 = vxpose.xlu0.c.b16.cont [6/8] %v857, 128
        %1476 = vxpose.xlu0.c.b16.cont [7/8] %v859, 128
        %1477 = vxpose.xlu0.c.b16.end [8/8] %v861, 128
        %v1478 = vpop.trf.xlu0
        %v1479 = vpop.trf.xlu0
        %v1480 = vpop.trf.xlu0
        %v1481 = vpop.trf.xlu0
        %v1482 = vpop.trf.xlu0
        %v1483 = vpop.trf.xlu0
        %v1484 = vpop.trf.xlu0
        %v1485 = vpop.trf.xlu0
        %1486 = vxpose.xlu0.c.b16.start [1/8] %v862, 128
        %1487 = vxpose.xlu0.c.b16.cont [2/8] %v864, 128
        %1488 = vxpose.xlu0.c.b16.cont [3/8] %v866, 128
        %1489 = vxpose.xlu0.c.b16.cont [4/8] %v868, 128
        %1490 = vxpose.xlu0.c.b16.cont [5/8] %v870, 128
        %1491 = vxpose.xlu0.c.b16.cont [6/8] %v872, 128
        %1492 = vxpose.xlu0.c.b16.cont [7/8] %v874, 128
        %1493 = vxpose.xlu0.c.b16.end [8/8] %v876, 128
        %v1494 = vpop.trf.xlu0
        %v1495 = vpop.trf.xlu0
        %v1496 = vpop.trf.xlu0
        %v1497 = vpop.trf.xlu0
        %v1498 = vpop.trf.xlu0
        %v1499 = vpop.trf.xlu0
        %v1500 = vpop.trf.xlu0
        %v1501 = vpop.trf.xlu0
        %1502 = vxpose.xlu0.c.b16.start [1/8] %v863, 128
        %1503 = vxpose.xlu0.c.b16.cont [2/8] %v865, 128
        %1504 = vxpose.xlu0.c.b16.cont [3/8] %v867, 128
        %1505 = vxpose.xlu0.c.b16.cont [4/8] %v869, 128
        %1506 = vxpose.xlu0.c.b16.cont [5/8] %v871, 128
        %1507 = vxpose.xlu0.c.b16.cont [6/8] %v873, 128
        %1508 = vxpose.xlu0.c.b16.cont [7/8] %v875, 128
        %1509 = vxpose.xlu0.c.b16.end [8/8] %v877, 128
        %v1510 = vpop.trf.xlu0
        %v1511 = vpop.trf.xlu0
        %v1512 = vpop.trf.xlu0
        %v1513 = vpop.trf.xlu0
        %v1514 = vpop.trf.xlu0
        %v1515 = vpop.trf.xlu0
        %v1516 = vpop.trf.xlu0
        %v1517 = vpop.trf.xlu0
        %1518 = vxpose.xlu0.c.b16.start [1/8] %v878, 128
        %1519 = vxpose.xlu0.c.b16.cont [2/8] %v880, 128
        %1520 = vxpose.xlu0.c.b16.cont [3/8] %v882, 128
        %1521 = vxpose.xlu0.c.b16.cont [4/8] %v884, 128
        %1522 = vxpose.xlu0.c.b16.cont [5/8] %v886, 128
        %1523 = vxpose.xlu0.c.b16.cont [6/8] %v888, 128
        %1524 = vxpose.xlu0.c.b16.cont [7/8] %v890, 128
        %1525 = vxpose.xlu0.c.b16.end [8/8] %v892, 128
        %v1526 = vpop.trf.xlu0
        %v1527 = vpop.trf.xlu0
        %v1528 = vpop.trf.xlu0
        %v1529 = vpop.trf.xlu0
        %v1530 = vpop.trf.xlu0
        %v1531 = vpop.trf.xlu0
        %v1532 = vpop.trf.xlu0
        %v1533 = vpop.trf.xlu0
        %1534 = vxpose.xlu0.c.b16.start [1/8] %v879, 128
        %1535 = vxpose.xlu0.c.b16.cont [2/8] %v881, 128
        %1536 = vxpose.xlu0.c.b16.cont [3/8] %v883, 128
        %1537 = vxpose.xlu0.c.b16.cont [4/8] %v885, 128
        %1538 = vxpose.xlu0.c.b16.cont [5/8] %v887, 128
        %1539 = vxpose.xlu0.c.b16.cont [6/8] %v889, 128
        %1540 = vxpose.xlu0.c.b16.cont [7/8] %v891, 128
        %1541 = vxpose.xlu0.c.b16.end [8/8] %v893, 128
        %v1542 = vpop.trf.xlu0
        %v1543 = vpop.trf.xlu0
        %v1544 = vpop.trf.xlu0
        %v1545 = vpop.trf.xlu0
        %v1546 = vpop.trf.xlu0
        %v1547 = vpop.trf.xlu0
        %v1548 = vpop.trf.xlu0
        %v1549 = vpop.trf.xlu0
        %1550 = vxpose.xlu0.c.b16.start [1/8] %v894, 128
        %1551 = vxpose.xlu0.c.b16.cont [2/8] %v896, 128
        %1552 = vxpose.xlu0.c.b16.cont [3/8] %v898, 128
        %1553 = vxpose.xlu0.c.b16.cont [4/8] %v900, 128
        %1554 = vxpose.xlu0.c.b16.cont [5/8] %v902, 128
        %1555 = vxpose.xlu0.c.b16.cont [6/8] %v904, 128
        %1556 = vxpose.xlu0.c.b16.cont [7/8] %v906, 128
        %1557 = vxpose.xlu0.c.b16.end [8/8] %v908, 128
        %v1558 = vpop.trf.xlu0
        %v1559 = vpop.trf.xlu0
        %v1560 = vpop.trf.xlu0
        %v1561 = vpop.trf.xlu0
        %v1562 = vpop.trf.xlu0
        %v1563 = vpop.trf.xlu0
        %v1564 = vpop.trf.xlu0
        %v1565 = vpop.trf.xlu0
        %1566 = vxpose.xlu0.c.b16.start [1/8] %v895, 128
        %1567 = vxpose.xlu0.c.b16.cont [2/8] %v897, 128
        %1568 = vxpose.xlu0.c.b16.cont [3/8] %v899, 128
        %1569 = vxpose.xlu0.c.b16.cont [4/8] %v901, 128
        %1570 = vxpose.xlu0.c.b16.cont [5/8] %v903, 128
        %1571 = vxpose.xlu0.c.b16.cont [6/8] %v905, 128
        %1572 = vxpose.xlu0.c.b16.cont [7/8] %v907, 128
        %1573 = vxpose.xlu0.c.b16.end [8/8] %v909, 128
        %v1574 = vpop.trf.xlu0
        %v1575 = vpop.trf.xlu0
        %v1576 = vpop.trf.xlu0
        %v1577 = vpop.trf.xlu0
        %v1578 = vpop.trf.xlu0
        %v1579 = vpop.trf.xlu0
        %v1580 = vpop.trf.xlu0
        %v1581 = vpop.trf.xlu0
        %1582 = vxpose.xlu0.c.b16.start [1/8] %v910, 128
        %1583 = vxpose.xlu0.c.b16.cont [2/8] %v912, 128
        %1584 = vxpose.xlu0.c.b16.cont [3/8] %v914, 128
        %1585 = vxpose.xlu0.c.b16.cont [4/8] %v916, 128
        %1586 = vxpose.xlu0.c.b16.cont [5/8] %v918, 128
        %1587 = vxpose.xlu0.c.b16.cont [6/8] %v920, 128
        %1588 = vxpose.xlu0.c.b16.cont [7/8] %v922, 128
        %1589 = vxpose.xlu0.c.b16.end [8/8] %v924, 128
        %v1590 = vpop.trf.xlu0
        %v1591 = vpop.trf.xlu0
        %v1592 = vpop.trf.xlu0
        %v1593 = vpop.trf.xlu0
        %v1594 = vpop.trf.xlu0
        %v1595 = vpop.trf.xlu0
        %v1596 = vpop.trf.xlu0
        %v1597 = vpop.trf.xlu0
        %1598 = vxpose.xlu0.c.b16.start [1/8] %v911, 128
        %1599 = vxpose.xlu0.c.b16.cont [2/8] %v913, 128
        %1600 = vxpose.xlu0.c.b16.cont [3/8] %v915, 128
        %1601 = vxpose.xlu0.c.b16.cont [4/8] %v917, 128
        %1602 = vxpose.xlu0.c.b16.cont [5/8] %v919, 128
        %1603 = vxpose.xlu0.c.b16.cont [6/8] %v921, 128
        %1604 = vxpose.xlu0.c.b16.cont [7/8] %v923, 128
        %1605 = vxpose.xlu0.c.b16.end [8/8] %v925, 128
        %v1606 = vpop.trf.xlu0
        %v1607 = vpop.trf.xlu0
        %v1608 = vpop.trf.xlu0
        %v1609 = vpop.trf.xlu0
        %v1610 = vpop.trf.xlu0
        %v1611 = vpop.trf.xlu0
        %v1612 = vpop.trf.xlu0
        %v1613 = vpop.trf.xlu0
        %1614 = vxpose.xlu0.c.b16.start [1/8] %v926, 128
        %1615 = vxpose.xlu0.c.b16.cont [2/8] %v928, 128
        %1616 = vxpose.xlu0.c.b16.cont [3/8] %v930, 128
        %1617 = vxpose.xlu0.c.b16.cont [4/8] %v932, 128
        %1618 = vxpose.xlu0.c.b16.cont [5/8] %v934, 128
        %1619 = vxpose.xlu0.c.b16.cont [6/8] %v936, 128
        %1620 = vxpose.xlu0.c.b16.cont [7/8] %v938, 128
        %1621 = vxpose.xlu0.c.b16.end [8/8] %v940, 128
        %v1622 = vpop.trf.xlu0
        %v1623 = vpop.trf.xlu0
        %v1624 = vpop.trf.xlu0
        %v1625 = vpop.trf.xlu0
        %v1626 = vpop.trf.xlu0
        %v1627 = vpop.trf.xlu0
        %v1628 = vpop.trf.xlu0
        %v1629 = vpop.trf.xlu0
        %1630 = vxpose.xlu0.c.b16.start [1/8] %v927, 128
        %1631 = vxpose.xlu0.c.b16.cont [2/8] %v929, 128
        %1632 = vxpose.xlu0.c.b16.cont [3/8] %v931, 128
        %1633 = vxpose.xlu0.c.b16.cont [4/8] %v933, 128
        %1634 = vxpose.xlu0.c.b16.cont [5/8] %v935, 128
        %1635 = vxpose.xlu0.c.b16.cont [6/8] %v937, 128
        %1636 = vxpose.xlu0.c.b16.cont [7/8] %v939, 128
        %1637 = vxpose.xlu0.c.b16.end [8/8] %v941, 128
        %v1638 = vpop.trf.xlu0
        %v1639 = vpop.trf.xlu0
        %v1640 = vpop.trf.xlu0
        %v1641 = vpop.trf.xlu0
        %v1642 = vpop.trf.xlu0
        %v1643 = vpop.trf.xlu0
        %v1644 = vpop.trf.xlu0
        %v1645 = vpop.trf.xlu0
        %1646 = vxpose.xlu0.c.b16.start [1/8] %v942, 128
        %1647 = vxpose.xlu0.c.b16.cont [2/8] %v944, 128
        %1648 = vxpose.xlu0.c.b16.cont [3/8] %v946, 128
        %1649 = vxpose.xlu0.c.b16.cont [4/8] %v948, 128
        %1650 = vxpose.xlu0.c.b16.cont [5/8] %v950, 128
        %1651 = vxpose.xlu0.c.b16.cont [6/8] %v952, 128
        %1652 = vxpose.xlu0.c.b16.cont [7/8] %v954, 128
        %1653 = vxpose.xlu0.c.b16.end [8/8] %v956, 128
        %v1654 = vpop.trf.xlu0
        %v1655 = vpop.trf.xlu0
        %v1656 = vpop.trf.xlu0
        %v1657 = vpop.trf.xlu0
        %v1658 = vpop.trf.xlu0
        %v1659 = vpop.trf.xlu0
        %v1660 = vpop.trf.xlu0
        %v1661 = vpop.trf.xlu0
        %1662 = vxpose.xlu0.c.b16.start [1/8] %v943, 128
        %1663 = vxpose.xlu0.c.b16.cont [2/8] %v945, 128
        %1664 = vxpose.xlu0.c.b16.cont [3/8] %v947, 128
        %1665 = vxpose.xlu0.c.b16.cont [4/8] %v949, 128
        %1666 = vxpose.xlu0.c.b16.cont [5/8] %v951, 128
        %1667 = vxpose.xlu0.c.b16.cont [6/8] %v953, 128
        %1668 = vxpose.xlu0.c.b16.cont [7/8] %v955, 128
        %1669 = vxpose.xlu0.c.b16.end [8/8] %v957, 128
        %v1670 = vpop.trf.xlu0
        %v1671 = vpop.trf.xlu0
        %v1672 = vpop.trf.xlu0
        %v1673 = vpop.trf.xlu0
        %v1674 = vpop.trf.xlu0
        %v1675 = vpop.trf.xlu0
        %v1676 = vpop.trf.xlu0
        %v1677 = vpop.trf.xlu0
        %1678 = vxpose.xlu0.c.b16.start [1/8] %v958, 128
        %1679 = vxpose.xlu0.c.b16.cont [2/8] %v960, 128
        %1680 = vxpose.xlu0.c.b16.cont [3/8] %v962, 128
        %1681 = vxpose.xlu0.c.b16.cont [4/8] %v964, 128
        %1682 = vxpose.xlu0.c.b16.cont [5/8] %v966, 128
        %1683 = vxpose.xlu0.c.b16.cont [6/8] %v968, 128
        %1684 = vxpose.xlu0.c.b16.cont [7/8] %v970, 128
        %1685 = vxpose.xlu0.c.b16.end [8/8] %v972, 128
        %v1686 = vpop.trf.xlu0
        %v1687 = vpop.trf.xlu0
        %v1688 = vpop.trf.xlu0
        %v1689 = vpop.trf.xlu0
        %v1690 = vpop.trf.xlu0
        %v1691 = vpop.trf.xlu0
        %v1692 = vpop.trf.xlu0
        %v1693 = vpop.trf.xlu0
        %1694 = vxpose.xlu0.c.b16.start [1/8] %v959, 128
        %1695 = vxpose.xlu0.c.b16.cont [2/8] %v961, 128
        %1696 = vxpose.xlu0.c.b16.cont [3/8] %v963, 128
        %1697 = vxpose.xlu0.c.b16.cont [4/8] %v965, 128
        %1698 = vxpose.xlu0.c.b16.cont [5/8] %v967, 128
        %1699 = vxpose.xlu0.c.b16.cont [6/8] %v969, 128
        %1700 = vxpose.xlu0.c.b16.cont [7/8] %v971, 128
        %1701 = vxpose.xlu0.c.b16.end [8/8] %v973, 128
        %v1702 = vpop.trf.xlu0
        %v1703 = vpop.trf.xlu0
        %v1704 = vpop.trf.xlu0
        %v1705 = vpop.trf.xlu0
        %v1706 = vpop.trf.xlu0
        %v1707 = vpop.trf.xlu0
        %v1708 = vpop.trf.xlu0
        %v1709 = vpop.trf.xlu0
        %1710 = vxpose.xlu0.c.b16.start [1/8] %v974, 128
        %1711 = vxpose.xlu0.c.b16.cont [2/8] %v976, 128
        %1712 = vxpose.xlu0.c.b16.cont [3/8] %v978, 128
        %1713 = vxpose.xlu0.c.b16.cont [4/8] %v980, 128
        %1714 = vxpose.xlu0.c.b16.cont [5/8] %v982, 128
        %1715 = vxpose.xlu0.c.b16.cont [6/8] %v984, 128
        %1716 = vxpose.xlu0.c.b16.cont [7/8] %v986, 128
        %1717 = vxpose.xlu0.c.b16.end [8/8] %v988, 128
        %v1718 = vpop.trf.xlu0
        %v1719 = vpop.trf.xlu0
        %v1720 = vpop.trf.xlu0
        %v1721 = vpop.trf.xlu0
        %v1722 = vpop.trf.xlu0
        %v1723 = vpop.trf.xlu0
        %v1724 = vpop.trf.xlu0
        %v1725 = vpop.trf.xlu0
        %1726 = vxpose.xlu0.c.b16.start [1/8] %v975, 128
        %1727 = vxpose.xlu0.c.b16.cont [2/8] %v977, 128
        %1728 = vxpose.xlu0.c.b16.cont [3/8] %v979, 128
        %1729 = vxpose.xlu0.c.b16.cont [4/8] %v981, 128
        %1730 = vxpose.xlu0.c.b16.cont [5/8] %v983, 128
        %1731 = vxpose.xlu0.c.b16.cont [6/8] %v985, 128
        %1732 = vxpose.xlu0.c.b16.cont [7/8] %v987, 128
        %1733 = vxpose.xlu0.c.b16.end [8/8] %v989, 128
        %v1734 = vpop.trf.xlu0
        %v1735 = vpop.trf.xlu0
        %v1736 = vpop.trf.xlu0
        %v1737 = vpop.trf.xlu0
        %v1738 = vpop.trf.xlu0
        %v1739 = vpop.trf.xlu0
        %v1740 = vpop.trf.xlu0
        %v1741 = vpop.trf.xlu0
        %1742 = vxpose.xlu0.c.b16.start [1/8] %v990, 128
        %1743 = vxpose.xlu0.c.b16.cont [2/8] %v992, 128
        %1744 = vxpose.xlu0.c.b16.cont [3/8] %v994, 128
        %1745 = vxpose.xlu0.c.b16.cont [4/8] %v996, 128
        %1746 = vxpose.xlu0.c.b16.cont [5/8] %v998, 128
        %1747 = vxpose.xlu0.c.b16.cont [6/8] %v1000, 128
        %1748 = vxpose.xlu0.c.b16.cont [7/8] %v1002, 128
        %1749 = vxpose.xlu0.c.b16.end [8/8] %v1004, 128
        %v1750 = vpop.trf.xlu0
        %v1751 = vpop.trf.xlu0
        %v1752 = vpop.trf.xlu0
        %v1753 = vpop.trf.xlu0
        %v1754 = vpop.trf.xlu0
        %v1755 = vpop.trf.xlu0
        %v1756 = vpop.trf.xlu0
        %v1757 = vpop.trf.xlu0
        %1758 = vxpose.xlu0.c.b16.start [1/8] %v991, 128
        %1759 = vxpose.xlu0.c.b16.cont [2/8] %v993, 128
        %1760 = vxpose.xlu0.c.b16.cont [3/8] %v995, 128
        %1761 = vxpose.xlu0.c.b16.cont [4/8] %v997, 128
        %1762 = vxpose.xlu0.c.b16.cont [5/8] %v999, 128
        %1763 = vxpose.xlu0.c.b16.cont [6/8] %v1001, 128
        %1764 = vxpose.xlu0.c.b16.cont [7/8] %v1003, 128
        %1765 = vxpose.xlu0.c.b16.end [8/8] %v1005, 128
        %v1766 = vpop.trf.xlu0
        %v1767 = vpop.trf.xlu0
        %v1768 = vpop.trf.xlu0
        %v1769 = vpop.trf.xlu0
        %v1770 = vpop.trf.xlu0
        %v1771 = vpop.trf.xlu0
        %v1772 = vpop.trf.xlu0
        %v1773 = vpop.trf.xlu0
        %v2030 = vunpack.c.l.b16 %v1006
        %v2031 = vunpack.c.l.b16 %v1007
        %v2032 = vunpack.c.l.b16 %v1008
        %v2033 = vunpack.c.l.b16 %v1009
        %v2034 = vunpack.c.l.b16 %v1010
        %v2035 = vunpack.c.l.b16 %v1011
        %v2036 = vunpack.c.l.b16 %v1012
        %v2037 = vunpack.c.l.b16 %v1013
        %v2038 = vunpack.c.l.b16 %v1014
        %v2039 = vunpack.c.l.b16 %v1015
        %v2040 = vunpack.c.l.b16 %v1016
        %v2041 = vunpack.c.l.b16 %v1017
        %v2042 = vunpack.c.l.b16 %v1018
        %v2043 = vunpack.c.l.b16 %v1019
        %v2044 = vunpack.c.l.b16 %v1020
        %v2045 = vunpack.c.l.b16 %v1021
        %v2046 = vunpack.c.l.b16 %v1022
        %v2047 = vunpack.c.l.b16 %v1023
        %v2048 = vunpack.c.l.b16 %v1024
        %v2049 = vunpack.c.l.b16 %v1025
        %v2050 = vunpack.c.l.b16 %v1026
        %v2051 = vunpack.c.l.b16 %v1027
        %v2052 = vunpack.c.l.b16 %v1028
        %v2053 = vunpack.c.l.b16 %v1029
        %v2054 = vunpack.c.l.b16 %v1030
        %v2055 = vunpack.c.l.b16 %v1031
        %v2056 = vunpack.c.l.b16 %v1032
        %v2057 = vunpack.c.l.b16 %v1033
        %v2058 = vunpack.c.l.b16 %v1034
        %v2059 = vunpack.c.l.b16 %v1035
        %v2060 = vunpack.c.l.b16 %v1036
        %v2061 = vunpack.c.l.b16 %v1037
        %v2062 = vunpack.c.l.b16 %v1038
        %v2063 = vunpack.c.l.b16 %v1039
        %v2064 = vunpack.c.l.b16 %v1040
        %v2065 = vunpack.c.l.b16 %v1041
        %v2066 = vunpack.c.l.b16 %v1042
        %v2067 = vunpack.c.l.b16 %v1043
        %v2068 = vunpack.c.l.b16 %v1044
        %v2069 = vunpack.c.l.b16 %v1045
        %v2070 = vunpack.c.l.b16 %v1046
        %v2071 = vunpack.c.l.b16 %v1047
        %v2072 = vunpack.c.l.b16 %v1048
        %v2073 = vunpack.c.l.b16 %v1049
        %v2074 = vunpack.c.l.b16 %v1050
        %v2075 = vunpack.c.l.b16 %v1051
        %v2076 = vunpack.c.l.b16 %v1052
        %v2077 = vunpack.c.l.b16 %v1053
        %v2078 = vunpack.c.l.b16 %v1054
        %v2079 = vunpack.c.l.b16 %v1055
        %v2080 = vunpack.c.l.b16 %v1056
        %v2081 = vunpack.c.l.b16 %v1057
        %v2082 = vunpack.c.l.b16 %v1058
        %v2083 = vunpack.c.l.b16 %v1059
        %v2084 = vunpack.c.l.b16 %v1060
        %v2085 = vunpack.c.l.b16 %v1061
        %v2086 = vunpack.c.l.b16 %v1062
        %v2087 = vunpack.c.l.b16 %v1063
        %v2088 = vunpack.c.l.b16 %v1064
        %v2089 = vunpack.c.l.b16 %v1065
        %v2090 = vunpack.c.l.b16 %v1066
        %v2091 = vunpack.c.l.b16 %v1067
        %v2092 = vunpack.c.l.b16 %v1068
        %v2093 = vunpack.c.l.b16 %v1069
        %v2094 = vunpack.c.l.b16 %v1070
        %v2095 = vunpack.c.l.b16 %v1071
        %v2096 = vunpack.c.l.b16 %v1072
        %v2097 = vunpack.c.l.b16 %v1073
        %v2098 = vunpack.c.l.b16 %v1074
        %v2099 = vunpack.c.l.b16 %v1075
        %v2100 = vunpack.c.l.b16 %v1076
        %v2101 = vunpack.c.l.b16 %v1077
        %v2102 = vunpack.c.l.b16 %v1078
        %v2103 = vunpack.c.l.b16 %v1079
        %v2104 = vunpack.c.l.b16 %v1080
        %v2105 = vunpack.c.l.b16 %v1081
        %v2106 = vunpack.c.l.b16 %v1082
        %v2107 = vunpack.c.l.b16 %v1083
        %v2108 = vunpack.c.l.b16 %v1084
        %v2109 = vunpack.c.l.b16 %v1085
        %v2110 = vunpack.c.l.b16 %v1086
        %v2111 = vunpack.c.l.b16 %v1087
        %v2112 = vunpack.c.l.b16 %v1088
        %v2113 = vunpack.c.l.b16 %v1089
        %v2114 = vunpack.c.l.b16 %v1090
        %v2115 = vunpack.c.l.b16 %v1091
        %v2116 = vunpack.c.l.b16 %v1092
        %v2117 = vunpack.c.l.b16 %v1093
        %v2118 = vunpack.c.l.b16 %v1094
        %v2119 = vunpack.c.l.b16 %v1095
        %v2120 = vunpack.c.l.b16 %v1096
        %v2121 = vunpack.c.l.b16 %v1097
        %v2122 = vunpack.c.l.b16 %v1098
        %v2123 = vunpack.c.l.b16 %v1099
        %v2124 = vunpack.c.l.b16 %v1100
        %v2125 = vunpack.c.l.b16 %v1101
        %v2126 = vunpack.c.l.b16 %v1102
        %v2127 = vunpack.c.l.b16 %v1103
        %v2128 = vunpack.c.l.b16 %v1104
        %v2129 = vunpack.c.l.b16 %v1105
        %v2130 = vunpack.c.l.b16 %v1106
        %v2131 = vunpack.c.l.b16 %v1107
        %v2132 = vunpack.c.l.b16 %v1108
        %v2133 = vunpack.c.l.b16 %v1109
        %v2134 = vunpack.c.l.b16 %v1110
        %v2135 = vunpack.c.l.b16 %v1111
        %v2136 = vunpack.c.l.b16 %v1112
        %v2137 = vunpack.c.l.b16 %v1113
        %v2138 = vunpack.c.l.b16 %v1114
        %v2139 = vunpack.c.l.b16 %v1115
        %v2140 = vunpack.c.l.b16 %v1116
        %v2141 = vunpack.c.l.b16 %v1117
        %v2142 = vunpack.c.l.b16 %v1118
        %v2143 = vunpack.c.l.b16 %v1119
        %v2144 = vunpack.c.l.b16 %v1120
        %v2145 = vunpack.c.l.b16 %v1121
        %v2146 = vunpack.c.l.b16 %v1122
        %v2147 = vunpack.c.l.b16 %v1123
        %v2148 = vunpack.c.l.b16 %v1124
        %v2149 = vunpack.c.l.b16 %v1125
        %v2150 = vunpack.c.l.b16 %v1126
        %v2151 = vunpack.c.l.b16 %v1127
        %v2152 = vunpack.c.l.b16 %v1128
        %v2153 = vunpack.c.l.b16 %v1129
        %v2154 = vunpack.c.l.b16 %v1130
        %v2155 = vunpack.c.l.b16 %v1131
        %v2156 = vunpack.c.l.b16 %v1132
        %v2157 = vunpack.c.l.b16 %v1133
        %v2158 = vunpack.c.l.b16 %v1134
        %v2159 = vunpack.c.l.b16 %v1135
        %v2160 = vunpack.c.l.b16 %v1136
        %v2161 = vunpack.c.l.b16 %v1137
        %v2162 = vunpack.c.l.b16 %v1138
        %v2163 = vunpack.c.l.b16 %v1139
        %v2164 = vunpack.c.l.b16 %v1140
        %v2165 = vunpack.c.l.b16 %v1141
        %v2166 = vunpack.c.l.b16 %v1142
        %v2167 = vunpack.c.l.b16 %v1143
        %v2168 = vunpack.c.l.b16 %v1144
        %v2169 = vunpack.c.l.b16 %v1145
        %v2170 = vunpack.c.l.b16 %v1146
        %v2171 = vunpack.c.l.b16 %v1147
        %v2172 = vunpack.c.l.b16 %v1148
        %v2173 = vunpack.c.l.b16 %v1149
        %v2174 = vunpack.c.l.b16 %v1150
        %v2175 = vunpack.c.l.b16 %v1151
        %v2176 = vunpack.c.l.b16 %v1152
        %v2177 = vunpack.c.l.b16 %v1153
        %v2178 = vunpack.c.l.b16 %v1154
        %v2179 = vunpack.c.l.b16 %v1155
        %v2180 = vunpack.c.l.b16 %v1156
        %v2181 = vunpack.c.l.b16 %v1157
        %v2182 = vunpack.c.l.b16 %v1158
        %v2183 = vunpack.c.l.b16 %v1159
        %v2184 = vunpack.c.l.b16 %v1160
        %v2185 = vunpack.c.l.b16 %v1161
        %v2186 = vunpack.c.l.b16 %v1162
        %v2187 = vunpack.c.l.b16 %v1163
        %v2188 = vunpack.c.l.b16 %v1164
        %v2189 = vunpack.c.l.b16 %v1165
        %v2190 = vunpack.c.l.b16 %v1166
        %v2191 = vunpack.c.l.b16 %v1167
        %v2192 = vunpack.c.l.b16 %v1168
        %v2193 = vunpack.c.l.b16 %v1169
        %v2194 = vunpack.c.l.b16 %v1170
        %v2195 = vunpack.c.l.b16 %v1171
        %v2196 = vunpack.c.l.b16 %v1172
        %v2197 = vunpack.c.l.b16 %v1173
        %v2198 = vunpack.c.l.b16 %v1174
        %v2199 = vunpack.c.l.b16 %v1175
        %v2200 = vunpack.c.l.b16 %v1176
        %v2201 = vunpack.c.l.b16 %v1177
        %v2202 = vunpack.c.l.b16 %v1178
        %v2203 = vunpack.c.l.b16 %v1179
        %v2204 = vunpack.c.l.b16 %v1180
        %v2205 = vunpack.c.l.b16 %v1181
        %v2206 = vunpack.c.l.b16 %v1182
        %v2207 = vunpack.c.l.b16 %v1183
        %v2208 = vunpack.c.l.b16 %v1184
        %v2209 = vunpack.c.l.b16 %v1185
        %v2210 = vunpack.c.l.b16 %v1186
        %v2211 = vunpack.c.l.b16 %v1187
        %v2212 = vunpack.c.l.b16 %v1188
        %v2213 = vunpack.c.l.b16 %v1189
        %v2214 = vunpack.c.l.b16 %v1190
        %v2215 = vunpack.c.l.b16 %v1191
        %v2216 = vunpack.c.l.b16 %v1192
        %v2217 = vunpack.c.l.b16 %v1193
        %v2218 = vunpack.c.l.b16 %v1194
        %v2219 = vunpack.c.l.b16 %v1195
        %v2220 = vunpack.c.l.b16 %v1196
        %v2221 = vunpack.c.l.b16 %v1197
        %v2222 = vunpack.c.l.b16 %v1198
        %v2223 = vunpack.c.l.b16 %v1199
        %v2224 = vunpack.c.l.b16 %v1200
        %v2225 = vunpack.c.l.b16 %v1201
        %v2226 = vunpack.c.l.b16 %v1202
        %v2227 = vunpack.c.l.b16 %v1203
        %v2228 = vunpack.c.l.b16 %v1204
        %v2229 = vunpack.c.l.b16 %v1205
        %v2230 = vunpack.c.l.b16 %v1206
        %v2231 = vunpack.c.l.b16 %v1207
        %v2232 = vunpack.c.l.b16 %v1208
        %v2233 = vunpack.c.l.b16 %v1209
        %v2234 = vunpack.c.l.b16 %v1210
        %v2235 = vunpack.c.l.b16 %v1211
        %v2236 = vunpack.c.l.b16 %v1212
        %v2237 = vunpack.c.l.b16 %v1213
        %v2238 = vunpack.c.l.b16 %v1214
        %v2239 = vunpack.c.l.b16 %v1215
        %v2240 = vunpack.c.l.b16 %v1216
        %v2241 = vunpack.c.l.b16 %v1217
        %v2242 = vunpack.c.l.b16 %v1218
        %v2243 = vunpack.c.l.b16 %v1219
        %v2244 = vunpack.c.l.b16 %v1220
        %v2245 = vunpack.c.l.b16 %v1221
        %v2246 = vunpack.c.l.b16 %v1222
        %v2247 = vunpack.c.l.b16 %v1223
        %v2248 = vunpack.c.l.b16 %v1224
        %v2249 = vunpack.c.l.b16 %v1225
        %v2250 = vunpack.c.l.b16 %v1226
        %v2251 = vunpack.c.l.b16 %v1227
        %v2252 = vunpack.c.l.b16 %v1228
        %v2253 = vunpack.c.l.b16 %v1229
        %v2254 = vunpack.c.l.b16 %v1230
        %v2255 = vunpack.c.l.b16 %v1231
        %v2256 = vunpack.c.l.b16 %v1232
        %v2257 = vunpack.c.l.b16 %v1233
        %v2258 = vunpack.c.l.b16 %v1234
        %v2259 = vunpack.c.l.b16 %v1235
        %v2260 = vunpack.c.l.b16 %v1236
        %v2261 = vunpack.c.l.b16 %v1237
        %v2262 = vunpack.c.l.b16 %v1238
        %v2263 = vunpack.c.l.b16 %v1239
        %v2264 = vunpack.c.l.b16 %v1240
        %v2265 = vunpack.c.l.b16 %v1241
        %v2266 = vunpack.c.l.b16 %v1242
        %v2267 = vunpack.c.l.b16 %v1243
        %v2268 = vunpack.c.l.b16 %v1244
        %v2269 = vunpack.c.l.b16 %v1245
        %v2270 = vunpack.c.l.b16 %v1246
        %v2271 = vunpack.c.l.b16 %v1247
        %v2272 = vunpack.c.l.b16 %v1248
        %v2273 = vunpack.c.l.b16 %v1249
        %v2274 = vunpack.c.l.b16 %v1250
        %v2275 = vunpack.c.l.b16 %v1251
        %v2276 = vunpack.c.l.b16 %v1252
        %v2277 = vunpack.c.l.b16 %v1253
        %v2278 = vunpack.c.l.b16 %v1254
        %v2279 = vunpack.c.l.b16 %v1255
        %v2280 = vunpack.c.l.b16 %v1256
        %v2281 = vunpack.c.l.b16 %v1257
        %v2282 = vunpack.c.l.b16 %v1258
        %v2283 = vunpack.c.l.b16 %v1259
        %v2284 = vunpack.c.l.b16 %v1260
        %v2285 = vunpack.c.l.b16 %v1261
        %v2286 = vpack.c.b16 %v2031, %v2030
        %v2287 = vpack.c.b16 %v2033, %v2032
        %v2288 = vpack.c.b16 %v2035, %v2034
        %v2289 = vpack.c.b16 %v2037, %v2036
        %v2290 = vpack.c.b16 %v2039, %v2038
        %v2291 = vpack.c.b16 %v2041, %v2040
        %v2292 = vpack.c.b16 %v2043, %v2042
        %v2293 = vpack.c.b16 %v2045, %v2044
        %v2294 = vpack.c.b16 %v2047, %v2046
        %v2295 = vpack.c.b16 %v2049, %v2048
        %v2296 = vpack.c.b16 %v2051, %v2050
        %v2297 = vpack.c.b16 %v2053, %v2052
        %v2298 = vpack.c.b16 %v2055, %v2054
        %v2299 = vpack.c.b16 %v2057, %v2056
        %v2300 = vpack.c.b16 %v2059, %v2058
        %v2301 = vpack.c.b16 %v2061, %v2060
        %v2302 = vpack.c.b16 %v2063, %v2062
        %v2303 = vpack.c.b16 %v2065, %v2064
        %v2304 = vpack.c.b16 %v2067, %v2066
        %v2305 = vpack.c.b16 %v2069, %v2068
        %v2306 = vpack.c.b16 %v2071, %v2070
        %v2307 = vpack.c.b16 %v2073, %v2072
        %v2308 = vpack.c.b16 %v2075, %v2074
        %v2309 = vpack.c.b16 %v2077, %v2076
        %v2310 = vpack.c.b16 %v2079, %v2078
        %v2311 = vpack.c.b16 %v2081, %v2080
        %v2312 = vpack.c.b16 %v2083, %v2082
        %v2313 = vpack.c.b16 %v2085, %v2084
        %v2314 = vpack.c.b16 %v2087, %v2086
        %v2315 = vpack.c.b16 %v2089, %v2088
        %v2316 = vpack.c.b16 %v2091, %v2090
        %v2317 = vpack.c.b16 %v2093, %v2092
        %v2318 = vpack.c.b16 %v2095, %v2094
        %v2319 = vpack.c.b16 %v2097, %v2096
        %v2320 = vpack.c.b16 %v2099, %v2098
        %v2321 = vpack.c.b16 %v2101, %v2100
        %v2322 = vpack.c.b16 %v2103, %v2102
        %v2323 = vpack.c.b16 %v2105, %v2104
        %v2324 = vpack.c.b16 %v2107, %v2106
        %v2325 = vpack.c.b16 %v2109, %v2108
        %v2326 = vpack.c.b16 %v2111, %v2110
        %v2327 = vpack.c.b16 %v2113, %v2112
        %v2328 = vpack.c.b16 %v2115, %v2114
        %v2329 = vpack.c.b16 %v2117, %v2116
        %v2330 = vpack.c.b16 %v2119, %v2118
        %v2331 = vpack.c.b16 %v2121, %v2120
        %v2332 = vpack.c.b16 %v2123, %v2122
        %v2333 = vpack.c.b16 %v2125, %v2124
        %v2334 = vpack.c.b16 %v2127, %v2126
        %v2335 = vpack.c.b16 %v2129, %v2128
        %v2336 = vpack.c.b16 %v2131, %v2130
        %v2337 = vpack.c.b16 %v2133, %v2132
        %v2338 = vpack.c.b16 %v2135, %v2134
        %v2339 = vpack.c.b16 %v2137, %v2136
        %v2340 = vpack.c.b16 %v2139, %v2138
        %v2341 = vpack.c.b16 %v2141, %v2140
        %v2342 = vpack.c.b16 %v2143, %v2142
        %v2343 = vpack.c.b16 %v2145, %v2144
        %v2344 = vpack.c.b16 %v2147, %v2146
        %v2345 = vpack.c.b16 %v2149, %v2148
        %v2346 = vpack.c.b16 %v2151, %v2150
        %v2347 = vpack.c.b16 %v2153, %v2152
        %v2348 = vpack.c.b16 %v2155, %v2154
        %v2349 = vpack.c.b16 %v2157, %v2156
        %v2350 = vpack.c.b16 %v2159, %v2158
        %v2351 = vpack.c.b16 %v2161, %v2160
        %v2352 = vpack.c.b16 %v2163, %v2162
        %v2353 = vpack.c.b16 %v2165, %v2164
        %v2354 = vpack.c.b16 %v2167, %v2166
        %v2355 = vpack.c.b16 %v2169, %v2168
        %v2356 = vpack.c.b16 %v2171, %v2170
        %v2357 = vpack.c.b16 %v2173, %v2172
        %v2358 = vpack.c.b16 %v2175, %v2174
        %v2359 = vpack.c.b16 %v2177, %v2176
        %v2360 = vpack.c.b16 %v2179, %v2178
        %v2361 = vpack.c.b16 %v2181, %v2180
        %v2362 = vpack.c.b16 %v2183, %v2182
        %v2363 = vpack.c.b16 %v2185, %v2184
        %v2364 = vpack.c.b16 %v2187, %v2186
        %v2365 = vpack.c.b16 %v2189, %v2188
        %v2366 = vpack.c.b16 %v2191, %v2190
        %v2367 = vpack.c.b16 %v2193, %v2192
        %v2368 = vpack.c.b16 %v2195, %v2194
        %v2369 = vpack.c.b16 %v2197, %v2196
        %v2370 = vpack.c.b16 %v2199, %v2198
        %v2371 = vpack.c.b16 %v2201, %v2200
        %v2372 = vpack.c.b16 %v2203, %v2202
        %v2373 = vpack.c.b16 %v2205, %v2204
        %v2374 = vpack.c.b16 %v2207, %v2206
        %v2375 = vpack.c.b16 %v2209, %v2208
        %v2376 = vpack.c.b16 %v2211, %v2210
        %v2377 = vpack.c.b16 %v2213, %v2212
        %v2378 = vpack.c.b16 %v2215, %v2214
        %v2379 = vpack.c.b16 %v2217, %v2216
        %v2380 = vpack.c.b16 %v2219, %v2218
        %v2381 = vpack.c.b16 %v2221, %v2220
        %v2382 = vpack.c.b16 %v2223, %v2222
        %v2383 = vpack.c.b16 %v2225, %v2224
        %v2384 = vpack.c.b16 %v2227, %v2226
        %v2385 = vpack.c.b16 %v2229, %v2228
        %v2386 = vpack.c.b16 %v2231, %v2230
        %v2387 = vpack.c.b16 %v2233, %v2232
        %v2388 = vpack.c.b16 %v2235, %v2234
        %v2389 = vpack.c.b16 %v2237, %v2236
        %v2390 = vpack.c.b16 %v2239, %v2238
        %v2391 = vpack.c.b16 %v2241, %v2240
        %v2392 = vpack.c.b16 %v2243, %v2242
        %v2393 = vpack.c.b16 %v2245, %v2244
        %v2394 = vpack.c.b16 %v2247, %v2246
        %v2395 = vpack.c.b16 %v2249, %v2248
        %v2396 = vpack.c.b16 %v2251, %v2250
        %v2397 = vpack.c.b16 %v2253, %v2252
        %v2398 = vpack.c.b16 %v2255, %v2254
        %v2399 = vpack.c.b16 %v2257, %v2256
        %v2400 = vpack.c.b16 %v2259, %v2258
        %v2401 = vpack.c.b16 %v2261, %v2260
        %v2402 = vpack.c.b16 %v2263, %v2262
        %v2403 = vpack.c.b16 %v2265, %v2264
        %v2404 = vpack.c.b16 %v2267, %v2266
        %v2405 = vpack.c.b16 %v2269, %v2268
        %v2406 = vpack.c.b16 %v2271, %v2270
        %v2407 = vpack.c.b16 %v2273, %v2272
        %v2408 = vpack.c.b16 %v2275, %v2274
        %v2409 = vpack.c.b16 %v2277, %v2276
        %v2410 = vpack.c.b16 %v2279, %v2278
        %v2411 = vpack.c.b16 %v2281, %v2280
        %v2412 = vpack.c.b16 %v2283, %v2282
        %v2413 = vpack.c.b16 %v2285, %v2284
        %2542 = vmatprep.subr.bf16.mxu0 0
        %2543 = vmatpush1.bf16.msra.mxu0 %v2286
        %2544 = vmatprep.subr.bf16.mxu0 0
        %2545 = vmatpush1.bf16.msra.mxu0 %v2287
        %2546 = vmatprep.subr.bf16.mxu0 0
        %2547 = vmatpush1.bf16.msra.mxu0 %v2288
        %2548 = vmatprep.subr.bf16.mxu0 0
        %2549 = vmatpush1.bf16.msra.mxu0 %v2289
        %2550 = vmatprep.subr.bf16.mxu0 0
        %2551 = vmatpush1.bf16.msra.mxu0 %v2290
        %2552 = vmatprep.subr.bf16.mxu0 0
        %2553 = vmatpush1.bf16.msra.mxu0 %v2291
        %2554 = vmatprep.subr.bf16.mxu0 0
        %2555 = vmatpush1.bf16.msra.mxu0 %v2292
        %2556 = vmatprep.subr.bf16.mxu0 0
        %2557 = vmatpush1.bf16.msra.mxu0 %v2293
        %2558 = vmatprep.subr.bf16.mxu0 0
        %2559 = vmatpush1.bf16.msra.mxu0 %v2294
        %2560 = vmatprep.subr.bf16.mxu0 0
        %2561 = vmatpush1.bf16.msra.mxu0 %v2295
        %2562 = vmatprep.subr.bf16.mxu0 0
        %2563 = vmatpush1.bf16.msra.mxu0 %v2296
        %2564 = vmatprep.subr.bf16.mxu0 0
        %2565 = vmatpush1.bf16.msra.mxu0 %v2297
        %2566 = vmatprep.subr.bf16.mxu0 0
        %2567 = vmatpush1.bf16.msra.mxu0 %v2298
        %2568 = vmatprep.subr.bf16.mxu0 0
        %2569 = vmatpush1.bf16.msra.mxu0 %v2299
        %2570 = vmatprep.subr.bf16.mxu0 0
        %2571 = vmatpush1.bf16.msra.mxu0 %v2300
        %2572 = vmatprep.subr.bf16.mxu0 0
        %2573 = vmatpush1.bf16.msra.mxu0 %v2301
        %2574 = vmatprep.mubr.bf16.mxu0 %v1302
        %2575 = vmatmul.mubr.bf16.gmra.mrb[0].mxu0 %v1270
        %v2576 = vpop.f32.mrb[0].mxu0
        %v2577 = vadd.f32 0.0, %v2576
        %v2578 = vpop.f32.mrb[0].mxu0
        %v2579 = vpop.f32.mrb[0].mxu0
        %v2580 = vadd.f32 0.0, %v2579
        %v2581 = vpop.f32.mrb[0].mxu0
        %2582 = vmatprep.mubr.bf16.mxu0 %v1303
        %2583 = vmatmul.mubr.bf16.gmra.mrb[0].mxu0 %v1271
        %v2584 = vpop.f32.mrb[0].mxu0
        %v2585 = vadd.f32 0.0, %v2584
        %v2586 = vpop.f32.mrb[0].mxu0
        %v2587 = vpop.f32.mrb[0].mxu0
        %v2588 = vadd.f32 0.0, %v2587
        %v2589 = vpop.f32.mrb[0].mxu0
        %2590 = vmatprep.mubr.bf16.mxu0 %v1304
        %2591 = vmatmul.mubr.bf16.gmra.mrb[0].mxu0 %v1272
        %v2592 = vpop.f32.mrb[0].mxu0
        %v2593 = vadd.f32 0.0, %v2592
        %v2594 = vpop.f32.mrb[0].mxu0
        %v2595 = vpop.f32.mrb[0].mxu0
        %v2596 = vadd.f32 0.0, %v2595
        %v2597 = vpop.f32.mrb[0].mxu0
        %2598 = vmatprep.mubr.bf16.mxu0 %v1305
        %2599 = vmatmul.mubr.bf16.gmra.mrb[0].mxu0 %v1273
        %v2600 = vpop.f32.mrb[0].mxu0
        %v2601 = vadd.f32 0.0, %v2600
        %v2602 = vpop.f32.mrb[0].mxu0
        %v2603 = vpop.f32.mrb[0].mxu0
        %v2604 = vadd.f32 0.0, %v2603
        %v2605 = vpop.f32.mrb[0].mxu0
        %2606 = vmatprep.mubr.bf16.mxu0 %v1306
        %2607 = vmatmul.mubr.bf16.gmra.mrb[0].mxu0 %v1274
        %v2608 = vpop.f32.mrb[0].mxu0
        %v2609 = vadd.f32 0.0, %v2608
        %v2610 = vpop.f32.mrb[0].mxu0
        %v2611 = vpop.f32.mrb[0].mxu0
        %v2612 = vadd.f32 0.0, %v2611
        %v2613 = vpop.f32.mrb[0].mxu0
        %2614 = vmatprep.mubr.bf16.mxu0 %v1307
        %2615 = vmatmul.mubr.bf16.gmra.mrb[0].mxu0 %v1275
        %v2616 = vpop.f32.mrb[0].mxu0
        %v2617 = vadd.f32 0.0, %v2616
        %v2618 = vpop.f32.mrb[0].mxu0
        %v2619 = vpop.f32.mrb[0].mxu0
        %v2620 = vadd.f32 0.0, %v2619
        %v2621 = vpop.f32.mrb[0].mxu0
        %2622 = vmatprep.mubr.bf16.mxu0 %v1308
        %2623 = vmatmul.mubr.bf16.gmra.mrb[0].mxu0 %v1276
        %v2624 = vpop.f32.mrb[0].mxu0
        %v2625 = vadd.f32 0.0, %v2624
        %v2626 = vpop.f32.mrb[0].mxu0
        %v2627 = vpop.f32.mrb[0].mxu0
        %v2628 = vadd.f32 0.0, %v2627
        %v2629 = vpop.f32.mrb[0].mxu0
        %2630 = vmatprep.mubr.bf16.mxu0 %v1309
        %2631 = vmatmul.mubr.bf16.gmra.mrb[0].mxu0 %v1277
        %v2632 = vpop.f32.mrb[0].mxu0
        %v2633 = vadd.f32 0.0, %v2632
        %v2634 = vpop.f32.mrb[0].mxu0
        %v2635 = vpop.f32.mrb[0].mxu0
        %v2636 = vadd.f32 0.0, %v2635
        %v2637 = vpop.f32.mrb[0].mxu0
        %2638 = vmatprep.mubr.bf16.mxu0 %v1318
        %2639 = vmatmul.mubr.bf16.gmra.mrb[0].mxu0 %v1286
        %v2640 = vpop.f32.mrb[0].mxu0
        %v2641 = vadd.f32 0.0, %v2640
        %v2642 = vpop.f32.mrb[0].mxu0
        %v2643 = vpop.f32.mrb[0].mxu0
        %v2644 = vadd.f32 0.0, %v2643
        %v2645 = vpop.f32.mrb[0].mxu0
        %2646 = vmatprep.mubr.bf16.mxu0 %v1319
        %2647 = vmatmul.mubr.bf16.gmra.mrb[0].mxu0 %v1287
        %v2648 = vpop.f32.mrb[0].mxu0
        %v2649 = vadd.f32 0.0, %v2648
        %v2650 = vpop.f32.mrb[0].mxu0
        %v2651 = vpop.f32.mrb[0].mxu0
        %v2652 = vadd.f32 0.0, %v2651
        %v2653 = vpop.f32.mrb[0].mxu0
        %2654 = vmatprep.mubr.bf16.mxu0 %v1320
        %2655 = vmatmul.mubr.bf16.gmra.mrb[0].mxu0 %v1288
        %v2656 = vpop.f32.mrb[0].mxu0
        %v2657 = vadd.f32 0.0, %v2656
        %v2658 = vpop.f32.mrb[0].mxu0
        %v2659 = vpop.f32.mrb[0].mxu0
        %v2660 = vadd.f32 0.0, %v2659
        %v2661 = vpop.f32.mrb[0].mxu0
        %2662 = vmatprep.mubr.bf16.mxu0 %v1321
        %2663 = vmatmul.mubr.bf16.gmra.mrb[0].mxu0 %v1289
        %v2664 = vpop.f32.mrb[0].mxu0
        %v2665 = vadd.f32 0.0, %v2664
        %v2666 = vpop.f32.mrb[0].mxu0
        %v2667 = vpop.f32.mrb[0].mxu0
        %v2668 = vadd.f32 0.0, %v2667
        %v2669 = vpop.f32.mrb[0].mxu0
        %2670 = vmatprep.mubr.bf16.mxu0 %v1322
        %2671 = vmatmul.mubr.bf16.gmra.mrb[0].mxu0 %v1290
        %v2672 = vpop.f32.mrb[0].mxu0
        %v2673 = vadd.f32 0.0, %v2672
        %v2674 = vpop.f32.mrb[0].mxu0
        %v2675 = vpop.f32.mrb[0].mxu0
        %v2676 = vadd.f32 0.0, %v2675
        %v2677 = vpop.f32.mrb[0].mxu0
        %2678 = vmatprep.mubr.bf16.mxu0 %v1323
        %2679 = vmatmul.mubr.bf16.gmra.mrb[0].mxu0 %v1291
        %v2680 = vpop.f32.mrb[0].mxu0
        %v2681 = vadd.f32 0.0, %v2680
        %v2682 = vpop.f32.mrb[0].mxu0
        %v2683 = vpop.f32.mrb[0].mxu0
        %v2684 = vadd.f32 0.0, %v2683
        %v2685 = vpop.f32.mrb[0].mxu0
        %2686 = vmatprep.mubr.bf16.mxu0 %v1324
        %2687 = vmatmul.mubr.bf16.gmra.mrb[0].mxu0 %v1292
        %v2688 = vpop.f32.mrb[0].mxu0
        %v2689 = vadd.f32 0.0, %v2688
        %v2690 = vpop.f32.mrb[0].mxu0
        %v2691 = vpop.f32.mrb[0].mxu0
        %v2692 = vadd.f32 0.0, %v2691
        %v2693 = vpop.f32.mrb[0].mxu0
        %2694 = vmatprep.mubr.bf16.mxu0 %v1325
        %2695 = vmatmul.mubr.bf16.gmra.mrb[0].mxu0 %v1293
        %v2696 = vpop.f32.mrb[0].mxu0
        %v2697 = vadd.f32 0.0, %v2696
        %v2698 = vpop.f32.mrb[0].mxu0
        %v2699 = vpop.f32.mrb[0].mxu0
        %v2700 = vadd.f32 0.0, %v2699
        %v2701 = vpop.f32.mrb[0].mxu0
        %2702 = vdwg.mxu0
        %2703 = vmatprep.subr.bf16.mxu0 0
        %2704 = vmatpush1.bf16.msra.mxu0 %v2302
        %2705 = vmatprep.subr.bf16.mxu0 0
        %2706 = vmatpush1.bf16.msra.mxu0 %v2303
        %2707 = vmatprep.subr.bf16.mxu0 0
        %2708 = vmatpush1.bf16.msra.mxu0 %v2304
        %2709 = vmatprep.subr.bf16.mxu0 0
        %2710 = vmatpush1.bf16.msra.mxu0 %v2305
        %2711 = vmatprep.subr.bf16.mxu0 0
        %2712 = vmatpush1.bf16.msra.mxu0 %v2306
        %2713 = vmatprep.subr.bf16.mxu0 0
        %2714 = vmatpush1.bf16.msra.mxu0 %v2307
        %2715 = vmatprep.subr.bf16.mxu0 0
        %2716 = vmatpush1.bf16.msra.mxu0 %v2308
        %2717 = vmatprep.subr.bf16.mxu0 0
        %2718 = vmatpush1.bf16.msra.mxu0 %v2309
        %2719 = vmatprep.subr.bf16.mxu0 0
        %2720 = vmatpush1.bf16.msra.mxu0 %v2310
        %2721 = vmatprep.subr.bf16.mxu0 0
        %2722 = vmatpush1.bf16.msra.mxu0 %v2311
        %2723 = vmatprep.subr.bf16.mxu0 0
        %2724 = vmatpush1.bf16.msra.mxu0 %v2312
        %2725 = vmatprep.subr.bf16.mxu0 0
        %2726 = vmatpush1.bf16.msra.mxu0 %v2313
        %2727 = vmatprep.subr.bf16.mxu0 0
        %2728 = vmatpush1.bf16.msra.mxu0 %v2314
        %2729 = vmatprep.subr.bf16.mxu0 0
        %2730 = vmatpush1.bf16.msra.mxu0 %v2315
        %2731 = vmatprep.subr.bf16.mxu0 0
        %2732 = vmatpush1.bf16.msra.mxu0 %v2316
        %2733 = vmatprep.subr.bf16.mxu0 0
        %2734 = vmatpush1.bf16.msra.mxu0 %v2317
        %2735 = vmatprep.mubr.bf16.mxu0 %v1366
        %2736 = vmatmul.mubr.bf16.gmra.mrb[0].mxu0 %v1334
        %v2737 = vpop.f32.mrb[0].mxu0
        %v2738 = vadd.f32 %v2577, %v2737
        %v2739 = vpop.f32.mrb[0].mxu0
        %v2740 = vpop.f32.mrb[0].mxu0
        %v2741 = vadd.f32 %v2580, %v2740
        %v2742 = vpop.f32.mrb[0].mxu0
        %2743 = vmatprep.mubr.bf16.mxu0 %v1367
        %2744 = vmatmul.mubr.bf16.gmra.mrb[0].mxu0 %v1335
        %v2745 = vpop.f32.mrb[0].mxu0
        %v2746 = vadd.f32 %v2585, %v2745
        %v2747 = vpop.f32.mrb[0].mxu0
        %v2748 = vpop.f32.mrb[0].mxu0
        %v2749 = vadd.f32 %v2588, %v2748
        %v2750 = vpop.f32.mrb[0].mxu0
        %2751 = vmatprep.mubr.bf16.mxu0 %v1368
        %2752 = vmatmul.mubr.bf16.gmra.mrb[0].mxu0 %v1336
        %v2753 = vpop.f32.mrb[0].mxu0
        %v2754 = vadd.f32 %v2593, %v2753
        %v2755 = vpop.f32.mrb[0].mxu0
        %v2756 = vpop.f32.mrb[0].mxu0
        %v2757 = vadd.f32 %v2596, %v2756
        %v2758 = vpop.f32.mrb[0].mxu0
        %2759 = vmatprep.mubr.bf16.mxu0 %v1369
        %2760 = vmatmul.mubr.bf16.gmra.mrb[0].mxu0 %v1337
        %v2761 = vpop.f32.mrb[0].mxu0
        %v2762 = vadd.f32 %v2601, %v2761
        %v2763 = vpop.f32.mrb[0].mxu0
        %v2764 = vpop.f32.mrb[0].mxu0
        %v2765 = vadd.f32 %v2604, %v2764
        %v2766 = vpop.f32.mrb[0].mxu0
        %2767 = vmatprep.mubr.bf16.mxu0 %v1370
        %2768 = vmatmul.mubr.bf16.gmra.mrb[0].mxu0 %v1338
        %v2769 = vpop.f32.mrb[0].mxu0
        %v2770 = vadd.f32 %v2609, %v2769
        %v2771 = vpop.f32.mrb[0].mxu0
        %v2772 = vpop.f32.mrb[0].mxu0
        %v2773 = vadd.f32 %v2612, %v2772
        %v2774 = vpop.f32.mrb[0].mxu0
        %2775 = vmatprep.mubr.bf16.mxu0 %v1371
        %2776 = vmatmul.mubr.bf16.gmra.mrb[0].mxu0 %v1339
        %v2777 = vpop.f32.mrb[0].mxu0
        %v2778 = vadd.f32 %v2617, %v2777
        %v2779 = vpop.f32.mrb[0].mxu0
        %v2780 = vpop.f32.mrb[0].mxu0
        %v2781 = vadd.f32 %v2620, %v2780
        %v2782 = vpop.f32.mrb[0].mxu0
        %2783 = vmatprep.mubr.bf16.mxu0 %v1372
        %2784 = vmatmul.mubr.bf16.gmra.mrb[0].mxu0 %v1340
        %v2785 = vpop.f32.mrb[0].mxu0
        %v2786 = vadd.f32 %v2625, %v2785
        %v2787 = vpop.f32.mrb[0].mxu0
        %v2788 = vpop.f32.mrb[0].mxu0
        %v2789 = vadd.f32 %v2628, %v2788
        %v2790 = vpop.f32.mrb[0].mxu0
        %2791 = vmatprep.mubr.bf16.mxu0 %v1373
        %2792 = vmatmul.mubr.bf16.gmra.mrb[0].mxu0 %v1341
        %v2793 = vpop.f32.mrb[0].mxu0
        %v2794 = vadd.f32 %v2633, %v2793
        %v2795 = vpop.f32.mrb[0].mxu0
        %v2796 = vpop.f32.mrb[0].mxu0
        %v2797 = vadd.f32 %v2636, %v2796
        %v2798 = vpop.f32.mrb[0].mxu0
        %2799 = vmatprep.mubr.bf16.mxu0 %v1382
        %2800 = vmatmul.mubr.bf16.gmra.mrb[0].mxu0 %v1350
        %v2801 = vpop.f32.mrb[0].mxu0
        %v2802 = vadd.f32 %v2641, %v2801
        %v2803 = vpop.f32.mrb[0].mxu0
        %v2804 = vpop.f32.mrb[0].mxu0
        %v2805 = vadd.f32 %v2644, %v2804
        %v2806 = vpop.f32.mrb[0].mxu0
        %2807 = vmatprep.mubr.bf16.mxu0 %v1383
        %2808 = vmatmul.mubr.bf16.gmra.mrb[0].mxu0 %v1351
        %v2809 = vpop.f32.mrb[0].mxu0
        %v2810 = vadd.f32 %v2649, %v2809
        %v2811 = vpop.f32.mrb[0].mxu0
        %v2812 = vpop.f32.mrb[0].mxu0
        %v2813 = vadd.f32 %v2652, %v2812
        %v2814 = vpop.f32.mrb[0].mxu0
        %2815 = vmatprep.mubr.bf16.mxu0 %v1384
        %2816 = vmatmul.mubr.bf16.gmra.mrb[0].mxu0 %v1352
        %v2817 = vpop.f32.mrb[0].mxu0
        %v2818 = vadd.f32 %v2657, %v2817
        %v2819 = vpop.f32.mrb[0].mxu0
        %v2820 = vpop.f32.mrb[0].mxu0
        %v2821 = vadd.f32 %v2660, %v2820
        %v2822 = vpop.f32.mrb[0].mxu0
        %2823 = vmatprep.mubr.bf16.mxu0 %v1385
        %2824 = vmatmul.mubr.bf16.gmra.mrb[0].mxu0 %v1353
        %v2825 = vpop.f32.mrb[0].mxu0
        %v2826 = vadd.f32 %v2665, %v2825
        %v2827 = vpop.f32.mrb[0].mxu0
        %v2828 = vpop.f32.mrb[0].mxu0
        %v2829 = vadd.f32 %v2668, %v2828
        %v2830 = vpop.f32.mrb[0].mxu0
        %2831 = vmatprep.mubr.bf16.mxu0 %v1386
        %2832 = vmatmul.mubr.bf16.gmra.mrb[0].mxu0 %v1354
        %v2833 = vpop.f32.mrb[0].mxu0
        %v2834 = vadd.f32 %v2673, %v2833
        %v2835 = vpop.f32.mrb[0].mxu0
        %v2836 = vpop.f32.mrb[0].mxu0
        %v2837 = vadd.f32 %v2676, %v2836
        %v2838 = vpop.f32.mrb[0].mxu0
        %2839 = vmatprep.mubr.bf16.mxu0 %v1387
        %2840 = vmatmul.mubr.bf16.gmra.mrb[0].mxu0 %v1355
        %v2841 = vpop.f32.mrb[0].mxu0
        %v2842 = vadd.f32 %v2681, %v2841
        %v2843 = vpop.f32.mrb[0].mxu0
        %v2844 = vpop.f32.mrb[0].mxu0
        %v2845 = vadd.f32 %v2684, %v2844
        %v2846 = vpop.f32.mrb[0].mxu0
        %2847 = vmatprep.mubr.bf16.mxu0 %v1388
        %2848 = vmatmul.mubr.bf16.gmra.mrb[0].mxu0 %v1356
        %v2849 = vpop.f32.mrb[0].mxu0
        %v2850 = vadd.f32 %v2689, %v2849
        %v2851 = vpop.f32.mrb[0].mxu0
        %v2852 = vpop.f32.mrb[0].mxu0
        %v2853 = vadd.f32 %v2692, %v2852
        %v2854 = vpop.f32.mrb[0].mxu0
        %2855 = vmatprep.mubr.bf16.mxu0 %v1389
        %2856 = vmatmul.mubr.bf16.gmra.mrb[0].mxu0 %v1357
        %v2857 = vpop.f32.mrb[0].mxu0
        %v2858 = vadd.f32 %v2697, %v2857
        %v2859 = vpop.f32.mrb[0].mxu0
        %v2860 = vpop.f32.mrb[0].mxu0
        %v2861 = vadd.f32 %v2700, %v2860
        %v2862 = vpop.f32.mrb[0].mxu0
        %2863 = vdwg.mxu0
        %2864 = vmatprep.subr.bf16.mxu0 0
        %2865 = vmatpush1.bf16.msra.mxu0 %v2318
        %2866 = vmatprep.subr.bf16.mxu0 0
        %2867 = vmatpush1.bf16.msra.mxu0 %v2319
        %2868 = vmatprep.subr.bf16.mxu0 0
        %2869 = vmatpush1.bf16.msra.mxu0 %v2320
        %2870 = vmatprep.subr.bf16.mxu0 0
        %2871 = vmatpush1.bf16.msra.mxu0 %v2321
        %2872 = vmatprep.subr.bf16.mxu0 0
        %2873 = vmatpush1.bf16.msra.mxu0 %v2322
        %2874 = vmatprep.subr.bf16.mxu0 0
        %2875 = vmatpush1.bf16.msra.mxu0 %v2323
        %2876 = vmatprep.subr.bf16.mxu0 0
        %2877 = vmatpush1.bf16.msra.mxu0 %v2324
        %2878 = vmatprep.subr.bf16.mxu0 0
        %2879 = vmatpush1.bf16.msra.mxu0 %v2325
        %2880 = vmatprep.subr.bf16.mxu0 0
        %2881 = vmatpush1.bf16.msra.mxu0 %v2326
        %2882 = vmatprep.subr.bf16.mxu0 0
        %2883 = vmatpush1.bf16.msra.mxu0 %v2327
        %2884 = vmatprep.subr.bf16.mxu0 0
        %2885 = vmatpush1.bf16.msra.mxu0 %v2328
        %2886 = vmatprep.subr.bf16.mxu0 0
        %2887 = vmatpush1.bf16.msra.mxu0 %v2329
        %2888 = vmatprep.subr.bf16.mxu0 0
        %2889 = vmatpush1.bf16.msra.mxu0 %v2330
        %2890 = vmatprep.subr.bf16.mxu0 0
        %2891 = vmatpush1.bf16.msra.mxu0 %v2331
        %2892 = vmatprep.subr.bf16.mxu0 0
        %2893 = vmatpush1.bf16.msra.mxu0 %v2332
        %2894 = vmatprep.subr.bf16.mxu0 0
        %2895 = vmatpush1.bf16.msra.mxu0 %v2333
        %2896 = vmatprep.mubr.bf16.mxu0 %v1430
        %2897 = vmatmul.mubr.bf16.gmra.mrb[0].mxu0 %v1398
        %v2898 = vpop.f32.mrb[0].mxu0
        %v2899 = vadd.f32 %v2738, %v2898
        %v2900 = vpop.f32.mrb[0].mxu0
        %v2901 = vpop.f32.mrb[0].mxu0
        %v2902 = vadd.f32 %v2741, %v2901
        %v2903 = vpop.f32.mrb[0].mxu0
        %2904 = vmatprep.mubr.bf16.mxu0 %v1431
        %2905 = vmatmul.mubr.bf16.gmra.mrb[0].mxu0 %v1399
        %v2906 = vpop.f32.mrb[0].mxu0
        %v2907 = vadd.f32 %v2746, %v2906
        %v2908 = vpop.f32.mrb[0].mxu0
        %v2909 = vpop.f32.mrb[0].mxu0
        %v2910 = vadd.f32 %v2749, %v2909
        %v2911 = vpop.f32.mrb[0].mxu0
        %2912 = vmatprep.mubr.bf16.mxu0 %v1432
        %2913 = vmatmul.mubr.bf16.gmra.mrb[0].mxu0 %v1400
        %v2914 = vpop.f32.mrb[0].mxu0
        %v2915 = vadd.f32 %v2754, %v2914
        %v2916 = vpop.f32.mrb[0].mxu0
        %v2917 = vpop.f32.mrb[0].mxu0
        %v2918 = vadd.f32 %v2757, %v2917
        %v2919 = vpop.f32.mrb[0].mxu0
        %2920 = vmatprep.mubr.bf16.mxu0 %v1433
        %2921 = vmatmul.mubr.bf16.gmra.mrb[0].mxu0 %v1401
        %v2922 = vpop.f32.mrb[0].mxu0
        %v2923 = vadd.f32 %v2762, %v2922
        %v2924 = vpop.f32.mrb[0].mxu0
        %v2925 = vpop.f32.mrb[0].mxu0
        %v2926 = vadd.f32 %v2765, %v2925
        %v2927 = vpop.f32.mrb[0].mxu0
        %2928 = vmatprep.mubr.bf16.mxu0 %v1434
        %2929 = vmatmul.mubr.bf16.gmra.mrb[0].mxu0 %v1402
        %v2930 = vpop.f32.mrb[0].mxu0
        %v2931 = vadd.f32 %v2770, %v2930
        %v2932 = vpop.f32.mrb[0].mxu0
        %v2933 = vpop.f32.mrb[0].mxu0
        %v2934 = vadd.f32 %v2773, %v2933
        %v2935 = vpop.f32.mrb[0].mxu0
        %2936 = vmatprep.mubr.bf16.mxu0 %v1435
        %2937 = vmatmul.mubr.bf16.gmra.mrb[0].mxu0 %v1403
        %v2938 = vpop.f32.mrb[0].mxu0
        %v2939 = vadd.f32 %v2778, %v2938
        %v2940 = vpop.f32.mrb[0].mxu0
        %v2941 = vpop.f32.mrb[0].mxu0
        %v2942 = vadd.f32 %v2781, %v2941
        %v2943 = vpop.f32.mrb[0].mxu0
        %2944 = vmatprep.mubr.bf16.mxu0 %v1436
        %2945 = vmatmul.mubr.bf16.gmra.mrb[0].mxu0 %v1404
        %v2946 = vpop.f32.mrb[0].mxu0
        %v2947 = vadd.f32 %v2786, %v2946
        %v2948 = vpop.f32.mrb[0].mxu0
        %v2949 = vpop.f32.mrb[0].mxu0
        %v2950 = vadd.f32 %v2789, %v2949
        %v2951 = vpop.f32.mrb[0].mxu0
        %2952 = vmatprep.mubr.bf16.mxu0 %v1437
        %2953 = vmatmul.mubr.bf16.gmra.mrb[0].mxu0 %v1405
        %v2954 = vpop.f32.mrb[0].mxu0
        %v2955 = vadd.f32 %v2794, %v2954
        %v2956 = vpop.f32.mrb[0].mxu0
        %v2957 = vpop.f32.mrb[0].mxu0
        %v2958 = vadd.f32 %v2797, %v2957
        %v2959 = vpop.f32.mrb[0].mxu0
        %2960 = vmatprep.mubr.bf16.mxu0 %v1446
        %2961 = vmatmul.mubr.bf16.gmra.mrb[0].mxu0 %v1414
        %v2962 = vpop.f32.mrb[0].mxu0
        %v2963 = vadd.f32 %v2802, %v2962
        %v2964 = vpop.f32.mrb[0].mxu0
        %v2965 = vpop.f32.mrb[0].mxu0
        %v2966 = vadd.f32 %v2805, %v2965
        %v2967 = vpop.f32.mrb[0].mxu0
        %2968 = vmatprep.mubr.bf16.mxu0 %v1447
        %2969 = vmatmul.mubr.bf16.gmra.mrb[0].mxu0 %v1415
        %v2970 = vpop.f32.mrb[0].mxu0
        %v2971 = vadd.f32 %v2810, %v2970
        %v2972 = vpop.f32.mrb[0].mxu0
        %v2973 = vpop.f32.mrb[0].mxu0
        %v2974 = vadd.f32 %v2813, %v2973
        %v2975 = vpop.f32.mrb[0].mxu0
        %2976 = vmatprep.mubr.bf16.mxu0 %v1448
        %2977 = vmatmul.mubr.bf16.gmra.mrb[0].mxu0 %v1416
        %v2978 = vpop.f32.mrb[0].mxu0
        %v2979 = vadd.f32 %v2818, %v2978
        %v2980 = vpop.f32.mrb[0].mxu0
        %v2981 = vpop.f32.mrb[0].mxu0
        %v2982 = vadd.f32 %v2821, %v2981
        %v2983 = vpop.f32.mrb[0].mxu0
        %2984 = vmatprep.mubr.bf16.mxu0 %v1449
        %2985 = vmatmul.mubr.bf16.gmra.mrb[0].mxu0 %v1417
        %v2986 = vpop.f32.mrb[0].mxu0
        %v2987 = vadd.f32 %v2826, %v2986
        %v2988 = vpop.f32.mrb[0].mxu0
        %v2989 = vpop.f32.mrb[0].mxu0
        %v2990 = vadd.f32 %v2829, %v2989
        %v2991 = vpop.f32.mrb[0].mxu0
        %2992 = vmatprep.mubr.bf16.mxu0 %v1450
        %2993 = vmatmul.mubr.bf16.gmra.mrb[0].mxu0 %v1418
        %v2994 = vpop.f32.mrb[0].mxu0
        %v2995 = vadd.f32 %v2834, %v2994
        %v2996 = vpop.f32.mrb[0].mxu0
        %v2997 = vpop.f32.mrb[0].mxu0
        %v2998 = vadd.f32 %v2837, %v2997
        %v2999 = vpop.f32.mrb[0].mxu0
        %3000 = vmatprep.mubr.bf16.mxu0 %v1451
        %3001 = vmatmul.mubr.bf16.gmra.mrb[0].mxu0 %v1419
        %v3002 = vpop.f32.mrb[0].mxu0
        %v3003 = vadd.f32 %v2842, %v3002
        %v3004 = vpop.f32.mrb[0].mxu0
        %v3005 = vpop.f32.mrb[0].mxu0
        %v3006 = vadd.f32 %v2845, %v3005
        %v3007 = vpop.f32.mrb[0].mxu0
        %3008 = vmatprep.mubr.bf16.mxu0 %v1452
        %3009 = vmatmul.mubr.bf16.gmra.mrb[0].mxu0 %v1420
        %v3010 = vpop.f32.mrb[0].mxu0
        %v3011 = vadd.f32 %v2850, %v3010
        %v3012 = vpop.f32.mrb[0].mxu0
        %v3013 = vpop.f32.mrb[0].mxu0
        %v3014 = vadd.f32 %v2853, %v3013
        %v3015 = vpop.f32.mrb[0].mxu0
        %3016 = vmatprep.mubr.bf16.mxu0 %v1453
        %3017 = vmatmul.mubr.bf16.gmra.mrb[0].mxu0 %v1421
        %v3018 = vpop.f32.mrb[0].mxu0
        %v3019 = vadd.f32 %v2858, %v3018
        %v3020 = vpop.f32.mrb[0].mxu0
        %v3021 = vpop.f32.mrb[0].mxu0
        %v3022 = vadd.f32 %v2861, %v3021
        %v3023 = vpop.f32.mrb[0].mxu0
        %3024 = vdwg.mxu0
        %3025 = vmatprep.subr.bf16.mxu0 0
        %3026 = vmatpush1.bf16.msra.mxu0 %v2334
        %3027 = vmatprep.subr.bf16.mxu0 0
        %3028 = vmatpush1.bf16.msra.mxu0 %v2335
        %3029 = vmatprep.subr.bf16.mxu0 0
        %3030 = vmatpush1.bf16.msra.mxu0 %v2336
        %3031 = vmatprep.subr.bf16.mxu0 0
        %3032 = vmatpush1.bf16.msra.mxu0 %v2337
        %3033 = vmatprep.subr.bf16.mxu0 0
        %3034 = vmatpush1.bf16.msra.mxu0 %v2338
        %3035 = vmatprep.subr.bf16.mxu0 0
        %3036 = vmatpush1.bf16.msra.mxu0 %v2339
        %3037 = vmatprep.subr.bf16.mxu0 0
        %3038 = vmatpush1.bf16.msra.mxu0 %v2340
        %3039 = vmatprep.subr.bf16.mxu0 0
        %3040 = vmatpush1.bf16.msra.mxu0 %v2341
        %3041 = vmatprep.subr.bf16.mxu0 0
        %3042 = vmatpush1.bf16.msra.mxu0 %v2342
        %3043 = vmatprep.subr.bf16.mxu0 0
        %3044 = vmatpush1.bf16.msra.mxu0 %v2343
        %3045 = vmatprep.subr.bf16.mxu0 0
        %3046 = vmatpush1.bf16.msra.mxu0 %v2344
        %3047 = vmatprep.subr.bf16.mxu0 0
        %3048 = vmatpush1.bf16.msra.mxu0 %v2345
        %3049 = vmatprep.subr.bf16.mxu0 0
        %3050 = vmatpush1.bf16.msra.mxu0 %v2346
        %3051 = vmatprep.subr.bf16.mxu0 0
        %3052 = vmatpush1.bf16.msra.mxu0 %v2347
        %3053 = vmatprep.subr.bf16.mxu0 0
        %3054 = vmatpush1.bf16.msra.mxu0 %v2348
        %3055 = vmatprep.subr.bf16.mxu0 0
        %3056 = vmatpush1.bf16.msra.mxu0 %v2349
        %3057 = vmatprep.mubr.bf16.mxu0 %v1494
        %3058 = vmatmul.mubr.bf16.gmra.mrb[0].mxu0 %v1462
        %v3059 = vpop.f32.mrb[0].mxu0
        %v3060 = vadd.f32 %v2899, %v3059
        %v3061 = vpop.f32.mrb[0].mxu0
        %v3062 = vpop.f32.mrb[0].mxu0
        %v3063 = vadd.f32 %v2902, %v3062
        %v3064 = vpop.f32.mrb[0].mxu0
        %3065 = vmatprep.mubr.bf16.mxu0 %v1495
        %3066 = vmatmul.mubr.bf16.gmra.mrb[0].mxu0 %v1463
        %v3067 = vpop.f32.mrb[0].mxu0
        %v3068 = vadd.f32 %v2907, %v3067
        %v3069 = vpop.f32.mrb[0].mxu0
        %v3070 = vpop.f32.mrb[0].mxu0
        %v3071 = vadd.f32 %v2910, %v3070
        %v3072 = vpop.f32.mrb[0].mxu0
        %3073 = vmatprep.mubr.bf16.mxu0 %v1496
        %3074 = vmatmul.mubr.bf16.gmra.mrb[0].mxu0 %v1464
        %v3075 = vpop.f32.mrb[0].mxu0
        %v3076 = vadd.f32 %v2915, %v3075
        %v3077 = vpop.f32.mrb[0].mxu0
        %v3078 = vpop.f32.mrb[0].mxu0
        %v3079 = vadd.f32 %v2918, %v3078
        %v3080 = vpop.f32.mrb[0].mxu0
        %3081 = vmatprep.mubr.bf16.mxu0 %v1497
        %3082 = vmatmul.mubr.bf16.gmra.mrb[0].mxu0 %v1465
        %v3083 = vpop.f32.mrb[0].mxu0
        %v3084 = vadd.f32 %v2923, %v3083
        %v3085 = vpop.f32.mrb[0].mxu0
        %v3086 = vpop.f32.mrb[0].mxu0
        %v3087 = vadd.f32 %v2926, %v3086
        %v3088 = vpop.f32.mrb[0].mxu0
        %3089 = vmatprep.mubr.bf16.mxu0 %v1498
        %3090 = vmatmul.mubr.bf16.gmra.mrb[0].mxu0 %v1466
        %v3091 = vpop.f32.mrb[0].mxu0
        %v3092 = vadd.f32 %v2931, %v3091
        %v3093 = vpop.f32.mrb[0].mxu0
        %v3094 = vpop.f32.mrb[0].mxu0
        %v3095 = vadd.f32 %v2934, %v3094
        %v3096 = vpop.f32.mrb[0].mxu0
        %3097 = vmatprep.mubr.bf16.mxu0 %v1499
        %3098 = vmatmul.mubr.bf16.gmra.mrb[0].mxu0 %v1467
        %v3099 = vpop.f32.mrb[0].mxu0
        %v3100 = vadd.f32 %v2939, %v3099
        %v3101 = vpop.f32.mrb[0].mxu0
        %v3102 = vpop.f32.mrb[0].mxu0
        %v3103 = vadd.f32 %v2942, %v3102
        %v3104 = vpop.f32.mrb[0].mxu0
        %3105 = vmatprep.mubr.bf16.mxu0 %v1500
        %3106 = vmatmul.mubr.bf16.gmra.mrb[0].mxu0 %v1468
        %v3107 = vpop.f32.mrb[0].mxu0
        %v3108 = vadd.f32 %v2947, %v3107
        %v3109 = vpop.f32.mrb[0].mxu0
        %v3110 = vpop.f32.mrb[0].mxu0
        %v3111 = vadd.f32 %v2950, %v3110
        %v3112 = vpop.f32.mrb[0].mxu0
        %3113 = vmatprep.mubr.bf16.mxu0 %v1501
        %3114 = vmatmul.mubr.bf16.gmra.mrb[0].mxu0 %v1469
        %v3115 = vpop.f32.mrb[0].mxu0
        %v3116 = vadd.f32 %v2955, %v3115
        %v3117 = vpop.f32.mrb[0].mxu0
        %v3118 = vpop.f32.mrb[0].mxu0
        %v3119 = vadd.f32 %v2958, %v3118
        %v3120 = vpop.f32.mrb[0].mxu0
        %3121 = vmatprep.mubr.bf16.mxu0 %v1510
        %3122 = vmatmul.mubr.bf16.gmra.mrb[0].mxu0 %v1478
        %v3123 = vpop.f32.mrb[0].mxu0
        %v3124 = vadd.f32 %v2963, %v3123
        %v3125 = vpop.f32.mrb[0].mxu0
        %v3126 = vpop.f32.mrb[0].mxu0
        %v3127 = vadd.f32 %v2966, %v3126
        %v3128 = vpop.f32.mrb[0].mxu0
        %3129 = vmatprep.mubr.bf16.mxu0 %v1511
        %3130 = vmatmul.mubr.bf16.gmra.mrb[0].mxu0 %v1479
        %v3131 = vpop.f32.mrb[0].mxu0
        %v3132 = vadd.f32 %v2971, %v3131
        %v3133 = vpop.f32.mrb[0].mxu0
        %v3134 = vpop.f32.mrb[0].mxu0
        %v3135 = vadd.f32 %v2974, %v3134
        %v3136 = vpop.f32.mrb[0].mxu0
        %3137 = vmatprep.mubr.bf16.mxu0 %v1512
        %3138 = vmatmul.mubr.bf16.gmra.mrb[0].mxu0 %v1480
        %v3139 = vpop.f32.mrb[0].mxu0
        %v3140 = vadd.f32 %v2979, %v3139
        %v3141 = vpop.f32.mrb[0].mxu0
        %v3142 = vpop.f32.mrb[0].mxu0
        %v3143 = vadd.f32 %v2982, %v3142
        %v3144 = vpop.f32.mrb[0].mxu0
        %3145 = vmatprep.mubr.bf16.mxu0 %v1513
        %3146 = vmatmul.mubr.bf16.gmra.mrb[0].mxu0 %v1481
        %v3147 = vpop.f32.mrb[0].mxu0
        %v3148 = vadd.f32 %v2987, %v3147
        %v3149 = vpop.f32.mrb[0].mxu0
        %v3150 = vpop.f32.mrb[0].mxu0
        %v3151 = vadd.f32 %v2990, %v3150
        %v3152 = vpop.f32.mrb[0].mxu0
        %3153 = vmatprep.mubr.bf16.mxu0 %v1514
        %3154 = vmatmul.mubr.bf16.gmra.mrb[0].mxu0 %v1482
        %v3155 = vpop.f32.mrb[0].mxu0
        %v3156 = vadd.f32 %v2995, %v3155
        %v3157 = vpop.f32.mrb[0].mxu0
        %v3158 = vpop.f32.mrb[0].mxu0
        %v3159 = vadd.f32 %v2998, %v3158
        %v3160 = vpop.f32.mrb[0].mxu0
        %3161 = vmatprep.mubr.bf16.mxu0 %v1515
        %3162 = vmatmul.mubr.bf16.gmra.mrb[0].mxu0 %v1483
        %v3163 = vpop.f32.mrb[0].mxu0
        %v3164 = vadd.f32 %v3003, %v3163
        %v3165 = vpop.f32.mrb[0].mxu0
        %v3166 = vpop.f32.mrb[0].mxu0
        %v3167 = vadd.f32 %v3006, %v3166
        %v3168 = vpop.f32.mrb[0].mxu0
        %3169 = vmatprep.mubr.bf16.mxu0 %v1516
        %3170 = vmatmul.mubr.bf16.gmra.mrb[0].mxu0 %v1484
        %v3171 = vpop.f32.mrb[0].mxu0
        %v3172 = vadd.f32 %v3011, %v3171
        %v3173 = vpop.f32.mrb[0].mxu0
        %v3174 = vpop.f32.mrb[0].mxu0
        %v3175 = vadd.f32 %v3014, %v3174
        %v3176 = vpop.f32.mrb[0].mxu0
        %3177 = vmatprep.mubr.bf16.mxu0 %v1517
        %3178 = vmatmul.mubr.bf16.gmra.mrb[0].mxu0 %v1485
        %v3179 = vpop.f32.mrb[0].mxu0
        %v3180 = vadd.f32 %v3019, %v3179
        %v3181 = vpop.f32.mrb[0].mxu0
        %v3182 = vpop.f32.mrb[0].mxu0
        %v3183 = vadd.f32 %v3022, %v3182
        %v3184 = vpop.f32.mrb[0].mxu0
        %3185 = vdwg.mxu0
        %3186 = vmatprep.subr.bf16.mxu0 0
        %3187 = vmatpush1.bf16.msra.mxu0 %v2350
        %3188 = vmatprep.subr.bf16.mxu0 0
        %3189 = vmatpush1.bf16.msra.mxu0 %v2351
        %3190 = vmatprep.subr.bf16.mxu0 0
        %3191 = vmatpush1.bf16.msra.mxu0 %v2352
        %3192 = vmatprep.subr.bf16.mxu0 0
        %3193 = vmatpush1.bf16.msra.mxu0 %v2353
        %3194 = vmatprep.subr.bf16.mxu0 0
        %3195 = vmatpush1.bf16.msra.mxu0 %v2354
        %3196 = vmatprep.subr.bf16.mxu0 0
        %3197 = vmatpush1.bf16.msra.mxu0 %v2355
        %3198 = vmatprep.subr.bf16.mxu0 0
        %3199 = vmatpush1.bf16.msra.mxu0 %v2356
        %3200 = vmatprep.subr.bf16.mxu0 0
        %3201 = vmatpush1.bf16.msra.mxu0 %v2357
        %3202 = vmatprep.subr.bf16.mxu0 0
        %3203 = vmatpush1.bf16.msra.mxu0 %v2358
        %3204 = vmatprep.subr.bf16.mxu0 0
        %3205 = vmatpush1.bf16.msra.mxu0 %v2359
        %3206 = vmatprep.subr.bf16.mxu0 0
        %3207 = vmatpush1.bf16.msra.mxu0 %v2360
        %3208 = vmatprep.subr.bf16.mxu0 0
        %3209 = vmatpush1.bf16.msra.mxu0 %v2361
        %3210 = vmatprep.subr.bf16.mxu0 0
        %3211 = vmatpush1.bf16.msra.mxu0 %v2362
        %3212 = vmatprep.subr.bf16.mxu0 0
        %3213 = vmatpush1.bf16.msra.mxu0 %v2363
        %3214 = vmatprep.subr.bf16.mxu0 0
        %3215 = vmatpush1.bf16.msra.mxu0 %v2364
        %3216 = vmatprep.subr.bf16.mxu0 0
        %3217 = vmatpush1.bf16.msra.mxu0 %v2365
        %3218 = vmatprep.mubr.bf16.mxu0 %v1558
        %3219 = vmatmul.mubr.bf16.gmra.mrb[0].mxu0 %v1526
        %v3220 = vpop.f32.mrb[0].mxu0
        %v3221 = vadd.f32 %v3060, %v3220
        %v3222 = vpop.f32.mrb[0].mxu0
        %v3223 = vpop.f32.mrb[0].mxu0
        %v3224 = vadd.f32 %v3063, %v3223
        %v3225 = vpop.f32.mrb[0].mxu0
        %3226 = vmatprep.mubr.bf16.mxu0 %v1559
        %3227 = vmatmul.mubr.bf16.gmra.mrb[0].mxu0 %v1527
        %v3228 = vpop.f32.mrb[0].mxu0
        %v3229 = vadd.f32 %v3068, %v3228
        %v3230 = vpop.f32.mrb[0].mxu0
        %v3231 = vpop.f32.mrb[0].mxu0
        %v3232 = vadd.f32 %v3071, %v3231
        %v3233 = vpop.f32.mrb[0].mxu0
        %3234 = vmatprep.mubr.bf16.mxu0 %v1560
        %3235 = vmatmul.mubr.bf16.gmra.mrb[0].mxu0 %v1528
        %v3236 = vpop.f32.mrb[0].mxu0
        %v3237 = vadd.f32 %v3076, %v3236
        %v3238 = vpop.f32.mrb[0].mxu0
        %v3239 = vpop.f32.mrb[0].mxu0
        %v3240 = vadd.f32 %v3079, %v3239
        %v3241 = vpop.f32.mrb[0].mxu0
        %3242 = vmatprep.mubr.bf16.mxu0 %v1561
        %3243 = vmatmul.mubr.bf16.gmra.mrb[0].mxu0 %v1529
        %v3244 = vpop.f32.mrb[0].mxu0
        %v3245 = vadd.f32 %v3084, %v3244
        %v3246 = vpop.f32.mrb[0].mxu0
        %v3247 = vpop.f32.mrb[0].mxu0
        %v3248 = vadd.f32 %v3087, %v3247
        %v3249 = vpop.f32.mrb[0].mxu0
        %3250 = vmatprep.mubr.bf16.mxu0 %v1562
        %3251 = vmatmul.mubr.bf16.gmra.mrb[0].mxu0 %v1530
        %v3252 = vpop.f32.mrb[0].mxu0
        %v3253 = vadd.f32 %v3092, %v3252
        %v3254 = vpop.f32.mrb[0].mxu0
        %v3255 = vpop.f32.mrb[0].mxu0
        %v3256 = vadd.f32 %v3095, %v3255
        %v3257 = vpop.f32.mrb[0].mxu0
        %3258 = vmatprep.mubr.bf16.mxu0 %v1563
        %3259 = vmatmul.mubr.bf16.gmra.mrb[0].mxu0 %v1531
        %v3260 = vpop.f32.mrb[0].mxu0
        %v3261 = vadd.f32 %v3100, %v3260
        %v3262 = vpop.f32.mrb[0].mxu0
        %v3263 = vpop.f32.mrb[0].mxu0
        %v3264 = vadd.f32 %v3103, %v3263
        %v3265 = vpop.f32.mrb[0].mxu0
        %3266 = vmatprep.mubr.bf16.mxu0 %v1564
        %3267 = vmatmul.mubr.bf16.gmra.mrb[0].mxu0 %v1532
        %v3268 = vpop.f32.mrb[0].mxu0
        %v3269 = vadd.f32 %v3108, %v3268
        %v3270 = vpop.f32.mrb[0].mxu0
        %v3271 = vpop.f32.mrb[0].mxu0
        %v3272 = vadd.f32 %v3111, %v3271
        %v3273 = vpop.f32.mrb[0].mxu0
        %3274 = vmatprep.mubr.bf16.mxu0 %v1565
        %3275 = vmatmul.mubr.bf16.gmra.mrb[0].mxu0 %v1533
        %v3276 = vpop.f32.mrb[0].mxu0
        %v3277 = vadd.f32 %v3116, %v3276
        %v3278 = vpop.f32.mrb[0].mxu0
        %v3279 = vpop.f32.mrb[0].mxu0
        %v3280 = vadd.f32 %v3119, %v3279
        %v3281 = vpop.f32.mrb[0].mxu0
        %3282 = vmatprep.mubr.bf16.mxu0 %v1574
        %3283 = vmatmul.mubr.bf16.gmra.mrb[0].mxu0 %v1542
        %v3284 = vpop.f32.mrb[0].mxu0
        %v3285 = vadd.f32 %v3124, %v3284
        %v3286 = vpop.f32.mrb[0].mxu0
        %v3287 = vpop.f32.mrb[0].mxu0
        %v3288 = vadd.f32 %v3127, %v3287
        %v3289 = vpop.f32.mrb[0].mxu0
        %3290 = vmatprep.mubr.bf16.mxu0 %v1575
        %3291 = vmatmul.mubr.bf16.gmra.mrb[0].mxu0 %v1543
        %v3292 = vpop.f32.mrb[0].mxu0
        %v3293 = vadd.f32 %v3132, %v3292
        %v3294 = vpop.f32.mrb[0].mxu0
        %v3295 = vpop.f32.mrb[0].mxu0
        %v3296 = vadd.f32 %v3135, %v3295
        %v3297 = vpop.f32.mrb[0].mxu0
        %3298 = vmatprep.mubr.bf16.mxu0 %v1576
        %3299 = vmatmul.mubr.bf16.gmra.mrb[0].mxu0 %v1544
        %v3300 = vpop.f32.mrb[0].mxu0
        %v3301 = vadd.f32 %v3140, %v3300
        %v3302 = vpop.f32.mrb[0].mxu0
        %v3303 = vpop.f32.mrb[0].mxu0
        %v3304 = vadd.f32 %v3143, %v3303
        %v3305 = vpop.f32.mrb[0].mxu0
        %3306 = vmatprep.mubr.bf16.mxu0 %v1577
        %3307 = vmatmul.mubr.bf16.gmra.mrb[0].mxu0 %v1545
        %v3308 = vpop.f32.mrb[0].mxu0
        %v3309 = vadd.f32 %v3148, %v3308
        %v3310 = vpop.f32.mrb[0].mxu0
        %v3311 = vpop.f32.mrb[0].mxu0
        %v3312 = vadd.f32 %v3151, %v3311
        %v3313 = vpop.f32.mrb[0].mxu0
        %3314 = vmatprep.mubr.bf16.mxu0 %v1578
        %3315 = vmatmul.mubr.bf16.gmra.mrb[0].mxu0 %v1546
        %v3316 = vpop.f32.mrb[0].mxu0
        %v3317 = vadd.f32 %v3156, %v3316
        %v3318 = vpop.f32.mrb[0].mxu0
        %v3319 = vpop.f32.mrb[0].mxu0
        %v3320 = vadd.f32 %v3159, %v3319
        %v3321 = vpop.f32.mrb[0].mxu0
        %3322 = vmatprep.mubr.bf16.mxu0 %v1579
        %3323 = vmatmul.mubr.bf16.gmra.mrb[0].mxu0 %v1547
        %v3324 = vpop.f32.mrb[0].mxu0
        %v3325 = vadd.f32 %v3164, %v3324
        %v3326 = vpop.f32.mrb[0].mxu0
        %v3327 = vpop.f32.mrb[0].mxu0
        %v3328 = vadd.f32 %v3167, %v3327
        %v3329 = vpop.f32.mrb[0].mxu0
        %3330 = vmatprep.mubr.bf16.mxu0 %v1580
        %3331 = vmatmul.mubr.bf16.gmra.mrb[0].mxu0 %v1548
        %v3332 = vpop.f32.mrb[0].mxu0
        %v3333 = vadd.f32 %v3172, %v3332
        %v3334 = vpop.f32.mrb[0].mxu0
        %v3335 = vpop.f32.mrb[0].mxu0
        %v3336 = vadd.f32 %v3175, %v3335
        %v3337 = vpop.f32.mrb[0].mxu0
        %3338 = vmatprep.mubr.bf16.mxu0 %v1581
        %3339 = vmatmul.mubr.bf16.gmra.mrb[0].mxu0 %v1549
        %v3340 = vpop.f32.mrb[0].mxu0
        %v3341 = vadd.f32 %v3180, %v3340
        %v3342 = vpop.f32.mrb[0].mxu0
        %v3343 = vpop.f32.mrb[0].mxu0
        %v3344 = vadd.f32 %v3183, %v3343
        %v3345 = vpop.f32.mrb[0].mxu0
        %3346 = vdwg.mxu0
        %3347 = vmatprep.subr.bf16.mxu0 0
        %3348 = vmatpush1.bf16.msra.mxu0 %v2366
        %3349 = vmatprep.subr.bf16.mxu0 0
        %3350 = vmatpush1.bf16.msra.mxu0 %v2367
        %3351 = vmatprep.subr.bf16.mxu0 0
        %3352 = vmatpush1.bf16.msra.mxu0 %v2368
        %3353 = vmatprep.subr.bf16.mxu0 0
        %3354 = vmatpush1.bf16.msra.mxu0 %v2369
        %3355 = vmatprep.subr.bf16.mxu0 0
        %3356 = vmatpush1.bf16.msra.mxu0 %v2370
        %3357 = vmatprep.subr.bf16.mxu0 0
        %3358 = vmatpush1.bf16.msra.mxu0 %v2371
        %3359 = vmatprep.subr.bf16.mxu0 0
        %3360 = vmatpush1.bf16.msra.mxu0 %v2372
        %3361 = vmatprep.subr.bf16.mxu0 0
        %3362 = vmatpush1.bf16.msra.mxu0 %v2373
        %3363 = vmatprep.subr.bf16.mxu0 0
        %3364 = vmatpush1.bf16.msra.mxu0 %v2374
        %3365 = vmatprep.subr.bf16.mxu0 0
        %3366 = vmatpush1.bf16.msra.mxu0 %v2375
        %3367 = vmatprep.subr.bf16.mxu0 0
        %3368 = vmatpush1.bf16.msra.mxu0 %v2376
        %3369 = vmatprep.subr.bf16.mxu0 0
        %3370 = vmatpush1.bf16.msra.mxu0 %v2377
        %3371 = vmatprep.subr.bf16.mxu0 0
        %3372 = vmatpush1.bf16.msra.mxu0 %v2378
        %3373 = vmatprep.subr.bf16.mxu0 0
        %3374 = vmatpush1.bf16.msra.mxu0 %v2379
        %3375 = vmatprep.subr.bf16.mxu0 0
        %3376 = vmatpush1.bf16.msra.mxu0 %v2380
        %3377 = vmatprep.subr.bf16.mxu0 0
        %3378 = vmatpush1.bf16.msra.mxu0 %v2381
        %3379 = vmatprep.mubr.bf16.mxu0 %v1622
        %3380 = vmatmul.mubr.bf16.gmra.mrb[0].mxu0 %v1590
        %v3381 = vpop.f32.mrb[0].mxu0
        %v3382 = vadd.f32 %v3221, %v3381
        %v3383 = vpop.f32.mrb[0].mxu0
        %v3384 = vpop.f32.mrb[0].mxu0
        %v3385 = vadd.f32 %v3224, %v3384
        %v3386 = vpop.f32.mrb[0].mxu0
        %3387 = vmatprep.mubr.bf16.mxu0 %v1623
        %3388 = vmatmul.mubr.bf16.gmra.mrb[0].mxu0 %v1591
        %v3389 = vpop.f32.mrb[0].mxu0
        %v3390 = vadd.f32 %v3229, %v3389
        %v3391 = vpop.f32.mrb[0].mxu0
        %v3392 = vpop.f32.mrb[0].mxu0
        %v3393 = vadd.f32 %v3232, %v3392
        %v3394 = vpop.f32.mrb[0].mxu0
        %3395 = vmatprep.mubr.bf16.mxu0 %v1624
        %3396 = vmatmul.mubr.bf16.gmra.mrb[0].mxu0 %v1592
        %v3397 = vpop.f32.mrb[0].mxu0
        %v3398 = vadd.f32 %v3237, %v3397
        %v3399 = vpop.f32.mrb[0].mxu0
        %v3400 = vpop.f32.mrb[0].mxu0
        %v3401 = vadd.f32 %v3240, %v3400
        %v3402 = vpop.f32.mrb[0].mxu0
        %3403 = vmatprep.mubr.bf16.mxu0 %v1625
        %3404 = vmatmul.mubr.bf16.gmra.mrb[0].mxu0 %v1593
        %v3405 = vpop.f32.mrb[0].mxu0
        %v3406 = vadd.f32 %v3245, %v3405
        %v3407 = vpop.f32.mrb[0].mxu0
        %v3408 = vpop.f32.mrb[0].mxu0
        %v3409 = vadd.f32 %v3248, %v3408
        %v3410 = vpop.f32.mrb[0].mxu0
        %3411 = vmatprep.mubr.bf16.mxu0 %v1626
        %3412 = vmatmul.mubr.bf16.gmra.mrb[0].mxu0 %v1594
        %v3413 = vpop.f32.mrb[0].mxu0
        %v3414 = vadd.f32 %v3253, %v3413
        %v3415 = vpop.f32.mrb[0].mxu0
        %v3416 = vpop.f32.mrb[0].mxu0
        %v3417 = vadd.f32 %v3256, %v3416
        %v3418 = vpop.f32.mrb[0].mxu0
        %3419 = vmatprep.mubr.bf16.mxu0 %v1627
        %3420 = vmatmul.mubr.bf16.gmra.mrb[0].mxu0 %v1595
        %v3421 = vpop.f32.mrb[0].mxu0
        %v3422 = vadd.f32 %v3261, %v3421
        %v3423 = vpop.f32.mrb[0].mxu0
        %v3424 = vpop.f32.mrb[0].mxu0
        %v3425 = vadd.f32 %v3264, %v3424
        %v3426 = vpop.f32.mrb[0].mxu0
        %3427 = vmatprep.mubr.bf16.mxu0 %v1628
        %3428 = vmatmul.mubr.bf16.gmra.mrb[0].mxu0 %v1596
        %v3429 = vpop.f32.mrb[0].mxu0
        %v3430 = vadd.f32 %v3269, %v3429
        %v3431 = vpop.f32.mrb[0].mxu0
        %v3432 = vpop.f32.mrb[0].mxu0
        %v3433 = vadd.f32 %v3272, %v3432
        %v3434 = vpop.f32.mrb[0].mxu0
        %3435 = vmatprep.mubr.bf16.mxu0 %v1629
        %3436 = vmatmul.mubr.bf16.gmra.mrb[0].mxu0 %v1597
        %v3437 = vpop.f32.mrb[0].mxu0
        %v3438 = vadd.f32 %v3277, %v3437
        %v3439 = vpop.f32.mrb[0].mxu0
        %v3440 = vpop.f32.mrb[0].mxu0
        %v3441 = vadd.f32 %v3280, %v3440
        %v3442 = vpop.f32.mrb[0].mxu0
        %3443 = vmatprep.mubr.bf16.mxu0 %v1638
        %3444 = vmatmul.mubr.bf16.gmra.mrb[0].mxu0 %v1606
        %v3445 = vpop.f32.mrb[0].mxu0
        %v3446 = vadd.f32 %v3285, %v3445
        %v3447 = vpop.f32.mrb[0].mxu0
        %v3448 = vpop.f32.mrb[0].mxu0
        %v3449 = vadd.f32 %v3288, %v3448
        %v3450 = vpop.f32.mrb[0].mxu0
        %3451 = vmatprep.mubr.bf16.mxu0 %v1639
        %3452 = vmatmul.mubr.bf16.gmra.mrb[0].mxu0 %v1607
        %v3453 = vpop.f32.mrb[0].mxu0
        %v3454 = vadd.f32 %v3293, %v3453
        %v3455 = vpop.f32.mrb[0].mxu0
        %v3456 = vpop.f32.mrb[0].mxu0
        %v3457 = vadd.f32 %v3296, %v3456
        %v3458 = vpop.f32.mrb[0].mxu0
        %3459 = vmatprep.mubr.bf16.mxu0 %v1640
        %3460 = vmatmul.mubr.bf16.gmra.mrb[0].mxu0 %v1608
        %v3461 = vpop.f32.mrb[0].mxu0
        %v3462 = vadd.f32 %v3301, %v3461
        %v3463 = vpop.f32.mrb[0].mxu0
        %v3464 = vpop.f32.mrb[0].mxu0
        %v3465 = vadd.f32 %v3304, %v3464
        %v3466 = vpop.f32.mrb[0].mxu0
        %3467 = vmatprep.mubr.bf16.mxu0 %v1641
        %3468 = vmatmul.mubr.bf16.gmra.mrb[0].mxu0 %v1609
        %v3469 = vpop.f32.mrb[0].mxu0
        %v3470 = vadd.f32 %v3309, %v3469
        %v3471 = vpop.f32.mrb[0].mxu0
        %v3472 = vpop.f32.mrb[0].mxu0
        %v3473 = vadd.f32 %v3312, %v3472
        %v3474 = vpop.f32.mrb[0].mxu0
        %3475 = vmatprep.mubr.bf16.mxu0 %v1642
        %3476 = vmatmul.mubr.bf16.gmra.mrb[0].mxu0 %v1610
        %v3477 = vpop.f32.mrb[0].mxu0
        %v3478 = vadd.f32 %v3317, %v3477
        %v3479 = vpop.f32.mrb[0].mxu0
        %v3480 = vpop.f32.mrb[0].mxu0
        %v3481 = vadd.f32 %v3320, %v3480
        %v3482 = vpop.f32.mrb[0].mxu0
        %3483 = vmatprep.mubr.bf16.mxu0 %v1643
        %3484 = vmatmul.mubr.bf16.gmra.mrb[0].mxu0 %v1611
        %v3485 = vpop.f32.mrb[0].mxu0
        %v3486 = vadd.f32 %v3325, %v3485
        %v3487 = vpop.f32.mrb[0].mxu0
        %v3488 = vpop.f32.mrb[0].mxu0
        %v3489 = vadd.f32 %v3328, %v3488
        %v3490 = vpop.f32.mrb[0].mxu0
        %3491 = vmatprep.mubr.bf16.mxu0 %v1644
        %3492 = vmatmul.mubr.bf16.gmra.mrb[0].mxu0 %v1612
        %v3493 = vpop.f32.mrb[0].mxu0
        %v3494 = vadd.f32 %v3333, %v3493
        %v3495 = vpop.f32.mrb[0].mxu0
        %v3496 = vpop.f32.mrb[0].mxu0
        %v3497 = vadd.f32 %v3336, %v3496
        %v3498 = vpop.f32.mrb[0].mxu0
        %3499 = vmatprep.mubr.bf16.mxu0 %v1645
        %3500 = vmatmul.mubr.bf16.gmra.mrb[0].mxu0 %v1613
        %v3501 = vpop.f32.mrb[0].mxu0
        %v3502 = vadd.f32 %v3341, %v3501
        %v3503 = vpop.f32.mrb[0].mxu0
        %v3504 = vpop.f32.mrb[0].mxu0
        %v3505 = vadd.f32 %v3344, %v3504
        %v3506 = vpop.f32.mrb[0].mxu0
        %3507 = vdwg.mxu0
        %3508 = vmatprep.subr.bf16.mxu0 0
        %3509 = vmatpush1.bf16.msra.mxu0 %v2382
        %3510 = vmatprep.subr.bf16.mxu0 0
        %3511 = vmatpush1.bf16.msra.mxu0 %v2383
        %3512 = vmatprep.subr.bf16.mxu0 0
        %3513 = vmatpush1.bf16.msra.mxu0 %v2384
        %3514 = vmatprep.subr.bf16.mxu0 0
        %3515 = vmatpush1.bf16.msra.mxu0 %v2385
        %3516 = vmatprep.subr.bf16.mxu0 0
        %3517 = vmatpush1.bf16.msra.mxu0 %v2386
        %3518 = vmatprep.subr.bf16.mxu0 0
        %3519 = vmatpush1.bf16.msra.mxu0 %v2387
        %3520 = vmatprep.subr.bf16.mxu0 0
        %3521 = vmatpush1.bf16.msra.mxu0 %v2388
        %3522 = vmatprep.subr.bf16.mxu0 0
        %3523 = vmatpush1.bf16.msra.mxu0 %v2389
        %3524 = vmatprep.subr.bf16.mxu0 0
        %3525 = vmatpush1.bf16.msra.mxu0 %v2390
        %3526 = vmatprep.subr.bf16.mxu0 0
        %3527 = vmatpush1.bf16.msra.mxu0 %v2391
        %3528 = vmatprep.subr.bf16.mxu0 0
        %3529 = vmatpush1.bf16.msra.mxu0 %v2392
        %3530 = vmatprep.subr.bf16.mxu0 0
        %3531 = vmatpush1.bf16.msra.mxu0 %v2393
        %3532 = vmatprep.subr.bf16.mxu0 0
        %3533 = vmatpush1.bf16.msra.mxu0 %v2394
        %3534 = vmatprep.subr.bf16.mxu0 0
        %3535 = vmatpush1.bf16.msra.mxu0 %v2395
        %3536 = vmatprep.subr.bf16.mxu0 0
        %3537 = vmatpush1.bf16.msra.mxu0 %v2396
        %3538 = vmatprep.subr.bf16.mxu0 0
        %3539 = vmatpush1.bf16.msra.mxu0 %v2397
        %3540 = vmatprep.mubr.bf16.mxu0 %v1686
        %3541 = vmatmul.mubr.bf16.gmra.mrb[0].mxu0 %v1654
        %v3542 = vpop.f32.mrb[0].mxu0
        %v3543 = vadd.f32 %v3382, %v3542
        %v3544 = vpop.f32.mrb[0].mxu0
        %v3545 = vpop.f32.mrb[0].mxu0
        %v3546 = vadd.f32 %v3385, %v3545
        %v3547 = vpop.f32.mrb[0].mxu0
        %3548 = vmatprep.mubr.bf16.mxu0 %v1687
        %3549 = vmatmul.mubr.bf16.gmra.mrb[0].mxu0 %v1655
        %v3550 = vpop.f32.mrb[0].mxu0
        %v3551 = vadd.f32 %v3390, %v3550
        %v3552 = vpop.f32.mrb[0].mxu0
        %v3553 = vpop.f32.mrb[0].mxu0
        %v3554 = vadd.f32 %v3393, %v3553
        %v3555 = vpop.f32.mrb[0].mxu0
        %3556 = vmatprep.mubr.bf16.mxu0 %v1688
        %3557 = vmatmul.mubr.bf16.gmra.mrb[0].mxu0 %v1656
        %v3558 = vpop.f32.mrb[0].mxu0
        %v3559 = vadd.f32 %v3398, %v3558
        %v3560 = vpop.f32.mrb[0].mxu0
        %v3561 = vpop.f32.mrb[0].mxu0
        %v3562 = vadd.f32 %v3401, %v3561
        %v3563 = vpop.f32.mrb[0].mxu0
        %3564 = vmatprep.mubr.bf16.mxu0 %v1689
        %3565 = vmatmul.mubr.bf16.gmra.mrb[0].mxu0 %v1657
        %v3566 = vpop.f32.mrb[0].mxu0
        %v3567 = vadd.f32 %v3406, %v3566
        %v3568 = vpop.f32.mrb[0].mxu0
        %v3569 = vpop.f32.mrb[0].mxu0
        %v3570 = vadd.f32 %v3409, %v3569
        %v3571 = vpop.f32.mrb[0].mxu0
        %3572 = vmatprep.mubr.bf16.mxu0 %v1690
        %3573 = vmatmul.mubr.bf16.gmra.mrb[0].mxu0 %v1658
        %v3574 = vpop.f32.mrb[0].mxu0
        %v3575 = vadd.f32 %v3414, %v3574
        %v3576 = vpop.f32.mrb[0].mxu0
        %v3577 = vpop.f32.mrb[0].mxu0
        %v3578 = vadd.f32 %v3417, %v3577
        %v3579 = vpop.f32.mrb[0].mxu0
        %3580 = vmatprep.mubr.bf16.mxu0 %v1691
        %3581 = vmatmul.mubr.bf16.gmra.mrb[0].mxu0 %v1659
        %v3582 = vpop.f32.mrb[0].mxu0
        %v3583 = vadd.f32 %v3422, %v3582
        %v3584 = vpop.f32.mrb[0].mxu0
        %v3585 = vpop.f32.mrb[0].mxu0
        %v3586 = vadd.f32 %v3425, %v3585
        %v3587 = vpop.f32.mrb[0].mxu0
        %3588 = vmatprep.mubr.bf16.mxu0 %v1692
        %3589 = vmatmul.mubr.bf16.gmra.mrb[0].mxu0 %v1660
        %v3590 = vpop.f32.mrb[0].mxu0
        %v3591 = vadd.f32 %v3430, %v3590
        %v3592 = vpop.f32.mrb[0].mxu0
        %v3593 = vpop.f32.mrb[0].mxu0
        %v3594 = vadd.f32 %v3433, %v3593
        %v3595 = vpop.f32.mrb[0].mxu0
        %3596 = vmatprep.mubr.bf16.mxu0 %v1693
        %3597 = vmatmul.mubr.bf16.gmra.mrb[0].mxu0 %v1661
        %v3598 = vpop.f32.mrb[0].mxu0
        %v3599 = vadd.f32 %v3438, %v3598
        %v3600 = vpop.f32.mrb[0].mxu0
        %v3601 = vpop.f32.mrb[0].mxu0
        %v3602 = vadd.f32 %v3441, %v3601
        %v3603 = vpop.f32.mrb[0].mxu0
        %3604 = vmatprep.mubr.bf16.mxu0 %v1702
        %3605 = vmatmul.mubr.bf16.gmra.mrb[0].mxu0 %v1670
        %v3606 = vpop.f32.mrb[0].mxu0
        %v3607 = vadd.f32 %v3446, %v3606
        %v3608 = vpop.f32.mrb[0].mxu0
        %v3609 = vpop.f32.mrb[0].mxu0
        %v3610 = vadd.f32 %v3449, %v3609
        %v3611 = vpop.f32.mrb[0].mxu0
        %3612 = vmatprep.mubr.bf16.mxu0 %v1703
        %3613 = vmatmul.mubr.bf16.gmra.mrb[0].mxu0 %v1671
        %v3614 = vpop.f32.mrb[0].mxu0
        %v3615 = vadd.f32 %v3454, %v3614
        %v3616 = vpop.f32.mrb[0].mxu0
        %v3617 = vpop.f32.mrb[0].mxu0
        %v3618 = vadd.f32 %v3457, %v3617
        %v3619 = vpop.f32.mrb[0].mxu0
        %3620 = vmatprep.mubr.bf16.mxu0 %v1704
        %3621 = vmatmul.mubr.bf16.gmra.mrb[0].mxu0 %v1672
        %v3622 = vpop.f32.mrb[0].mxu0
        %v3623 = vadd.f32 %v3462, %v3622
        %v3624 = vpop.f32.mrb[0].mxu0
        %v3625 = vpop.f32.mrb[0].mxu0
        %v3626 = vadd.f32 %v3465, %v3625
        %v3627 = vpop.f32.mrb[0].mxu0
        %3628 = vmatprep.mubr.bf16.mxu0 %v1705
        %3629 = vmatmul.mubr.bf16.gmra.mrb[0].mxu0 %v1673
        %v3630 = vpop.f32.mrb[0].mxu0
        %v3631 = vadd.f32 %v3470, %v3630
        %v3632 = vpop.f32.mrb[0].mxu0
        %v3633 = vpop.f32.mrb[0].mxu0
        %v3634 = vadd.f32 %v3473, %v3633
        %v3635 = vpop.f32.mrb[0].mxu0
        %3636 = vmatprep.mubr.bf16.mxu0 %v1706
        %3637 = vmatmul.mubr.bf16.gmra.mrb[0].mxu0 %v1674
        %v3638 = vpop.f32.mrb[0].mxu0
        %v3639 = vadd.f32 %v3478, %v3638
        %v3640 = vpop.f32.mrb[0].mxu0
        %v3641 = vpop.f32.mrb[0].mxu0
        %v3642 = vadd.f32 %v3481, %v3641
        %v3643 = vpop.f32.mrb[0].mxu0
        %3644 = vmatprep.mubr.bf16.mxu0 %v1707
        %3645 = vmatmul.mubr.bf16.gmra.mrb[0].mxu0 %v1675
        %v3646 = vpop.f32.mrb[0].mxu0
        %v3647 = vadd.f32 %v3486, %v3646
        %v3648 = vpop.f32.mrb[0].mxu0
        %v3649 = vpop.f32.mrb[0].mxu0
        %v3650 = vadd.f32 %v3489, %v3649
        %v3651 = vpop.f32.mrb[0].mxu0
        %3652 = vmatprep.mubr.bf16.mxu0 %v1708
        %3653 = vmatmul.mubr.bf16.gmra.mrb[0].mxu0 %v1676
        %v3654 = vpop.f32.mrb[0].mxu0
        %v3655 = vadd.f32 %v3494, %v3654
        %v3656 = vpop.f32.mrb[0].mxu0
        %v3657 = vpop.f32.mrb[0].mxu0
        %v3658 = vadd.f32 %v3497, %v3657
        %v3659 = vpop.f32.mrb[0].mxu0
        %3660 = vmatprep.mubr.bf16.mxu0 %v1709
        %3661 = vmatmul.mubr.bf16.gmra.mrb[0].mxu0 %v1677
        %v3662 = vpop.f32.mrb[0].mxu0
        %v3663 = vadd.f32 %v3502, %v3662
        %v3664 = vpop.f32.mrb[0].mxu0
        %v3665 = vpop.f32.mrb[0].mxu0
        %v3666 = vadd.f32 %v3505, %v3665
        %v3667 = vpop.f32.mrb[0].mxu0
        %3668 = vdwg.mxu0
        %3669 = vmatprep.subr.bf16.mxu0 0
        %3670 = vmatpush1.bf16.msra.mxu0 %v2398
        %3671 = vmatprep.subr.bf16.mxu0 0
        %3672 = vmatpush1.bf16.msra.mxu0 %v2399
        %3673 = vmatprep.subr.bf16.mxu0 0
        %3674 = vmatpush1.bf16.msra.mxu0 %v2400
        %3675 = vmatprep.subr.bf16.mxu0 0
        %3676 = vmatpush1.bf16.msra.mxu0 %v2401
        %3677 = vmatprep.subr.bf16.mxu0 0
        %3678 = vmatpush1.bf16.msra.mxu0 %v2402
        %3679 = vmatprep.subr.bf16.mxu0 0
        %3680 = vmatpush1.bf16.msra.mxu0 %v2403
        %3681 = vmatprep.subr.bf16.mxu0 0
        %3682 = vmatpush1.bf16.msra.mxu0 %v2404
        %3683 = vmatprep.subr.bf16.mxu0 0
        %3684 = vmatpush1.bf16.msra.mxu0 %v2405
        %3685 = vmatprep.subr.bf16.mxu0 0
        %3686 = vmatpush1.bf16.msra.mxu0 %v2406
        %3687 = vmatprep.subr.bf16.mxu0 0
        %3688 = vmatpush1.bf16.msra.mxu0 %v2407
        %3689 = vmatprep.subr.bf16.mxu0 0
        %3690 = vmatpush1.bf16.msra.mxu0 %v2408
        %3691 = vmatprep.subr.bf16.mxu0 0
        %3692 = vmatpush1.bf16.msra.mxu0 %v2409
        %3693 = vmatprep.subr.bf16.mxu0 0
        %3694 = vmatpush1.bf16.msra.mxu0 %v2410
        %3695 = vmatprep.subr.bf16.mxu0 0
        %3696 = vmatpush1.bf16.msra.mxu0 %v2411
        %3697 = vmatprep.subr.bf16.mxu0 0
        %3698 = vmatpush1.bf16.msra.mxu0 %v2412
        %3699 = vmatprep.subr.bf16.mxu0 0
        %3700 = vmatpush1.bf16.msra.mxu0 %v2413
        %3701 = vmatprep.mubr.bf16.mxu0 %v1750
        %3702 = vmatmul.mubr.bf16.gmra.mrb[0].mxu0 %v1718
        %v3703 = vpop.f32.mrb[0].mxu0
        %v3704 = vadd.f32 %v3543, %v3703
        %v3705 = vpop.f32.mrb[0].mxu0
        %v3706 = vpop.f32.mrb[0].mxu0
        %v3707 = vadd.f32 %v3546, %v3706
        %v3708 = vpop.f32.mrb[0].mxu0
        %3709 = vmatprep.mubr.bf16.mxu0 %v1751
        %3710 = vmatmul.mubr.bf16.gmra.mrb[0].mxu0 %v1719
        %v3711 = vpop.f32.mrb[0].mxu0
        %v3712 = vadd.f32 %v3551, %v3711
        %v3713 = vpop.f32.mrb[0].mxu0
        %v3714 = vpop.f32.mrb[0].mxu0
        %v3715 = vadd.f32 %v3554, %v3714
        %v3716 = vpop.f32.mrb[0].mxu0
        %3717 = vmatprep.mubr.bf16.mxu0 %v1752
        %3718 = vmatmul.mubr.bf16.gmra.mrb[0].mxu0 %v1720
        %v3719 = vpop.f32.mrb[0].mxu0
        %v3720 = vadd.f32 %v3559, %v3719
        %v3721 = vpop.f32.mrb[0].mxu0
        %v3722 = vpop.f32.mrb[0].mxu0
        %v3723 = vadd.f32 %v3562, %v3722
        %v3724 = vpop.f32.mrb[0].mxu0
        %3725 = vmatprep.mubr.bf16.mxu0 %v1753
        %3726 = vmatmul.mubr.bf16.gmra.mrb[0].mxu0 %v1721
        %v3727 = vpop.f32.mrb[0].mxu0
        %v3728 = vadd.f32 %v3567, %v3727
        %v3729 = vpop.f32.mrb[0].mxu0
        %v3730 = vpop.f32.mrb[0].mxu0
        %v3731 = vadd.f32 %v3570, %v3730
        %v3732 = vpop.f32.mrb[0].mxu0
        %3733 = vmatprep.mubr.bf16.mxu0 %v1754
        %3734 = vmatmul.mubr.bf16.gmra.mrb[0].mxu0 %v1722
        %v3735 = vpop.f32.mrb[0].mxu0
        %v3736 = vadd.f32 %v3575, %v3735
        %v3737 = vpop.f32.mrb[0].mxu0
        %v3738 = vpop.f32.mrb[0].mxu0
        %v3739 = vadd.f32 %v3578, %v3738
        %v3740 = vpop.f32.mrb[0].mxu0
        %3741 = vmatprep.mubr.bf16.mxu0 %v1755
        %3742 = vmatmul.mubr.bf16.gmra.mrb[0].mxu0 %v1723
        %v3743 = vpop.f32.mrb[0].mxu0
        %v3744 = vadd.f32 %v3583, %v3743
        %v3745 = vpop.f32.mrb[0].mxu0
        %v3746 = vpop.f32.mrb[0].mxu0
        %v3747 = vadd.f32 %v3586, %v3746
        %v3748 = vpop.f32.mrb[0].mxu0
        %3749 = vmatprep.mubr.bf16.mxu0 %v1756
        %3750 = vmatmul.mubr.bf16.gmra.mrb[0].mxu0 %v1724
        %v3751 = vpop.f32.mrb[0].mxu0
        %v3752 = vadd.f32 %v3591, %v3751
        %v3753 = vpop.f32.mrb[0].mxu0
        %v3754 = vpop.f32.mrb[0].mxu0
        %v3755 = vadd.f32 %v3594, %v3754
        %v3756 = vpop.f32.mrb[0].mxu0
        %3757 = vmatprep.mubr.bf16.mxu0 %v1757
        %3758 = vmatmul.mubr.bf16.gmra.mrb[0].mxu0 %v1725
        %v3759 = vpop.f32.mrb[0].mxu0
        %v3760 = vadd.f32 %v3599, %v3759
        %v3761 = vpop.f32.mrb[0].mxu0
        %v3762 = vpop.f32.mrb[0].mxu0
        %v3763 = vadd.f32 %v3602, %v3762
        %v3764 = vpop.f32.mrb[0].mxu0
        %3765 = vmatprep.mubr.bf16.mxu0 %v1766
        %3766 = vmatmul.mubr.bf16.gmra.mrb[0].mxu0 %v1734
        %v3767 = vpop.f32.mrb[0].mxu0
        %v3768 = vadd.f32 %v3607, %v3767
        %v3769 = vpop.f32.mrb[0].mxu0
        %v3770 = vpop.f32.mrb[0].mxu0
        %v3771 = vadd.f32 %v3610, %v3770
        %v3772 = vpop.f32.mrb[0].mxu0
        %3773 = vmatprep.mubr.bf16.mxu0 %v1767
        %3774 = vmatmul.mubr.bf16.gmra.mrb[0].mxu0 %v1735
        %v3775 = vpop.f32.mrb[0].mxu0
        %v3776 = vadd.f32 %v3615, %v3775
        %v3777 = vpop.f32.mrb[0].mxu0
        %v3778 = vpop.f32.mrb[0].mxu0
        %v3779 = vadd.f32 %v3618, %v3778
        %v3780 = vpop.f32.mrb[0].mxu0
        %3781 = vmatprep.mubr.bf16.mxu0 %v1768
        %3782 = vmatmul.mubr.bf16.gmra.mrb[0].mxu0 %v1736
        %v3783 = vpop.f32.mrb[0].mxu0
        %v3784 = vadd.f32 %v3623, %v3783
        %v3785 = vpop.f32.mrb[0].mxu0
        %v3786 = vpop.f32.mrb[0].mxu0
        %v3787 = vadd.f32 %v3626, %v3786
        %v3788 = vpop.f32.mrb[0].mxu0
        %3789 = vmatprep.mubr.bf16.mxu0 %v1769
        %3790 = vmatmul.mubr.bf16.gmra.mrb[0].mxu0 %v1737
        %v3791 = vpop.f32.mrb[0].mxu0
        %v3792 = vadd.f32 %v3631, %v3791
        %v3793 = vpop.f32.mrb[0].mxu0
        %v3794 = vpop.f32.mrb[0].mxu0
        %v3795 = vadd.f32 %v3634, %v3794
        %v3796 = vpop.f32.mrb[0].mxu0
        %3797 = vmatprep.mubr.bf16.mxu0 %v1770
        %3798 = vmatmul.mubr.bf16.gmra.mrb[0].mxu0 %v1738
        %v3799 = vpop.f32.mrb[0].mxu0
        %v3800 = vadd.f32 %v3639, %v3799
        %v3801 = vpop.f32.mrb[0].mxu0
        %v3802 = vpop.f32.mrb[0].mxu0
        %v3803 = vadd.f32 %v3642, %v3802
        %v3804 = vpop.f32.mrb[0].mxu0
        %3805 = vmatprep.mubr.bf16.mxu0 %v1771
        %3806 = vmatmul.mubr.bf16.gmra.mrb[0].mxu0 %v1739
        %v3807 = vpop.f32.mrb[0].mxu0
        %v3808 = vadd.f32 %v3647, %v3807
        %v3809 = vpop.f32.mrb[0].mxu0
        %v3810 = vpop.f32.mrb[0].mxu0
        %v3811 = vadd.f32 %v3650, %v3810
        %v3812 = vpop.f32.mrb[0].mxu0
        %3813 = vmatprep.mubr.bf16.mxu0 %v1772
        %3814 = vmatmul.mubr.bf16.gmra.mrb[0].mxu0 %v1740
        %v3815 = vpop.f32.mrb[0].mxu0
        %v3816 = vadd.f32 %v3655, %v3815
        %v3817 = vpop.f32.mrb[0].mxu0
        %v3818 = vpop.f32.mrb[0].mxu0
        %v3819 = vadd.f32 %v3658, %v3818
        %v3820 = vpop.f32.mrb[0].mxu0
        %3821 = vmatprep.mubr.bf16.mxu0 %v1773
        %3822 = vmatmul.mubr.bf16.gmra.mrb[0].mxu0 %v1741
        %v3823 = vpop.f32.mrb[0].mxu0
        %v3824 = vadd.f32 %v3663, %v3823
        %v3825 = vpop.f32.mrb[0].mxu0
        %v3826 = vpop.f32.mrb[0].mxu0
        %v3827 = vadd.f32 %v3666, %v3826
        %v3828 = vpop.f32.mrb[0].mxu0
        %3829 = vdwg.mxu0
        %v3830 = vpack.c.bf16 %v3707, %v3704
        %v3831 = vpack.c.bf16 %v3715, %v3712
        %v3832 = vpack.c.bf16 %v3723, %v3720
        %v3833 = vpack.c.bf16 %v3731, %v3728
        %v3834 = vpack.c.bf16 %v3739, %v3736
        %v3835 = vpack.c.bf16 %v3747, %v3744
        %v3836 = vpack.c.bf16 %v3755, %v3752
        %v3837 = vpack.c.bf16 %v3763, %v3760
        %v3838 = vpack.c.bf16 %v3771, %v3768
        %v3839 = vpack.c.bf16 %v3779, %v3776
        %v3840 = vpack.c.bf16 %v3787, %v3784
        %v3841 = vpack.c.bf16 %v3795, %v3792
        %v3842 = vpack.c.bf16 %v3803, %v3800
        %v3843 = vpack.c.bf16 %v3811, %v3808
        %v3844 = vpack.c.bf16 %v3819, %v3816
        %v3845 = vpack.c.bf16 %v3827, %v3824
        %v3862 = vunpack.c.l.b16 %v3830
        %v3863 = vunpack.c.h.b16 %v3830
        %v3864 = vunpack.c.l.b16 %v3831
        %v3865 = vunpack.c.h.b16 %v3831
        %v3866 = vunpack.c.l.b16 %v3832
        %v3867 = vunpack.c.h.b16 %v3832
        %v3868 = vunpack.c.l.b16 %v3833
        %v3869 = vunpack.c.h.b16 %v3833
        %v3870 = vunpack.c.l.b16 %v3834
        %v3871 = vunpack.c.h.b16 %v3834
        %v3872 = vunpack.c.l.b16 %v3835
        %v3873 = vunpack.c.h.b16 %v3835
        %v3874 = vunpack.c.l.b16 %v3836
        %v3875 = vunpack.c.h.b16 %v3836
        %v3876 = vunpack.c.l.b16 %v3837
        %v3877 = vunpack.c.h.b16 %v3837
        %v3878 = vunpack.c.l.b16 %v3838
        %v3879 = vunpack.c.h.b16 %v3838
        %v3880 = vunpack.c.l.b16 %v3839
        %v3881 = vunpack.c.h.b16 %v3839
        %v3882 = vunpack.c.l.b16 %v3840
        %v3883 = vunpack.c.h.b16 %v3840
        %v3884 = vunpack.c.l.b16 %v3841
        %v3885 = vunpack.c.h.b16 %v3841
        %v3886 = vunpack.c.l.b16 %v3842
        %v3887 = vunpack.c.h.b16 %v3842
        %v3888 = vunpack.c.l.b16 %v3843
        %v3889 = vunpack.c.h.b16 %v3843
        %v3890 = vunpack.c.l.b16 %v3844
        %v3891 = vunpack.c.h.b16 %v3844
        %v3892 = vunpack.c.l.b16 %v3845
        %v3893 = vunpack.c.h.b16 %v3845
        %v3894 = vpack.c.b16 %v3862, %v3862
        %v3895 = vpack.c.b16 %v3863, %v3863
        %v3896 = vpack.c.b16 %v3864, %v3864
        %v3897 = vpack.c.b16 %v3865, %v3865
        %v3898 = vpack.c.b16 %v3866, %v3866
        %v3899 = vpack.c.b16 %v3867, %v3867
        %v3900 = vpack.c.b16 %v3868, %v3868
        %v3901 = vpack.c.b16 %v3869, %v3869
        %v3902 = vpack.c.b16 %v3870, %v3870
        %v3903 = vpack.c.b16 %v3871, %v3871
        %v3904 = vpack.c.b16 %v3872, %v3872
        %v3905 = vpack.c.b16 %v3873, %v3873
        %v3906 = vpack.c.b16 %v3874, %v3874
        %v3907 = vpack.c.b16 %v3875, %v3875
        %v3908 = vpack.c.b16 %v3876, %v3876
        %v3909 = vpack.c.b16 %v3877, %v3877
        %v3910 = vpack.c.b16 %v3878, %v3878
        %v3911 = vpack.c.b16 %v3879, %v3879
        %v3912 = vpack.c.b16 %v3880, %v3880
        %v3913 = vpack.c.b16 %v3881, %v3881
        %v3914 = vpack.c.b16 %v3882, %v3882
        %v3915 = vpack.c.b16 %v3883, %v3883
        %v3916 = vpack.c.b16 %v3884, %v3884
        %v3917 = vpack.c.b16 %v3885, %v3885
        %v3918 = vpack.c.b16 %v3886, %v3886
        %v3919 = vpack.c.b16 %v3887, %v3887
        %v3920 = vpack.c.b16 %v3888, %v3888
        %v3921 = vpack.c.b16 %v3889, %v3889
        %v3922 = vpack.c.b16 %v3890, %v3890
        %v3923 = vpack.c.b16 %v3891, %v3891
        %v3924 = vpack.c.b16 %v3892, %v3892
        %v3925 = vpack.c.b16 %v3893, %v3893
        %3958 = vst [vmem:[%s227] sm:$0xf] %v3894
        %3959 = vst [vmem:[%s227 + $0x4] sm:$0xf] %v3895
        %3960 = vst [vmem:[%s227 + $0x8] sm:$0xf] %v3896
        %3961 = vst [vmem:[%s227 + $0xc] sm:$0xf] %v3897
        %3962 = vst [vmem:[%s227 + $0x10] sm:$0xf] %v3898
        %3963 = vst [vmem:[%s227 + $0x14] sm:$0xf] %v3899
        %3964 = vst [vmem:[%s227 + $0x18] sm:$0xf] %v3900
        %3965 = vst [vmem:[%s227 + $0x1c] sm:$0xf] %v3901
        %3966 = vst [vmem:[%s227 + $0x20] sm:$0xf] %v3902
        %3967 = vst [vmem:[%s227 + $0x24] sm:$0xf] %v3903
        %3968 = vst [vmem:[%s227 + $0x28] sm:$0xf] %v3904
        %3969 = vst [vmem:[%s227 + $0x2c] sm:$0xf] %v3905
        %3970 = vst [vmem:[%s227 + $0x30] sm:$0xf] %v3906
        %3971 = vst [vmem:[%s227 + $0x34] sm:$0xf] %v3907
        %3972 = vst [vmem:[%s227 + $0x38] sm:$0xf] %v3908
        %3973 = vst [vmem:[%s227 + $0x3c] sm:$0xf] %v3909
        %3974 = vst [vmem:[%s227 + $0x40] sm:$0xf] %v3910
        %3975 = vst [vmem:[%s227 + $0x44] sm:$0xf] %v3911
        %3976 = vst [vmem:[%s227 + $0x48] sm:$0xf] %v3912
        %3977 = vst [vmem:[%s227 + $0x4c] sm:$0xf] %v3913
        %3978 = vst [vmem:[%s227 + $0x50] sm:$0xf] %v3914
        %3979 = vst [vmem:[%s227 + $0x54] sm:$0xf] %v3915
        %3980 = vst [vmem:[%s227 + $0x58] sm:$0xf] %v3916
        %3981 = vst [vmem:[%s227 + $0x5c] sm:$0xf] %v3917
        %3982 = vst [vmem:[%s227 + $0x60] sm:$0xf] %v3918
        %3983 = vst [vmem:[%s227 + $0x64] sm:$0xf] %v3919
        %3984 = vst [vmem:[%s227 + $0x68] sm:$0xf] %v3920
        %3985 = vst [vmem:[%s227 + $0x6c] sm:$0xf] %v3921
        %3986 = vst [vmem:[%s227 + $0x70] sm:$0xf] %v3922
        %3987 = vst [vmem:[%s227 + $0x74] sm:$0xf] %v3923
        %3988 = vst [vmem:[%s227 + $0x78] sm:$0xf] %v3924
        %3989 = vst [vmem:[%s227 + $0x7c] sm:$0xf] %v3925
        %v3990 = vadd.f32 %v3704, %v3707
        %v3991 = vadd.f32 %v3990, %v3712
        %v3992 = vadd.f32 %v3991, %v3715
        %v3993 = vadd.f32 %v3992, %v3720
        %v3994 = vadd.f32 %v3993, %v3723
        %v3995 = vadd.f32 %v3994, %v3728
        %v3996 = vadd.f32 %v3995, %v3731
        %v3997 = vadd.f32 %v3996, %v3736
        %v3998 = vadd.f32 %v3997, %v3739
        %v3999 = vadd.f32 %v3998, %v3744
        %v4000 = vadd.f32 %v3999, %v3747
        %v4001 = vadd.f32 %v4000, %v3752
        %v4002 = vadd.f32 %v4001, %v3755
        %v4003 = vadd.f32 %v4002, %v3760
        %v4004 = vadd.f32 %v4003, %v3763
        %v4005 = vadd.f32 %v4004, %v3768
        %v4006 = vadd.f32 %v4005, %v3771
        %v4007 = vadd.f32 %v4006, %v3776
        %v4008 = vadd.f32 %v4007, %v3779
        %v4009 = vadd.f32 %v4008, %v3784
        %v4010 = vadd.f32 %v4009, %v3787
        %v4011 = vadd.f32 %v4010, %v3792
        %v4012 = vadd.f32 %v4011, %v3795
        %v4013 = vadd.f32 %v4012, %v3800
        %v4014 = vadd.f32 %v4013, %v3803
        %v4015 = vadd.f32 %v4014, %v3808
        %v4016 = vadd.f32 %v4015, %v3811
        %v4017 = vadd.f32 %v4016, %v3816
        %v4018 = vadd.f32 %v4017, %v3819
        %v4019 = vadd.f32 %v4018, %v3824
        %v4020 = vadd.f32 %v4019, %v3827
        %v4021 = vrot.slane %v4020, 4
        %v4022 = vadd.f32 %v4020, %v4021
        %v4023 = vrot.slane %v4022, 2
        %v4024 = vadd.f32 %v4022, %v4023
        %v4025 = vrot.slane %v4024, 1
        %v4026 = vadd.f32 %v4024, %v4025
        %v4027 = vmul.f32 %v4026, 0.00390625
        %v4028 = vsub.f32 %v3704, %v4027
        %v4029 = vsub.f32 %v3707, %v4027
        %v4030 = vsub.f32 %v3712, %v4027
        %v4031 = vsub.f32 %v3715, %v4027
        %v4032 = vsub.f32 %v3720, %v4027
        %v4033 = vsub.f32 %v3723, %v4027
        %v4034 = vsub.f32 %v3728, %v4027
        %v4035 = vsub.f32 %v3731, %v4027
        %v4036 = vsub.f32 %v3736, %v4027
        %v4037 = vsub.f32 %v3739, %v4027
        %v4038 = vsub.f32 %v3744, %v4027
        %v4039 = vsub.f32 %v3747, %v4027
        %v4040 = vsub.f32 %v3752, %v4027
        %v4041 = vsub.f32 %v3755, %v4027
        %v4042 = vsub.f32 %v3760, %v4027
        %v4043 = vsub.f32 %v3763, %v4027
        %v4044 = vsub.f32 %v3768, %v4027
        %v4045 = vsub.f32 %v3771, %v4027
        %v4046 = vsub.f32 %v3776, %v4027
        %v4047 = vsub.f32 %v3779, %v4027
        %v4048 = vsub.f32 %v3784, %v4027
        %v4049 = vsub.f32 %v3787, %v4027
        %v4050 = vsub.f32 %v3792, %v4027
        %v4051 = vsub.f32 %v3795, %v4027
        %v4052 = vsub.f32 %v3800, %v4027
        %v4053 = vsub.f32 %v3803, %v4027
        %v4054 = vsub.f32 %v3808, %v4027
        %v4055 = vsub.f32 %v3811, %v4027
        %v4056 = vsub.f32 %v3816, %v4027
        %v4057 = vsub.f32 %v3819, %v4027
        %v4058 = vsub.f32 %v3824, %v4027
        %v4059 = vsub.f32 %v3827, %v4027
        %v4060 = vmul.f32 %v4028, %v4028
        %v4061 = vmul.f32 %v4029, %v4029
        %v4062 = vmul.f32 %v4030, %v4030
        %v4063 = vmul.f32 %v4031, %v4031
        %v4064 = vmul.f32 %v4032, %v4032
        %v4065 = vmul.f32 %v4033, %v4033
        %v4066 = vmul.f32 %v4034, %v4034
        %v4067 = vmul.f32 %v4035, %v4035
        %v4068 = vmul.f32 %v4036, %v4036
        %v4069 = vmul.f32 %v4037, %v4037
        %v4070 = vmul.f32 %v4038, %v4038
        %v4071 = vmul.f32 %v4039, %v4039
        %v4072 = vmul.f32 %v4040, %v4040
        %v4073 = vmul.f32 %v4041, %v4041
        %v4074 = vmul.f32 %v4042, %v4042
        %v4075 = vmul.f32 %v4043, %v4043
        %v4076 = vmul.f32 %v4044, %v4044
        %v4077 = vmul.f32 %v4045, %v4045
        %v4078 = vmul.f32 %v4046, %v4046
        %v4079 = vmul.f32 %v4047, %v4047
        %v4080 = vmul.f32 %v4048, %v4048
        %v4081 = vmul.f32 %v4049, %v4049
        %v4082 = vmul.f32 %v4050, %v4050
        %v4083 = vmul.f32 %v4051, %v4051
        %v4084 = vmul.f32 %v4052, %v4052
        %v4085 = vmul.f32 %v4053, %v4053
        %v4086 = vmul.f32 %v4054, %v4054
        %v4087 = vmul.f32 %v4055, %v4055
        %v4088 = vmul.f32 %v4056, %v4056
        %v4089 = vmul.f32 %v4057, %v4057
        %v4090 = vmul.f32 %v4058, %v4058
        %v4091 = vmul.f32 %v4059, %v4059
        %v4092 = vadd.f32 %v4060, %v4061
        %v4093 = vadd.f32 %v4092, %v4062
        %v4094 = vadd.f32 %v4093, %v4063
        %v4095 = vadd.f32 %v4094, %v4064
        %v4096 = vadd.f32 %v4095, %v4065
        %v4097 = vadd.f32 %v4096, %v4066
        %v4098 = vadd.f32 %v4097, %v4067
        %v4099 = vadd.f32 %v4098, %v4068
        %v4100 = vadd.f32 %v4099, %v4069
        %v4101 = vadd.f32 %v4100, %v4070
        %v4102 = vadd.f32 %v4101, %v4071
        %v4103 = vadd.f32 %v4102, %v4072
        %v4104 = vadd.f32 %v4103, %v4073
        %v4105 = vadd.f32 %v4104, %v4074
        %v4106 = vadd.f32 %v4105, %v4075
        %v4107 = vadd.f32 %v4106, %v4076
        %v4108 = vadd.f32 %v4107, %v4077
        %v4109 = vadd.f32 %v4108, %v4078
        %v4110 = vadd.f32 %v4109, %v4079
        %v4111 = vadd.f32 %v4110, %v4080
        %v4112 = vadd.f32 %v4111, %v4081
        %v4113 = vadd.f32 %v4112, %v4082
        %v4114 = vadd.f32 %v4113, %v4083
        %v4115 = vadd.f32 %v4114, %v4084
        %v4116 = vadd.f32 %v4115, %v4085
        %v4117 = vadd.f32 %v4116, %v4086
        %v4118 = vadd.f32 %v4117, %v4087
        %v4119 = vadd.f32 %v4118, %v4088
        %v4120 = vadd.f32 %v4119, %v4089
        %v4121 = vadd.f32 %v4120, %v4090
        %v4122 = vadd.f32 %v4121, %v4091
        %v4123 = vrot.slane %v4122, 4
        %v4124 = vadd.f32 %v4122, %v4123
        %v4125 = vrot.slane %v4124, 2
        %v4126 = vadd.f32 %v4124, %v4125
        %v4127 = vrot.slane %v4126, 1
        %v4128 = vadd.f32 %v4126, %v4127
        %4129 = vst [vmem:[%s234] sm:$0x1] %v4027
        %4130 = vst [vmem:[%s234 + $0x1] sm:$0x1] %v4128
        %s4131 = sand.u32 %s96, 1
        %s4132 = scalar_lea.sflag [#allocation4], %s4131
        %s4133 = sand.u32 %s96, 1
        %s4134 = smul.addr %s4133, 128
        %s4135 = scalar_lea.vmem [#allocation7], %s4134
        %s4136 = sand.u32 %s124, 1
        %s4137 = scalar_lea.sflag [#allocation9], %s4136
        %s4138 = sand.u32 %s124, 1
        %s4139 = smul.addr %s4138, 2
        %s4140 = scalar_lea.vmem [#allocation8], %s4139
        // Predicated region
        $region37: #{tpu_custom_call.1} parent=27 // pred_check
          %p4141 = pneg %p106
        $region38: #{tpu_custom_call.1} parent=27 // pred_check_branch
          %4143 = sbr.rel (%p4141) target = $region40
        $region39: #{tpu_custom_call.1} parent=27 // pred_region
          %s4144 = smul.u32 32, %s30
          %s4146 = ssub.s32 2048, 2048
          %4147 = vsyncadd %s4132, %s4146
          %s4148 = smul.addr %s29, 32
          %s4149 = sadd.s32 %s4144, %s4148
          %s4150 = smul.addr %s4149, 64
          %s4151 = scalar_lea.hbm %s2, %s4150
          %s4152 = sshll.u32 %s4135, 4
          %s4153 = int_to_ptr.vmem [resolvable:$true] %s4152
          %4158 = dma.vmem_to_hbm [thread:$0]  %s4153, 2048, %s4151, %s4132, 64, 64, 4
        $region40: #{tpu_custom_call.1} parent=27 // pred_fallthru
          _
        // Predicated region
        $region41: #{tpu_custom_call.1} parent=27 // pred_check
          %p4159 = pneg %p134
        $region42: #{tpu_custom_call.1} parent=27 // pred_check_branch
          %4161 = sbr.rel (%p4159) target = $region44
        $region43: #{tpu_custom_call.1} parent=27 // pred_region
          %s4163 = ssub.s32 32, 32
          %4164 = vsyncadd %s4137, %s4163
          %s4165 = sadd.s32 %s30, %s29
          %s4166 = smul.addr %s4165, 32
          %s4167 = scalar_lea.hbm %s3, %s4166
          %s4169 = sshll.u32 %s4140, 4
          %s4170 = int_to_ptr.vmem [resolvable:$true] %s4169
          %4172 = dma.vmem_to_hbm [thread:$0]  %s4170, 32, %s4167, %s4137
        $region44: #{tpu_custom_call.1} parent=27 // pred_fallthru
          _
      $region28: #{tpu_custom_call.1} parent=5 // pred_fallthru
        _
      %p4173 = scmp.le.s32.totalorder 2, %s20
      // Predicated region
      $region45: #{tpu_custom_call.1} parent=5 // pred_check
        %p4174 = pneg %p4173
      $region46: #{tpu_custom_call.1} parent=5 // pred_check_branch
        %4176 = sbr.rel (%p4174) target = $region48
      $region47: #{tpu_custom_call.1} parent=5 // pred_region
        %s4177 = ssub.s32 %s20, 2
        // Predicated region
        $region49: #{tpu_custom_call.1} parent=47 // pred_check
          %p4178 = pneg %p112
        $region50: #{tpu_custom_call.1} parent=47 // pred_check_branch
          %4180 = sbr.rel (%p4178) target = $region52
        $region51: #{tpu_custom_call.1} parent=47 // pred_region
          %s4181 = sand.u32 %s97, 1
          %s4182 = scalar_lea.sflag [#allocation4], %s4181
          %s4183 = sand.u32 %s97, 1
          %s4184 = smul.addr %s4183, 128
          %s4185 = scalar_lea.vmem [#allocation7], %s4184
          %4186 = dma.done %s4182, 2048
        $region52: #{tpu_custom_call.1} parent=47 // pred_fallthru
          _
        // Predicated region
        $region53: #{tpu_custom_call.1} parent=47 // pred_check
          %p4187 = pneg %p140
        $region54: #{tpu_custom_call.1} parent=47 // pred_check_branch
          %4189 = sbr.rel (%p4187) target = $region56
        $region55: #{tpu_custom_call.1} parent=47 // pred_region
          %s4190 = sand.u32 %s125, 1
          %s4191 = scalar_lea.sflag [#allocation9], %s4190
          %s4192 = sand.u32 %s125, 1
          %s4193 = smul.addr %s4192, 2
          %s4194 = scalar_lea.vmem [#allocation8], %s4193
          %4195 = dma.done %s4191, 32
        $region56: #{tpu_custom_call.1} parent=47 // pred_fallthru
          _
      $region48: #{tpu_custom_call.1} parent=5 // pred_fallthru
        _
    $region6: #{tpu_custom_call.1} parent=1 // loop_footer
      %s24 = sadd.s32 1, %s20
    $region7: #{tpu_custom_call.1} parent=1 // loop_footer_branch
      %19 = sbr.rel target = $region3
    $region8: #{tpu_custom_call.1} parent=1 // loop_exit
      _
    %4196 = vsyncpa [#allocation3], 1
    %s4197 = scalar_lea.sflag [#allocation3], 1
    %4198 = vsyncpa %s4197, 1
    %4199 = vsyncpa [#allocation6], 1
    %4200 = vsyncpa [#allocation4], 1
    %s4201 = scalar_lea.sflag [#allocation4], 1
    %4202 = vsyncpa %s4201, 1
    %4203 = vsyncpa [#allocation9], 1
    %s4204 = scalar_lea.sflag [#allocation9], 1
    %4205 = vsyncpa %s4204, 1

</llo_original>
